<compile_context>
chip_gen: v7x
topology: tpu7x:2x2x1
jax: 0.10.0
libtpu: 0.0.40
codegen_flags: <defaults>
</compile_context>

<pallas_src>
import functools

import jax
import jax.numpy as jnp
from jax.experimental import pallas as pl
from jax.experimental.pallas import tpu as pltpu


# ----------------------------------------------------------------------------
# helpers
# ----------------------------------------------------------------------------
def _layer_norm(h, g, b, eps=1e-5):
    mu = jnp.mean(h, axis=-1, keepdims=True)
    var = jnp.mean((h - mu) ** 2, axis=-1, keepdims=True)
    return (h - mu) * jax.lax.rsqrt(var + eps) * g + b


def _pick_batch_tile(batch, graph_size, target_rows=1024):
    """Graphs per grid step: TB*graph_size ~ target_rows so matmul M-dims are
    large enough to amortize per-grid-step overhead; TB | batch and
    (TB == batch or TB % 8 == 0) so every block satisfies the (8,128) rule."""
    if batch * graph_size <= target_rows:
        return batch
    cap = min(batch, max(8, target_rows // max(graph_size, 1)))
    for tb in range(cap, 7, -1):
        if batch % tb == 0 and tb % 8 == 0:
            return tb
    return batch


# ----------------------------------------------------------------------------
# fused kernel: embedding + (n_layers-1) encoder layers + value head
# ----------------------------------------------------------------------------
def _critic_kernel(x_ref, hx_ref, cx_ref,
                   ew_ref, eb_ref,
                   wqkv_ref, wo_ref, ln1g_ref, ln1b_ref,
                   w1_ref, b1_ref, w2_ref, b2_ref, ln2g_ref, ln2b_ref,
                   vwg_ref, vwh_ref, vwc_ref, vb1_ref, vw2_ref, vb2_ref,
                   o_ref,
                   *, n_enc_layers, n_heads, head_dim, graph_size, batch_tile,
                   matmul_dtype):
    f32 = jnp.float32
    md = matmul_dtype
    TB, N = batch_tile, graph_size
    nd, D = ew_ref.shape
    scale = 1.0 / float(head_dim) ** 0.5

    def mm(a, w):  # MXU matmul, f32 accumulation
        return jnp.dot(a.astype(md), w.astype(md), preferred_element_type=f32)

    # ---- EmbeddingNet (coordinate embedding; solution embeddings unused) ----
    x2 = x_ref[...].astype(f32).reshape(TB * N, nd)
    h = mm(x2, ew_ref[...]) + eb_ref[...]                       # (TB*N, D)

    # ---- GraphEncoder layers (statically unrolled, weights stacked on L) ----
    for l in range(n_enc_layers):
        qkv = mm(h, wqkv_ref[l])                                # fused QKV: (TB*N, 3D)
        qkv3 = qkv.reshape(TB, N, 3 * D)
        heads = []
        for hh in range(n_heads):
            q = qkv3[:, :, hh * head_dim:(hh + 1) * head_dim]
            k = qkv3[:, :, D + hh * head_dim:D + (hh + 1) * head_dim]
            v = qkv3[:, :, 2 * D + hh * head_dim:2 * D + (hh + 1) * head_dim]
            s = jnp.einsum("bnd,bmd->bnm", q.astype(md), k.astype(md),
                           preferred_element_type=f32) * scale   # (TB, N, N)
            s = s - jnp.max(s, axis=-1, keepdims=True)
            p = jnp.exp(s)
            p = p * pl.reciprocal(jnp.sum(p, axis=-1, keepdims=True), approx=True)
            heads.append(jnp.einsum("bnm,bmd->bnd", p.astype(md), v.astype(md),
                                    preferred_element_type=f32))
        mha = jnp.concatenate(heads, axis=-1).reshape(TB * N, D)
        mha = mm(mha, wo_ref[l])
        h1 = _layer_norm(h + mha, ln1g_ref[l], ln1b_ref[l])
        ff = jnp.maximum(mm(h1, w1_ref[l]) + b1_ref[l], 0.0)
        ff = mm(ff, w2_ref[l]) + b2_ref[l]
        h = _layer_norm(h1 + ff, ln2g_ref[l], ln2b_ref[l])

    # ---- ValueDecoder: mean-pool + fuse with (h_x, c_x) + 2-layer MLP -------
    graph = jnp.mean(h.reshape(TB, N, D), axis=1)               # (TB, D)
    # concat([graph, h_x, c_x]) @ W1  ==  graph@Wg + h_x@Wh + c_x@Wc
    hid = (mm(graph, vwg_ref[...])
           + mm(hx_ref[...].astype(f32), vwh_ref[...])
           + mm(cx_ref[...].astype(f32), vwc_ref[...])
           + vb1_ref[...])
    hid = jnp.maximum(hid, 0.0)
    val = mm(hid, vw2_ref[...]) + vb2_ref[...]                  # (TB, 1)
    o_ref[...] = val.astype(o_ref.dtype)


def _const_spec(shape):
    zeros = (0,) * len(shape)
    return pl.BlockSpec(shape, lambda b, _z=zeros: _z)


def critic_forward(params, x, solutions, best_solutions, h_x, c_x, *,
                   n_heads, matmul_dtype=jnp.float32, batch_tile=None):
    # The solution / best_solution embeddings produced by EmbeddingNet are
    # discarded by Critic.forward, so these inputs are accepted but unused.
    del solutions, best_solutions

    B, N, nd = x.shape
    D = params["embed_w"].shape[1]
    H = params["w1"].shape[2]
    L = params["wqkv"].shape[0]
    head_dim = D // n_heads
    TB = batch_tile if batch_tile is not None else _pick_batch_tile(B, N)
    assert B % TB == 0

    kernel = functools.partial(
        _critic_kernel, n_enc_layers=L, n_heads=n_heads, head_dim=head_dim,
        graph_size=N, batch_tile=TB, matmul_dtype=matmul_dtype)

    vp = params["value"]
    out = pl.pallas_call(
        kernel,
        out_shape=jax.ShapeDtypeStruct((B, 1), jnp.float32),
        grid_spec=pltpu.PrefetchScalarGridSpec(
            num_scalar_prefetch=0,
            grid=(B // TB,),
            in_specs=[
                pl.BlockSpec((TB, N, nd), lambda b: (b, 0, 0)),   # x
                pl.BlockSpec((TB, D), lambda b: (b, 0)),          # h_x
                pl.BlockSpec((TB, D), lambda b: (b, 0)),          # c_x
                _const_spec((nd, D)), _const_spec((1, D)),        # embed w / b
                _const_spec((L, D, 3 * D)),                       # wqkv (stacked)
                _const_spec((L, D, D)),                           # wo
                _const_spec((L, 1, D)), _const_spec((L, 1, D)),   # ln1 g / b
                _const_spec((L, D, H)), _const_spec((L, 1, H)),   # ffn w1 / b1
                _const_spec((L, H, D)), _const_spec((L, 1, D)),   # ffn w2 / b2
                _const_spec((L, 1, D)), _const_spec((L, 1, D)),   # ln2 g / b
                _const_spec((D, H)), _const_spec((D, H)),         # value wg / wh
                _const_spec((D, H)), _const_spec((1, H)),         # value wc / b1
                _const_spec((H, 1)), _const_spec((1, 1)),         # value w2 / b2
            ],
            out_specs=pl.BlockSpec((TB, 1), lambda b: (b, 0)),
        ),
        compiler_params=pltpu.CompilerParams(
            dimension_semantics=("parallel",)),
    )(x, h_x, c_x,
      params["embed_w"], params["embed_b"],
      params["wqkv"], params["wo"], params["ln1_g"], params["ln1_b"],
      params["w1"], params["b1"], params["w2"], params["b2"],
      params["ln2_g"], params["ln2_b"],
      vp["wg"], vp["wh"], vp["wc"], vp["b1"], vp["w2"], vp["b2"])

    v = jnp.squeeze(out)   # matches torch `.squeeze()` (0-d for B == 1)
    return jax.lax.stop_gradient(v), v


# ----------------------------------------------------------------------------
# parameters
# ----------------------------------------------------------------------------
def init_critic_params(key, *, problem_name, embedding_dim, hidden_dim,
                       n_heads, n_layers):
    node_dim = {"pdp": 4, "tsp": 2}[problem_name]
    D, H = embedding_dim, hidden_dim
    L = n_layers - 1
    assert L >= 1 and D % n_heads == 0
    ks = iter(jax.random.split(key, 16))
    s = lambda fan_in: 1.0 / float(fan_in) ** 0.5
    rnd = lambda shape, sc: jax.random.normal(next(ks), shape, jnp.float32) * sc

    return {
        "embed_w": rnd((node_dim, D), s(node_dim)),
        "embed_b": jnp.zeros((1, D), jnp.float32),
        # encoder layers, stacked along a leading L axis; QKV packed head-major
        "wqkv": rnd((L, D, 3 * D), s(D)),
        "wo": rnd((L, D, D), s(D)),
        "ln1_g": jnp.ones((L, 1, D), jnp.float32),
        "ln1_b": jnp.zeros((L, 1, D), jnp.float32),
        "w1": rnd((L, D, H), s(D)),
        "b1": jnp.zeros((L, 1, H), jnp.float32),
        "w2": rnd((L, H, D), s(H)),
        "b2": jnp.zeros((L, 1, D), jnp.float32),
        "ln2_g": jnp.ones((L, 1, D), jnp.float32),
        "ln2_b": jnp.zeros((L, 1, D), jnp.float32),
        "value": {
            "wg": rnd((D, H), s(3 * D)),
            "wh": rnd((D, H), s(3 * D)),
            "wc": rnd((D, H), s(3 * D)),
            "b1": jnp.zeros((1, H), jnp.float32),
            "w2": rnd((H, 1), s(H)),
            "b2": jnp.zeros((1, 1), jnp.float32),
        },
    }


# ----------------------------------------------------------------------------
# pure-JAX reference (same math) for a sanity check
# ----------------------------------------------------------------------------
def critic_reference(params, x, h_x, c_x, *, n_heads):
    dot = functools.partial(jnp.einsum, precision=jax.lax.Precision.HIGHEST)
    D = params["embed_w"].shape[1]
    dh = D // n_heads
    h = dot("bni,io->bno", x, params["embed_w"]) + params["embed_b"]
    for l in range(params["wqkv"].shape[0]):
        qkv = dot("bnd,de->bne", h, params["wqkv"][l])
        outs = []
        for hh in range(n_heads):
            q = qkv[..., hh * dh:(hh + 1) * dh]
            k = qkv[..., D + hh * dh:D + (hh + 1) * dh]
            v = qkv[..., 2 * D + hh * dh:2 * D + (hh + 1) * dh]
            s = dot("bnd,bmd->bnm", q, k) / (dh ** 0.5)
            outs.append(dot("bnm,bmd->bnd", jax.nn.softmax(s, axis=-1), v))
        mha = dot("bnd,de->bne", jnp.concatenate(outs, axis=-1), params["wo"][l])
        h1 = _layer_norm(h + mha, params["ln1_g"][l], params["ln1_b"][l])
        ff = jax.nn.relu(dot("bnd,dh->bnh", h1, params["w1"][l]) + params["b1"][l])
        ff = dot("bnh,hd->bnd", ff, params["w2"][l]) + params["b2"][l]
        h = _layer_norm(h1 + ff, params["ln2_g"][l], params["ln2_b"][l])
    graph = jnp.mean(h, axis=1)
    vp = params["value"]
    hid = jax.nn.relu(dot("bd,dh->bh", graph, vp["wg"])
                      + dot("bd,dh->bh", h_x, vp["wh"])
                      + dot("bd,dh->bh", c_x, vp["wc"]) + vp["b1"])
    return jnp.squeeze(dot("bh,ho->bo", hid, vp["w2"]) + vp["b2"])


# ----------------------------------------------------------------------------
if __name__ == "__main__":
    # Small, module-consistent config (problem 'tsp' -> node_dim = 2).
    problem_name = "tsp"
    batch = 2
    graph_size = 16
    embedding_dim = 32
    hidden_dim = 64
    n_heads = 4
    n_layers = 3   # -> 2 GraphEncoder layers

    key = jax.random.PRNGKey(0)
    k_par, k_x, k_h, k_c = jax.random.split(key, 4)

    params = init_critic_params(
        k_par, problem_name=problem_name, embedding_dim=embedding_dim,
        hidden_dim=hidden_dim, n_heads=n_heads, n_layers=n_layers)

    x = jax.random.uniform(k_x, (batch, graph_size, 2), jnp.float32)
    solutions = jnp.tile(jnp.arange(graph_size, dtype=jnp.int32)[None, :],
                         (batch, 1))
    best_solutions = solutions
    h_x = jax.random.normal(k_h, (batch, embedding_dim), jnp.float32)
    c_x = jax.random.normal(k_c, (batch, embedding_dim), jnp.float32)

    detached_v, v = critic_forward(params, x, solutions, best_solutions,
                                   h_x, c_x, n_heads=n_heads)
    jax.block_until_ready((detached_v, v))
    assert v.shape == (batch,)
    assert detached_v.shape == (batch,)

    v_ref = critic_reference(params, x, h_x, c_x, n_heads=n_heads)
    err = float(jnp.max(jnp.abs(v - v_ref)))
    assert err < 5e-2, f"mismatch vs pure-JAX reference: max abs err = {err}"

    print("KERNEL_OK")
</pallas_src>

<mosaic_0001>
module attributes {stable_mosaic.version = 11 : i64} {
  func.func @_critic_kernel(%arg0: i32, %arg1: memref<2x16x2xf32, #tpu.memory_space<vmem>>, %arg2: memref<2x32xf32, #tpu.memory_space<vmem>>, %arg3: memref<2x32xf32, #tpu.memory_space<vmem>>, %arg4: memref<2x32xf32, #tpu.memory_space<vmem>>, %arg5: memref<1x32xf32, #tpu.memory_space<vmem>>, %arg6: memref<2x32x96xf32, #tpu.memory_space<vmem>>, %arg7: memref<2x32x32xf32, #tpu.memory_space<vmem>>, %arg8: memref<2x1x32xf32, #tpu.memory_space<vmem>>, %arg9: memref<2x1x32xf32, #tpu.memory_space<vmem>>, %arg10: memref<2x32x64xf32, #tpu.memory_space<vmem>>, %arg11: memref<2x1x64xf32, #tpu.memory_space<vmem>>, %arg12: memref<2x64x32xf32, #tpu.memory_space<vmem>>, %arg13: memref<2x1x32xf32, #tpu.memory_space<vmem>>, %arg14: memref<2x1x32xf32, #tpu.memory_space<vmem>>, %arg15: memref<2x1x32xf32, #tpu.memory_space<vmem>>, %arg16: memref<32x64xf32, #tpu.memory_space<vmem>>, %arg17: memref<32x64xf32, #tpu.memory_space<vmem>>, %arg18: memref<32x64xf32, #tpu.memory_space<vmem>>, %arg19: memref<1x64xf32, #tpu.memory_space<vmem>>, %arg20: memref<64x1xf32, #tpu.memory_space<vmem>>, %arg21: memref<1x1xf32, #tpu.memory_space<vmem>>, %arg22: memref<2x1xf32, #tpu.memory_space<vmem>>) attributes {dimension_semantics = [#tpu.dimension_semantics<parallel>], iteration_bounds = array<i64: 1>, scalar_prefetch = 0 : i64, scratch_operands = 0 : i64, tpu.core_type = #tpu.core_type<tc>, window_params = [{transform_indices = @transform_0, window_bounds = array<i64: 2, 16, 2>}, {transform_indices = @transform_1, window_bounds = array<i64: 2, 32>}, {transform_indices = @transform_2, window_bounds = array<i64: 2, 32>}, {pipeline_mode = #tpu.pipeline_mode<synchronous>, transform_indices = @transform_3, window_bounds = array<i64: 2, 32>}, {pipeline_mode = #tpu.pipeline_mode<synchronous>, transform_indices = @transform_4, window_bounds = array<i64: 1, 32>}, {pipeline_mode = #tpu.pipeline_mode<synchronous>, transform_indices = @transform_5, window_bounds = array<i64: 2, 32, 96>}, {pipeline_mode = #tpu.pipeline_mode<synchronous>, transform_indices = @transform_6, window_bounds = array<i64: 2, 32, 32>}, {pipeline_mode = #tpu.pipeline_mode<synchronous>, transform_indices = @transform_7, window_bounds = array<i64: 2, 1, 32>}, {pipeline_mode = #tpu.pipeline_mode<synchronous>, transform_indices = @transform_8, window_bounds = array<i64: 2, 1, 32>}, {pipeline_mode = #tpu.pipeline_mode<synchronous>, transform_indices = @transform_9, window_bounds = array<i64: 2, 32, 64>}, {pipeline_mode = #tpu.pipeline_mode<synchronous>, transform_indices = @transform_10, window_bounds = array<i64: 2, 1, 64>}, {pipeline_mode = #tpu.pipeline_mode<synchronous>, transform_indices = @transform_11, window_bounds = array<i64: 2, 64, 32>}, {pipeline_mode = #tpu.pipeline_mode<synchronous>, transform_indices = @transform_12, window_bounds = array<i64: 2, 1, 32>}, {pipeline_mode = #tpu.pipeline_mode<synchronous>, transform_indices = @transform_13, window_bounds = array<i64: 2, 1, 32>}, {pipeline_mode = #tpu.pipeline_mode<synchronous>, transform_indices = @transform_14, window_bounds = array<i64: 2, 1, 32>}, {pipeline_mode = #tpu.pipeline_mode<synchronous>, transform_indices = @transform_15, window_bounds = array<i64: 32, 64>}, {pipeline_mode = #tpu.pipeline_mode<synchronous>, transform_indices = @transform_16, window_bounds = array<i64: 32, 64>}, {pipeline_mode = #tpu.pipeline_mode<synchronous>, transform_indices = @transform_17, window_bounds = array<i64: 32, 64>}, {pipeline_mode = #tpu.pipeline_mode<synchronous>, transform_indices = @transform_18, window_bounds = array<i64: 1, 64>}, {pipeline_mode = #tpu.pipeline_mode<synchronous>, transform_indices = @transform_19, window_bounds = array<i64: 64, 1>}, {pipeline_mode = #tpu.pipeline_mode<synchronous>, transform_indices = @transform_20, window_bounds = array<i64: 1, 1>}, {transform_indices = @transform_21, window_bounds = array<i64: 2, 1>}]} {
    %c0 = arith.constant 0 : index
    %c0_0 = arith.constant 0 : index
    %c0_1 = arith.constant 0 : index
    %0 = vector.load %arg1[%c0, %c0_0, %c0_1] : memref<2x16x2xf32, #tpu.memory_space<vmem>>, vector<2x16x2xf32>
    %1 = vector.shape_cast %0 : vector<2x16x2xf32> to vector<32x2xf32>
    %c0_2 = arith.constant 0 : index
    %c0_3 = arith.constant 0 : index
    %2 = vector.load %arg4[%c0_2, %c0_3] : memref<2x32xf32, #tpu.memory_space<vmem>>, vector<2x32xf32>
    %cst = arith.constant dense<0.000000e+00> : vector<32x32xf32>
    %3 = tpu.matmul %1, %2, %cst {dimension_numbers = #tpu.dot_dimension_numbers<[1], [0], [0], [1], [0, 0, 1, 1], [], []>} : vector<32x2xf32>, vector<2x32xf32>, vector<32x32xf32> -> vector<32x32xf32>
    %c0_4 = arith.constant 0 : index
    %c0_5 = arith.constant 0 : index
    %4 = vector.load %arg5[%c0_4, %c0_5] : memref<1x32xf32, #tpu.memory_space<vmem>>, vector<1x32xf32>
    %5 = vector.broadcast %4 : vector<1x32xf32> to vector<32x32xf32>
    %6 = arith.addf %3, %5 : vector<32x32xf32>
    %c0_6 = arith.constant 0 : index
    %c0_7 = arith.constant 0 : index
    %c0_8 = arith.constant 0 : index
    %7 = vector.load %arg6[%c0_6, %c0_7, %c0_8] : memref<2x32x96xf32, #tpu.memory_space<vmem>>, vector<1x32x96xf32>
    %8 = vector.shape_cast %7 : vector<1x32x96xf32> to vector<32x96xf32>
    %cst_9 = arith.constant dense<0.000000e+00> : vector<32x96xf32>
    %9 = tpu.matmul %6, %8, %cst_9 {dimension_numbers = #tpu.dot_dimension_numbers<[1], [0], [0], [1], [0, 0, 1, 1], [], []>} : vector<32x32xf32>, vector<32x96xf32>, vector<32x96xf32> -> vector<32x96xf32>
    %10 = vector.shape_cast %9 : vector<32x96xf32> to vector<2x16x96xf32>
    %11 = vector.extract_strided_slice %10 {offsets = [0, 0, 0], sizes = [2, 16, 8], strides = [1, 1, 1]} : vector<2x16x96xf32> to vector<2x16x8xf32>
    %12 = vector.extract_strided_slice %10 {offsets = [0, 0, 32], sizes = [2, 16, 8], strides = [1, 1, 1]} : vector<2x16x96xf32> to vector<2x16x8xf32>
    %13 = vector.extract_strided_slice %10 {offsets = [0, 0, 64], sizes = [2, 16, 8], strides = [1, 1, 1]} : vector<2x16x96xf32> to vector<2x16x8xf32>
    "tpu.trace_start"() <{level = 10 : i32, message = "bnd,bmd->bnm"}> : () -> ()
    %cst_10 = arith.constant dense<0.000000e+00> : vector<2x16x16xf32>
    %14 = tpu.matmul %11, %12, %cst_10 {dimension_numbers = #tpu.dot_dimension_numbers<[2], [2], [1], [1], [0, 0, 0, 1, 1, 1], [0], [0]>} : vector<2x16x8xf32>, vector<2x16x8xf32>, vector<2x16x16xf32> -> vector<2x16x16xf32>
    "tpu.trace_stop"() : () -> ()
    %cst_11 = arith.constant 0.353553385 : f32
    %15 = vector.broadcast %cst_11 : f32 to vector<2x16x16xf32>
    %16 = arith.mulf %14, %15 : vector<2x16x16xf32>
    %cst_12 = arith.constant dense<0xFF800000> : vector<2x16xf32>
    %17 = vector.multi_reduction <maximumf>, %16, %cst_12 [2] : vector<2x16x16xf32> to vector<2x16xf32>
    %18 = vector.shape_cast %17 : vector<2x16xf32> to vector<2x16x1xf32>
    %19 = vector.broadcast %18 : vector<2x16x1xf32> to vector<2x16x16xf32>
    %20 = arith.subf %16, %19 : vector<2x16x16xf32>
    %21 = math.exp %20 : vector<2x16x16xf32>
    %cst_13 = arith.constant dense<0.000000e+00> : vector<2x16xf32>
    %22 = vector.multi_reduction <add>, %21, %cst_13 [2] : vector<2x16x16xf32> to vector<2x16xf32>
    %23 = vector.shape_cast %22 : vector<2x16xf32> to vector<2x16x1xf32>
    %24 = tpu.reciprocal %23 {approx = true} : vector<2x16x1xf32> -> vector<2x16x1xf32>
    %25 = vector.broadcast %24 : vector<2x16x1xf32> to vector<2x16x16xf32>
    %26 = arith.mulf %21, %25 : vector<2x16x16xf32>
    "tpu.trace_start"() <{level = 10 : i32, message = "bnm,bmd->bnd"}> : () -> ()
    %cst_14 = arith.constant dense<0.000000e+00> : vector<2x16x8xf32>
    %27 = tpu.matmul %26, %13, %cst_14 {dimension_numbers = #tpu.dot_dimension_numbers<[2], [1], [1], [2], [0, 0, 0, 1, 1, 2], [0], [0]>} : vector<2x16x16xf32>, vector<2x16x8xf32>, vector<2x16x8xf32> -> vector<2x16x8xf32>
    "tpu.trace_stop"() : () -> ()
    %28 = vector.extract_strided_slice %10 {offsets = [0, 0, 8], sizes = [2, 16, 8], strides = [1, 1, 1]} : vector<2x16x96xf32> to vector<2x16x8xf32>
    %29 = vector.extract_strided_slice %10 {offsets = [0, 0, 40], sizes = [2, 16, 8], strides = [1, 1, 1]} : vector<2x16x96xf32> to vector<2x16x8xf32>
    %30 = vector.extract_strided_slice %10 {offsets = [0, 0, 72], sizes = [2, 16, 8], strides = [1, 1, 1]} : vector<2x16x96xf32> to vector<2x16x8xf32>
    "tpu.trace_start"() <{level = 10 : i32, message = "bnd,bmd->bnm"}> : () -> ()
    %cst_15 = arith.constant dense<0.000000e+00> : vector<2x16x16xf32>
    %31 = tpu.matmul %28, %29, %cst_15 {dimension_numbers = #tpu.dot_dimension_numbers<[2], [2], [1], [1], [0, 0, 0, 1, 1, 1], [0], [0]>} : vector<2x16x8xf32>, vector<2x16x8xf32>, vector<2x16x16xf32> -> vector<2x16x16xf32>
    "tpu.trace_stop"() : () -> ()
    %cst_16 = arith.constant 0.353553385 : f32
    %32 = vector.broadcast %cst_16 : f32 to vector<2x16x16xf32>
    %33 = arith.mulf %31, %32 : vector<2x16x16xf32>
    %cst_17 = arith.constant dense<0xFF800000> : vector<2x16xf32>
    %34 = vector.multi_reduction <maximumf>, %33, %cst_17 [2] : vector<2x16x16xf32> to vector<2x16xf32>
    %35 = vector.shape_cast %34 : vector<2x16xf32> to vector<2x16x1xf32>
    %36 = vector.broadcast %35 : vector<2x16x1xf32> to vector<2x16x16xf32>
    %37 = arith.subf %33, %36 : vector<2x16x16xf32>
    %38 = math.exp %37 : vector<2x16x16xf32>
    %cst_18 = arith.constant dense<0.000000e+00> : vector<2x16xf32>
    %39 = vector.multi_reduction <add>, %38, %cst_18 [2] : vector<2x16x16xf32> to vector<2x16xf32>
    %40 = vector.shape_cast %39 : vector<2x16xf32> to vector<2x16x1xf32>
    %41 = tpu.reciprocal %40 {approx = true} : vector<2x16x1xf32> -> vector<2x16x1xf32>
    %42 = vector.broadcast %41 : vector<2x16x1xf32> to vector<2x16x16xf32>
    %43 = arith.mulf %38, %42 : vector<2x16x16xf32>
    "tpu.trace_start"() <{level = 10 : i32, message = "bnm,bmd->bnd"}> : () -> ()
    %cst_19 = arith.constant dense<0.000000e+00> : vector<2x16x8xf32>
    %44 = tpu.matmul %43, %30, %cst_19 {dimension_numbers = #tpu.dot_dimension_numbers<[2], [1], [1], [2], [0, 0, 0, 1, 1, 2], [0], [0]>} : vector<2x16x16xf32>, vector<2x16x8xf32>, vector<2x16x8xf32> -> vector<2x16x8xf32>
    "tpu.trace_stop"() : () -> ()
    %45 = vector.extract_strided_slice %10 {offsets = [0, 0, 16], sizes = [2, 16, 8], strides = [1, 1, 1]} : vector<2x16x96xf32> to vector<2x16x8xf32>
    %46 = vector.extract_strided_slice %10 {offsets = [0, 0, 48], sizes = [2, 16, 8], strides = [1, 1, 1]} : vector<2x16x96xf32> to vector<2x16x8xf32>
    %47 = vector.extract_strided_slice %10 {offsets = [0, 0, 80], sizes = [2, 16, 8], strides = [1, 1, 1]} : vector<2x16x96xf32> to vector<2x16x8xf32>
    "tpu.trace_start"() <{level = 10 : i32, message = "bnd,bmd->bnm"}> : () -> ()
    %cst_20 = arith.constant dense<0.000000e+00> : vector<2x16x16xf32>
    %48 = tpu.matmul %45, %46, %cst_20 {dimension_numbers = #tpu.dot_dimension_numbers<[2], [2], [1], [1], [0, 0, 0, 1, 1, 1], [0], [0]>} : vector<2x16x8xf32>, vector<2x16x8xf32>, vector<2x16x16xf32> -> vector<2x16x16xf32>
    "tpu.trace_stop"() : () -> ()
    %cst_21 = arith.constant 0.353553385 : f32
    %49 = vector.broadcast %cst_21 : f32 to vector<2x16x16xf32>
    %50 = arith.mulf %48, %49 : vector<2x16x16xf32>
    %cst_22 = arith.constant dense<0xFF800000> : vector<2x16xf32>
    %51 = vector.multi_reduction <maximumf>, %50, %cst_22 [2] : vector<2x16x16xf32> to vector<2x16xf32>
    %52 = vector.shape_cast %51 : vector<2x16xf32> to vector<2x16x1xf32>
    %53 = vector.broadcast %52 : vector<2x16x1xf32> to vector<2x16x16xf32>
    %54 = arith.subf %50, %53 : vector<2x16x16xf32>
    %55 = math.exp %54 : vector<2x16x16xf32>
    %cst_23 = arith.constant dense<0.000000e+00> : vector<2x16xf32>
    %56 = vector.multi_reduction <add>, %55, %cst_23 [2] : vector<2x16x16xf32> to vector<2x16xf32>
    %57 = vector.shape_cast %56 : vector<2x16xf32> to vector<2x16x1xf32>
    %58 = tpu.reciprocal %57 {approx = true} : vector<2x16x1xf32> -> vector<2x16x1xf32>
    %59 = vector.broadcast %58 : vector<2x16x1xf32> to vector<2x16x16xf32>
    %60 = arith.mulf %55, %59 : vector<2x16x16xf32>
    "tpu.trace_start"() <{level = 10 : i32, message = "bnm,bmd->bnd"}> : () -> ()
    %cst_24 = arith.constant dense<0.000000e+00> : vector<2x16x8xf32>
    %61 = tpu.matmul %60, %47, %cst_24 {dimension_numbers = #tpu.dot_dimension_numbers<[2], [1], [1], [2], [0, 0, 0, 1, 1, 2], [0], [0]>} : vector<2x16x16xf32>, vector<2x16x8xf32>, vector<2x16x8xf32> -> vector<2x16x8xf32>
    "tpu.trace_stop"() : () -> ()
    %62 = vector.extract_strided_slice %10 {offsets = [0, 0, 24], sizes = [2, 16, 8], strides = [1, 1, 1]} : vector<2x16x96xf32> to vector<2x16x8xf32>
    %63 = vector.extract_strided_slice %10 {offsets = [0, 0, 56], sizes = [2, 16, 8], strides = [1, 1, 1]} : vector<2x16x96xf32> to vector<2x16x8xf32>
    %64 = vector.extract_strided_slice %10 {offsets = [0, 0, 88], sizes = [2, 16, 8], strides = [1, 1, 1]} : vector<2x16x96xf32> to vector<2x16x8xf32>
    "tpu.trace_start"() <{level = 10 : i32, message = "bnd,bmd->bnm"}> : () -> ()
    %cst_25 = arith.constant dense<0.000000e+00> : vector<2x16x16xf32>
    %65 = tpu.matmul %62, %63, %cst_25 {dimension_numbers = #tpu.dot_dimension_numbers<[2], [2], [1], [1], [0, 0, 0, 1, 1, 1], [0], [0]>} : vector<2x16x8xf32>, vector<2x16x8xf32>, vector<2x16x16xf32> -> vector<2x16x16xf32>
    "tpu.trace_stop"() : () -> ()
    %cst_26 = arith.constant 0.353553385 : f32
    %66 = vector.broadcast %cst_26 : f32 to vector<2x16x16xf32>
    %67 = arith.mulf %65, %66 : vector<2x16x16xf32>
    %cst_27 = arith.constant dense<0xFF800000> : vector<2x16xf32>
    %68 = vector.multi_reduction <maximumf>, %67, %cst_27 [2] : vector<2x16x16xf32> to vector<2x16xf32>
    %69 = vector.shape_cast %68 : vector<2x16xf32> to vector<2x16x1xf32>
    %70 = vector.broadcast %69 : vector<2x16x1xf32> to vector<2x16x16xf32>
    %71 = arith.subf %67, %70 : vector<2x16x16xf32>
    %72 = math.exp %71 : vector<2x16x16xf32>
    %cst_28 = arith.constant dense<0.000000e+00> : vector<2x16xf32>
    %73 = vector.multi_reduction <add>, %72, %cst_28 [2] : vector<2x16x16xf32> to vector<2x16xf32>
    %74 = vector.shape_cast %73 : vector<2x16xf32> to vector<2x16x1xf32>
    %75 = tpu.reciprocal %74 {approx = true} : vector<2x16x1xf32> -> vector<2x16x1xf32>
    %76 = vector.broadcast %75 : vector<2x16x1xf32> to vector<2x16x16xf32>
    %77 = arith.mulf %72, %76 : vector<2x16x16xf32>
    "tpu.trace_start"() <{level = 10 : i32, message = "bnm,bmd->bnd"}> : () -> ()
    %cst_29 = arith.constant dense<0.000000e+00> : vector<2x16x8xf32>
    %78 = tpu.matmul %77, %64, %cst_29 {dimension_numbers = #tpu.dot_dimension_numbers<[2], [1], [1], [2], [0, 0, 0, 1, 1, 2], [0], [0]>} : vector<2x16x16xf32>, vector<2x16x8xf32>, vector<2x16x8xf32> -> vector<2x16x8xf32>
    "tpu.trace_stop"() : () -> ()
    %79 = tpu.concatenate %27, %44, %61, %78 in 2 : vector<2x16x8xf32>, vector<2x16x8xf32>, vector<2x16x8xf32>, vector<2x16x8xf32> -> vector<2x16x32xf32>
    %80 = vector.shape_cast %79 : vector<2x16x32xf32> to vector<32x32xf32>
    %c0_30 = arith.constant 0 : index
    %c0_31 = arith.constant 0 : index
    %c0_32 = arith.constant 0 : index
    %81 = vector.load %arg7[%c0_30, %c0_31, %c0_32] : memref<2x32x32xf32, #tpu.memory_space<vmem>>, vector<1x32x32xf32>
    %82 = vector.shape_cast %81 : vector<1x32x32xf32> to vector<32x32xf32>
    %cst_33 = arith.constant dense<0.000000e+00> : vector<32x32xf32>
    %83 = tpu.matmul %80, %82, %cst_33 {dimension_numbers = #tpu.dot_dimension_numbers<[1], [0], [0], [1], [0, 0, 1, 1], [], []>} : vector<32x32xf32>, vector<32x32xf32>, vector<32x32xf32> -> vector<32x32xf32>
    %84 = arith.addf %6, %83 : vector<32x32xf32>
    %c0_34 = arith.constant 0 : index
    %c0_35 = arith.constant 0 : index
    %c0_36 = arith.constant 0 : index
    %85 = vector.load %arg8[%c0_34, %c0_35, %c0_36] : memref<2x1x32xf32, #tpu.memory_space<vmem>>, vector<1x1x32xf32>
    %86 = vector.shape_cast %85 : vector<1x1x32xf32> to vector<1x32xf32>
    %c0_37 = arith.constant 0 : index
    %c0_38 = arith.constant 0 : index
    %c0_39 = arith.constant 0 : index
    %87 = vector.load %arg9[%c0_37, %c0_38, %c0_39] : memref<2x1x32xf32, #tpu.memory_space<vmem>>, vector<1x1x32xf32>
    %88 = vector.shape_cast %87 : vector<1x1x32xf32> to vector<1x32xf32>
    %cst_40 = arith.constant dense<0.000000e+00> : vector<32xf32>
    %89 = vector.multi_reduction <add>, %84, %cst_40 [1] : vector<32x32xf32> to vector<32xf32>
    %90 = vector.shape_cast %89 : vector<32xf32> to vector<32x1xf32>
    %cst_41 = arith.constant 3.200000e+01 : f32
    %91 = vector.broadcast %cst_41 : f32 to vector<32x1xf32>
    %92 = arith.divf %90, %91 : vector<32x1xf32>
    %93 = vector.broadcast %92 : vector<32x1xf32> to vector<32x32xf32>
    %94 = arith.subf %84, %93 : vector<32x32xf32>
    %95 = arith.mulf %94, %94 : vector<32x32xf32>
    %cst_42 = arith.constant dense<0.000000e+00> : vector<32xf32>
    %96 = vector.multi_reduction <add>, %95, %cst_42 [1] : vector<32x32xf32> to vector<32xf32>
    %97 = vector.shape_cast %96 : vector<32xf32> to vector<32x1xf32>
    %cst_43 = arith.constant 3.200000e+01 : f32
    %98 = vector.broadcast %cst_43 : f32 to vector<32x1xf32>
    %99 = arith.divf %97, %98 : vector<32x1xf32>
    %100 = vector.broadcast %92 : vector<32x1xf32> to vector<32x32xf32>
    %101 = arith.subf %84, %100 : vector<32x32xf32>
    %cst_44 = arith.constant 9.99999974E-6 : f32
    %102 = vector.broadcast %cst_44 : f32 to vector<32x1xf32>
    %103 = arith.addf %99, %102 : vector<32x1xf32>
    %104 = math.rsqrt %103 : vector<32x1xf32>
    %105 = vector.broadcast %104 : vector<32x1xf32> to vector<32x32xf32>
    %106 = arith.mulf %101, %105 : vector<32x32xf32>
    %107 = vector.broadcast %86 : vector<1x32xf32> to vector<32x32xf32>
    %108 = arith.mulf %106, %107 : vector<32x32xf32>
    %109 = vector.broadcast %88 : vector<1x32xf32> to vector<32x32xf32>
    %110 = arith.addf %108, %109 : vector<32x32xf32>
    %c0_45 = arith.constant 0 : index
    %c0_46 = arith.constant 0 : index
    %c0_47 = arith.constant 0 : index
    %111 = vector.load %arg10[%c0_45, %c0_46, %c0_47] : memref<2x32x64xf32, #tpu.memory_space<vmem>>, vector<1x32x64xf32>
    %112 = vector.shape_cast %111 : vector<1x32x64xf32> to vector<32x64xf32>
    %cst_48 = arith.constant dense<0.000000e+00> : vector<32x64xf32>
    %113 = tpu.matmul %110, %112, %cst_48 {dimension_numbers = #tpu.dot_dimension_numbers<[1], [0], [0], [1], [0, 0, 1, 1], [], []>} : vector<32x32xf32>, vector<32x64xf32>, vector<32x64xf32> -> vector<32x64xf32>
    %c0_49 = arith.constant 0 : index
    %c0_50 = arith.constant 0 : index
    %c0_51 = arith.constant 0 : index
    %114 = vector.load %arg11[%c0_49, %c0_50, %c0_51] : memref<2x1x64xf32, #tpu.memory_space<vmem>>, vector<1x1x64xf32>
    %115 = vector.shape_cast %114 : vector<1x1x64xf32> to vector<1x64xf32>
    %116 = vector.broadcast %115 : vector<1x64xf32> to vector<32x64xf32>
    %117 = arith.addf %113, %116 : vector<32x64xf32>
    %cst_52 = arith.constant 0.000000e+00 : f32
    %118 = vector.broadcast %cst_52 : f32 to vector<32x64xf32>
    %119 = arith.maximumf %117, %118 : vector<32x64xf32>
    %c0_53 = arith.constant 0 : index
    %c0_54 = arith.constant 0 : index
    %c0_55 = arith.constant 0 : index
    %120 = vector.load %arg12[%c0_53, %c0_54, %c0_55] : memref<2x64x32xf32, #tpu.memory_space<vmem>>, vector<1x64x32xf32>
    %121 = vector.shape_cast %120 : vector<1x64x32xf32> to vector<64x32xf32>
    %cst_56 = arith.constant dense<0.000000e+00> : vector<32x32xf32>
    %122 = tpu.matmul %119, %121, %cst_56 {dimension_numbers = #tpu.dot_dimension_numbers<[1], [0], [0], [1], [0, 0, 1, 1], [], []>} : vector<32x64xf32>, vector<64x32xf32>, vector<32x32xf32> -> vector<32x32xf32>
    %c0_57 = arith.constant 0 : index
    %c0_58 = arith.constant 0 : index
    %c0_59 = arith.constant 0 : index
    %123 = vector.load %arg13[%c0_57, %c0_58, %c0_59] : memref<2x1x32xf32, #tpu.memory_space<vmem>>, vector<1x1x32xf32>
    %124 = vector.shape_cast %123 : vector<1x1x32xf32> to vector<1x32xf32>
    %125 = vector.broadcast %124 : vector<1x32xf32> to vector<32x32xf32>
    %126 = arith.addf %122, %125 : vector<32x32xf32>
    %127 = arith.addf %110, %126 : vector<32x32xf32>
    %c0_60 = arith.constant 0 : index
    %c0_61 = arith.constant 0 : index
    %c0_62 = arith.constant 0 : index
    %128 = vector.load %arg14[%c0_60, %c0_61, %c0_62] : memref<2x1x32xf32, #tpu.memory_space<vmem>>, vector<1x1x32xf32>
    %129 = vector.shape_cast %128 : vector<1x1x32xf32> to vector<1x32xf32>
    %c0_63 = arith.constant 0 : index
    %c0_64 = arith.constant 0 : index
    %c0_65 = arith.constant 0 : index
    %130 = vector.load %arg15[%c0_63, %c0_64, %c0_65] : memref<2x1x32xf32, #tpu.memory_space<vmem>>, vector<1x1x32xf32>
    %131 = vector.shape_cast %130 : vector<1x1x32xf32> to vector<1x32xf32>
    %cst_66 = arith.constant dense<0.000000e+00> : vector<32xf32>
    %132 = vector.multi_reduction <add>, %127, %cst_66 [1] : vector<32x32xf32> to vector<32xf32>
    %133 = vector.shape_cast %132 : vector<32xf32> to vector<32x1xf32>
    %cst_67 = arith.constant 3.200000e+01 : f32
    %134 = vector.broadcast %cst_67 : f32 to vector<32x1xf32>
    %135 = arith.divf %133, %134 : vector<32x1xf32>
    %136 = vector.broadcast %135 : vector<32x1xf32> to vector<32x32xf32>
    %137 = arith.subf %127, %136 : vector<32x32xf32>
    %138 = arith.mulf %137, %137 : vector<32x32xf32>
    %cst_68 = arith.constant dense<0.000000e+00> : vector<32xf32>
    %139 = vector.multi_reduction <add>, %138, %cst_68 [1] : vector<32x32xf32> to vector<32xf32>
    %140 = vector.shape_cast %139 : vector<32xf32> to vector<32x1xf32>
    %cst_69 = arith.constant 3.200000e+01 : f32
    %141 = vector.broadcast %cst_69 : f32 to vector<32x1xf32>
    %142 = arith.divf %140, %141 : vector<32x1xf32>
    %143 = vector.broadcast %135 : vector<32x1xf32> to vector<32x32xf32>
    %144 = arith.subf %127, %143 : vector<32x32xf32>
    %cst_70 = arith.constant 9.99999974E-6 : f32
    %145 = vector.broadcast %cst_70 : f32 to vector<32x1xf32>
    %146 = arith.addf %142, %145 : vector<32x1xf32>
    %147 = math.rsqrt %146 : vector<32x1xf32>
    %148 = vector.broadcast %147 : vector<32x1xf32> to vector<32x32xf32>
    %149 = arith.mulf %144, %148 : vector<32x32xf32>
    %150 = vector.broadcast %129 : vector<1x32xf32> to vector<32x32xf32>
    %151 = arith.mulf %149, %150 : vector<32x32xf32>
    %152 = vector.broadcast %131 : vector<1x32xf32> to vector<32x32xf32>
    %153 = arith.addf %151, %152 : vector<32x32xf32>
    %c1 = arith.constant 1 : index
    %c0_71 = arith.constant 0 : index
    %c0_72 = arith.constant 0 : index
    %154 = vector.load %arg6[%c1, %c0_71, %c0_72] : memref<2x32x96xf32, #tpu.memory_space<vmem>>, vector<1x32x96xf32>
    %155 = vector.shape_cast %154 : vector<1x32x96xf32> to vector<32x96xf32>
    %cst_73 = arith.constant dense<0.000000e+00> : vector<32x96xf32>
    %156 = tpu.matmul %153, %155, %cst_73 {dimension_numbers = #tpu.dot_dimension_numbers<[1], [0], [0], [1], [0, 0, 1, 1], [], []>} : vector<32x32xf32>, vector<32x96xf32>, vector<32x96xf32> -> vector<32x96xf32>
    %157 = vector.shape_cast %156 : vector<32x96xf32> to vector<2x16x96xf32>
    %158 = vector.extract_strided_slice %157 {offsets = [0, 0, 0], sizes = [2, 16, 8], strides = [1, 1, 1]} : vector<2x16x96xf32> to vector<2x16x8xf32>
    %159 = vector.extract_strided_slice %157 {offsets = [0, 0, 32], sizes = [2, 16, 8], strides = [1, 1, 1]} : vector<2x16x96xf32> to vector<2x16x8xf32>
    %160 = vector.extract_strided_slice %157 {offsets = [0, 0, 64], sizes = [2, 16, 8], strides = [1, 1, 1]} : vector<2x16x96xf32> to vector<2x16x8xf32>
    "tpu.trace_start"() <{level = 10 : i32, message = "bnd,bmd->bnm"}> : () -> ()
    %cst_74 = arith.constant dense<0.000000e+00> : vector<2x16x16xf32>
    %161 = tpu.matmul %158, %159, %cst_74 {dimension_numbers = #tpu.dot_dimension_numbers<[2], [2], [1], [1], [0, 0, 0, 1, 1, 1], [0], [0]>} : vector<2x16x8xf32>, vector<2x16x8xf32>, vector<2x16x16xf32> -> vector<2x16x16xf32>
    "tpu.trace_stop"() : () -> ()
    %cst_75 = arith.constant 0.353553385 : f32
    %162 = vector.broadcast %cst_75 : f32 to vector<2x16x16xf32>
    %163 = arith.mulf %161, %162 : vector<2x16x16xf32>
    %cst_76 = arith.constant dense<0xFF800000> : vector<2x16xf32>
    %164 = vector.multi_reduction <maximumf>, %163, %cst_76 [2] : vector<2x16x16xf32> to vector<2x16xf32>
    %165 = vector.shape_cast %164 : vector<2x16xf32> to vector<2x16x1xf32>
    %166 = vector.broadcast %165 : vector<2x16x1xf32> to vector<2x16x16xf32>
    %167 = arith.subf %163, %166 : vector<2x16x16xf32>
    %168 = math.exp %167 : vector<2x16x16xf32>
    %cst_77 = arith.constant dense<0.000000e+00> : vector<2x16xf32>
    %169 = vector.multi_reduction <add>, %168, %cst_77 [2] : vector<2x16x16xf32> to vector<2x16xf32>
    %170 = vector.shape_cast %169 : vector<2x16xf32> to vector<2x16x1xf32>
    %171 = tpu.reciprocal %170 {approx = true} : vector<2x16x1xf32> -> vector<2x16x1xf32>
    %172 = vector.broadcast %171 : vector<2x16x1xf32> to vector<2x16x16xf32>
    %173 = arith.mulf %168, %172 : vector<2x16x16xf32>
    "tpu.trace_start"() <{level = 10 : i32, message = "bnm,bmd->bnd"}> : () -> ()
    %cst_78 = arith.constant dense<0.000000e+00> : vector<2x16x8xf32>
    %174 = tpu.matmul %173, %160, %cst_78 {dimension_numbers = #tpu.dot_dimension_numbers<[2], [1], [1], [2], [0, 0, 0, 1, 1, 2], [0], [0]>} : vector<2x16x16xf32>, vector<2x16x8xf32>, vector<2x16x8xf32> -> vector<2x16x8xf32>
    "tpu.trace_stop"() : () -> ()
    %175 = vector.extract_strided_slice %157 {offsets = [0, 0, 8], sizes = [2, 16, 8], strides = [1, 1, 1]} : vector<2x16x96xf32> to vector<2x16x8xf32>
    %176 = vector.extract_strided_slice %157 {offsets = [0, 0, 40], sizes = [2, 16, 8], strides = [1, 1, 1]} : vector<2x16x96xf32> to vector<2x16x8xf32>
    %177 = vector.extract_strided_slice %157 {offsets = [0, 0, 72], sizes = [2, 16, 8], strides = [1, 1, 1]} : vector<2x16x96xf32> to vector<2x16x8xf32>
    "tpu.trace_start"() <{level = 10 : i32, message = "bnd,bmd->bnm"}> : () -> ()
    %cst_79 = arith.constant dense<0.000000e+00> : vector<2x16x16xf32>
    %178 = tpu.matmul %175, %176, %cst_79 {dimension_numbers = #tpu.dot_dimension_numbers<[2], [2], [1], [1], [0, 0, 0, 1, 1, 1], [0], [0]>} : vector<2x16x8xf32>, vector<2x16x8xf32>, vector<2x16x16xf32> -> vector<2x16x16xf32>
    "tpu.trace_stop"() : () -> ()
    %cst_80 = arith.constant 0.353553385 : f32
    %179 = vector.broadcast %cst_80 : f32 to vector<2x16x16xf32>
    %180 = arith.mulf %178, %179 : vector<2x16x16xf32>
    %cst_81 = arith.constant dense<0xFF800000> : vector<2x16xf32>
    %181 = vector.multi_reduction <maximumf>, %180, %cst_81 [2] : vector<2x16x16xf32> to vector<2x16xf32>
    %182 = vector.shape_cast %181 : vector<2x16xf32> to vector<2x16x1xf32>
    %183 = vector.broadcast %182 : vector<2x16x1xf32> to vector<2x16x16xf32>
    %184 = arith.subf %180, %183 : vector<2x16x16xf32>
    %185 = math.exp %184 : vector<2x16x16xf32>
    %cst_82 = arith.constant dense<0.000000e+00> : vector<2x16xf32>
    %186 = vector.multi_reduction <add>, %185, %cst_82 [2] : vector<2x16x16xf32> to vector<2x16xf32>
    %187 = vector.shape_cast %186 : vector<2x16xf32> to vector<2x16x1xf32>
    %188 = tpu.reciprocal %187 {approx = true} : vector<2x16x1xf32> -> vector<2x16x1xf32>
    %189 = vector.broadcast %188 : vector<2x16x1xf32> to vector<2x16x16xf32>
    %190 = arith.mulf %185, %189 : vector<2x16x16xf32>
    "tpu.trace_start"() <{level = 10 : i32, message = "bnm,bmd->bnd"}> : () -> ()
    %cst_83 = arith.constant dense<0.000000e+00> : vector<2x16x8xf32>
    %191 = tpu.matmul %190, %177, %cst_83 {dimension_numbers = #tpu.dot_dimension_numbers<[2], [1], [1], [2], [0, 0, 0, 1, 1, 2], [0], [0]>} : vector<2x16x16xf32>, vector<2x16x8xf32>, vector<2x16x8xf32> -> vector<2x16x8xf32>
    "tpu.trace_stop"() : () -> ()
    %192 = vector.extract_strided_slice %157 {offsets = [0, 0, 16], sizes = [2, 16, 8], strides = [1, 1, 1]} : vector<2x16x96xf32> to vector<2x16x8xf32>
    %193 = vector.extract_strided_slice %157 {offsets = [0, 0, 48], sizes = [2, 16, 8], strides = [1, 1, 1]} : vector<2x16x96xf32> to vector<2x16x8xf32>
    %194 = vector.extract_strided_slice %157 {offsets = [0, 0, 80], sizes = [2, 16, 8], strides = [1, 1, 1]} : vector<2x16x96xf32> to vector<2x16x8xf32>
    "tpu.trace_start"() <{level = 10 : i32, message = "bnd,bmd->bnm"}> : () -> ()
    %cst_84 = arith.constant dense<0.000000e+00> : vector<2x16x16xf32>
    %195 = tpu.matmul %192, %193, %cst_84 {dimension_numbers = #tpu.dot_dimension_numbers<[2], [2], [1], [1], [0, 0, 0, 1, 1, 1], [0], [0]>} : vector<2x16x8xf32>, vector<2x16x8xf32>, vector<2x16x16xf32> -> vector<2x16x16xf32>
    "tpu.trace_stop"() : () -> ()
    %cst_85 = arith.constant 0.353553385 : f32
    %196 = vector.broadcast %cst_85 : f32 to vector<2x16x16xf32>
    %197 = arith.mulf %195, %196 : vector<2x16x16xf32>
    %cst_86 = arith.constant dense<0xFF800000> : vector<2x16xf32>
    %198 = vector.multi_reduction <maximumf>, %197, %cst_86 [2] : vector<2x16x16xf32> to vector<2x16xf32>
    %199 = vector.shape_cast %198 : vector<2x16xf32> to vector<2x16x1xf32>
    %200 = vector.broadcast %199 : vector<2x16x1xf32> to vector<2x16x16xf32>
    %201 = arith.subf %197, %200 : vector<2x16x16xf32>
    %202 = math.exp %201 : vector<2x16x16xf32>
    %cst_87 = arith.constant dense<0.000000e+00> : vector<2x16xf32>
    %203 = vector.multi_reduction <add>, %202, %cst_87 [2] : vector<2x16x16xf32> to vector<2x16xf32>
    %204 = vector.shape_cast %203 : vector<2x16xf32> to vector<2x16x1xf32>
    %205 = tpu.reciprocal %204 {approx = true} : vector<2x16x1xf32> -> vector<2x16x1xf32>
    %206 = vector.broadcast %205 : vector<2x16x1xf32> to vector<2x16x16xf32>
    %207 = arith.mulf %202, %206 : vector<2x16x16xf32>
    "tpu.trace_start"() <{level = 10 : i32, message = "bnm,bmd->bnd"}> : () -> ()
    %cst_88 = arith.constant dense<0.000000e+00> : vector<2x16x8xf32>
    %208 = tpu.matmul %207, %194, %cst_88 {dimension_numbers = #tpu.dot_dimension_numbers<[2], [1], [1], [2], [0, 0, 0, 1, 1, 2], [0], [0]>} : vector<2x16x16xf32>, vector<2x16x8xf32>, vector<2x16x8xf32> -> vector<2x16x8xf32>
    "tpu.trace_stop"() : () -> ()
    %209 = vector.extract_strided_slice %157 {offsets = [0, 0, 24], sizes = [2, 16, 8], strides = [1, 1, 1]} : vector<2x16x96xf32> to vector<2x16x8xf32>
    %210 = vector.extract_strided_slice %157 {offsets = [0, 0, 56], sizes = [2, 16, 8], strides = [1, 1, 1]} : vector<2x16x96xf32> to vector<2x16x8xf32>
    %211 = vector.extract_strided_slice %157 {offsets = [0, 0, 88], sizes = [2, 16, 8], strides = [1, 1, 1]} : vector<2x16x96xf32> to vector<2x16x8xf32>
    "tpu.trace_start"() <{level = 10 : i32, message = "bnd,bmd->bnm"}> : () -> ()
    %cst_89 = arith.constant dense<0.000000e+00> : vector<2x16x16xf32>
    %212 = tpu.matmul %209, %210, %cst_89 {dimension_numbers = #tpu.dot_dimension_numbers<[2], [2], [1], [1], [0, 0, 0, 1, 1, 1], [0], [0]>} : vector<2x16x8xf32>, vector<2x16x8xf32>, vector<2x16x16xf32> -> vector<2x16x16xf32>
    "tpu.trace_stop"() : () -> ()
    %cst_90 = arith.constant 0.353553385 : f32
    %213 = vector.broadcast %cst_90 : f32 to vector<2x16x16xf32>
    %214 = arith.mulf %212, %213 : vector<2x16x16xf32>
    %cst_91 = arith.constant dense<0xFF800000> : vector<2x16xf32>
    %215 = vector.multi_reduction <maximumf>, %214, %cst_91 [2] : vector<2x16x16xf32> to vector<2x16xf32>
    %216 = vector.shape_cast %215 : vector<2x16xf32> to vector<2x16x1xf32>
    %217 = vector.broadcast %216 : vector<2x16x1xf32> to vector<2x16x16xf32>
    %218 = arith.subf %214, %217 : vector<2x16x16xf32>
    %219 = math.exp %218 : vector<2x16x16xf32>
    %cst_92 = arith.constant dense<0.000000e+00> : vector<2x16xf32>
    %220 = vector.multi_reduction <add>, %219, %cst_92 [2] : vector<2x16x16xf32> to vector<2x16xf32>
    %221 = vector.shape_cast %220 : vector<2x16xf32> to vector<2x16x1xf32>
    %222 = tpu.reciprocal %221 {approx = true} : vector<2x16x1xf32> -> vector<2x16x1xf32>
    %223 = vector.broadcast %222 : vector<2x16x1xf32> to vector<2x16x16xf32>
    %224 = arith.mulf %219, %223 : vector<2x16x16xf32>
    "tpu.trace_start"() <{level = 10 : i32, message = "bnm,bmd->bnd"}> : () -> ()
    %cst_93 = arith.constant dense<0.000000e+00> : vector<2x16x8xf32>
    %225 = tpu.matmul %224, %211, %cst_93 {dimension_numbers = #tpu.dot_dimension_numbers<[2], [1], [1], [2], [0, 0, 0, 1, 1, 2], [0], [0]>} : vector<2x16x16xf32>, vector<2x16x8xf32>, vector<2x16x8xf32> -> vector<2x16x8xf32>
    "tpu.trace_stop"() : () -> ()
    %226 = tpu.concatenate %174, %191, %208, %225 in 2 : vector<2x16x8xf32>, vector<2x16x8xf32>, vector<2x16x8xf32>, vector<2x16x8xf32> -> vector<2x16x32xf32>
    %227 = vector.shape_cast %226 : vector<2x16x32xf32> to vector<32x32xf32>
    %c1_94 = arith.constant 1 : index
    %c0_95 = arith.constant 0 : index
    %c0_96 = arith.constant 0 : index
    %228 = vector.load %arg7[%c1_94, %c0_95, %c0_96] : memref<2x32x32xf32, #tpu.memory_space<vmem>>, vector<1x32x32xf32>
    %229 = vector.shape_cast %228 : vector<1x32x32xf32> to vector<32x32xf32>
    %cst_97 = arith.constant dense<0.000000e+00> : vector<32x32xf32>
    %230 = tpu.matmul %227, %229, %cst_97 {dimension_numbers = #tpu.dot_dimension_numbers<[1], [0], [0], [1], [0, 0, 1, 1], [], []>} : vector<32x32xf32>, vector<32x32xf32>, vector<32x32xf32> -> vector<32x32xf32>
    %231 = arith.addf %153, %230 : vector<32x32xf32>
    %c1_98 = arith.constant 1 : index
    %c0_99 = arith.constant 0 : index
    %c0_100 = arith.constant 0 : index
    %232 = vector.load %arg8[%c1_98, %c0_99, %c0_100] : memref<2x1x32xf32, #tpu.memory_space<vmem>>, vector<1x1x32xf32>
    %233 = vector.shape_cast %232 : vector<1x1x32xf32> to vector<1x32xf32>
    %c1_101 = arith.constant 1 : index
    %c0_102 = arith.constant 0 : index
    %c0_103 = arith.constant 0 : index
    %234 = vector.load %arg9[%c1_101, %c0_102, %c0_103] : memref<2x1x32xf32, #tpu.memory_space<vmem>>, vector<1x1x32xf32>
    %235 = vector.shape_cast %234 : vector<1x1x32xf32> to vector<1x32xf32>
    %cst_104 = arith.constant dense<0.000000e+00> : vector<32xf32>
    %236 = vector.multi_reduction <add>, %231, %cst_104 [1] : vector<32x32xf32> to vector<32xf32>
    %237 = vector.shape_cast %236 : vector<32xf32> to vector<32x1xf32>
    %cst_105 = arith.constant 3.200000e+01 : f32
    %238 = vector.broadcast %cst_105 : f32 to vector<32x1xf32>
    %239 = arith.divf %237, %238 : vector<32x1xf32>
    %240 = vector.broadcast %239 : vector<32x1xf32> to vector<32x32xf32>
    %241 = arith.subf %231, %240 : vector<32x32xf32>
    %242 = arith.mulf %241, %241 : vector<32x32xf32>
    %cst_106 = arith.constant dense<0.000000e+00> : vector<32xf32>
    %243 = vector.multi_reduction <add>, %242, %cst_106 [1] : vector<32x32xf32> to vector<32xf32>
    %244 = vector.shape_cast %243 : vector<32xf32> to vector<32x1xf32>
    %cst_107 = arith.constant 3.200000e+01 : f32
    %245 = vector.broadcast %cst_107 : f32 to vector<32x1xf32>
    %246 = arith.divf %244, %245 : vector<32x1xf32>
    %247 = vector.broadcast %239 : vector<32x1xf32> to vector<32x32xf32>
    %248 = arith.subf %231, %247 : vector<32x32xf32>
    %cst_108 = arith.constant 9.99999974E-6 : f32
    %249 = vector.broadcast %cst_108 : f32 to vector<32x1xf32>
    %250 = arith.addf %246, %249 : vector<32x1xf32>
    %251 = math.rsqrt %250 : vector<32x1xf32>
    %252 = vector.broadcast %251 : vector<32x1xf32> to vector<32x32xf32>
    %253 = arith.mulf %248, %252 : vector<32x32xf32>
    %254 = vector.broadcast %233 : vector<1x32xf32> to vector<32x32xf32>
    %255 = arith.mulf %253, %254 : vector<32x32xf32>
    %256 = vector.broadcast %235 : vector<1x32xf32> to vector<32x32xf32>
    %257 = arith.addf %255, %256 : vector<32x32xf32>
    %c1_109 = arith.constant 1 : index
    %c0_110 = arith.constant 0 : index
    %c0_111 = arith.constant 0 : index
    %258 = vector.load %arg10[%c1_109, %c0_110, %c0_111] : memref<2x32x64xf32, #tpu.memory_space<vmem>>, vector<1x32x64xf32>
    %259 = vector.shape_cast %258 : vector<1x32x64xf32> to vector<32x64xf32>
    %cst_112 = arith.constant dense<0.000000e+00> : vector<32x64xf32>
    %260 = tpu.matmul %257, %259, %cst_112 {dimension_numbers = #tpu.dot_dimension_numbers<[1], [0], [0], [1], [0, 0, 1, 1], [], []>} : vector<32x32xf32>, vector<32x64xf32>, vector<32x64xf32> -> vector<32x64xf32>
    %c1_113 = arith.constant 1 : index
    %c0_114 = arith.constant 0 : index
    %c0_115 = arith.constant 0 : index
    %261 = vector.load %arg11[%c1_113, %c0_114, %c0_115] : memref<2x1x64xf32, #tpu.memory_space<vmem>>, vector<1x1x64xf32>
    %262 = vector.shape_cast %261 : vector<1x1x64xf32> to vector<1x64xf32>
    %263 = vector.broadcast %262 : vector<1x64xf32> to vector<32x64xf32>
    %264 = arith.addf %260, %263 : vector<32x64xf32>
    %cst_116 = arith.constant 0.000000e+00 : f32
    %265 = vector.broadcast %cst_116 : f32 to vector<32x64xf32>
    %266 = arith.maximumf %264, %265 : vector<32x64xf32>
    %c1_117 = arith.constant 1 : index
    %c0_118 = arith.constant 0 : index
    %c0_119 = arith.constant 0 : index
    %267 = vector.load %arg12[%c1_117, %c0_118, %c0_119] : memref<2x64x32xf32, #tpu.memory_space<vmem>>, vector<1x64x32xf32>
    %268 = vector.shape_cast %267 : vector<1x64x32xf32> to vector<64x32xf32>
    %cst_120 = arith.constant dense<0.000000e+00> : vector<32x32xf32>
    %269 = tpu.matmul %266, %268, %cst_120 {dimension_numbers = #tpu.dot_dimension_numbers<[1], [0], [0], [1], [0, 0, 1, 1], [], []>} : vector<32x64xf32>, vector<64x32xf32>, vector<32x32xf32> -> vector<32x32xf32>
    %c1_121 = arith.constant 1 : index
    %c0_122 = arith.constant 0 : index
    %c0_123 = arith.constant 0 : index
    %270 = vector.load %arg13[%c1_121, %c0_122, %c0_123] : memref<2x1x32xf32, #tpu.memory_space<vmem>>, vector<1x1x32xf32>
    %271 = vector.shape_cast %270 : vector<1x1x32xf32> to vector<1x32xf32>
    %272 = vector.broadcast %271 : vector<1x32xf32> to vector<32x32xf32>
    %273 = arith.addf %269, %272 : vector<32x32xf32>
    %274 = arith.addf %257, %273 : vector<32x32xf32>
    %c1_124 = arith.constant 1 : index
    %c0_125 = arith.constant 0 : index
    %c0_126 = arith.constant 0 : index
    %275 = vector.load %arg14[%c1_124, %c0_125, %c0_126] : memref<2x1x32xf32, #tpu.memory_space<vmem>>, vector<1x1x32xf32>
    %276 = vector.shape_cast %275 : vector<1x1x32xf32> to vector<1x32xf32>
    %c1_127 = arith.constant 1 : index
    %c0_128 = arith.constant 0 : index
    %c0_129 = arith.constant 0 : index
    %277 = vector.load %arg15[%c1_127, %c0_128, %c0_129] : memref<2x1x32xf32, #tpu.memory_space<vmem>>, vector<1x1x32xf32>
    %278 = vector.shape_cast %277 : vector<1x1x32xf32> to vector<1x32xf32>
    %cst_130 = arith.constant dense<0.000000e+00> : vector<32xf32>
    %279 = vector.multi_reduction <add>, %274, %cst_130 [1] : vector<32x32xf32> to vector<32xf32>
    %280 = vector.shape_cast %279 : vector<32xf32> to vector<32x1xf32>
    %cst_131 = arith.constant 3.200000e+01 : f32
    %281 = vector.broadcast %cst_131 : f32 to vector<32x1xf32>
    %282 = arith.divf %280, %281 : vector<32x1xf32>
    %283 = vector.broadcast %282 : vector<32x1xf32> to vector<32x32xf32>
    %284 = arith.subf %274, %283 : vector<32x32xf32>
    %285 = arith.mulf %284, %284 : vector<32x32xf32>
    %cst_132 = arith.constant dense<0.000000e+00> : vector<32xf32>
    %286 = vector.multi_reduction <add>, %285, %cst_132 [1] : vector<32x32xf32> to vector<32xf32>
    %287 = vector.shape_cast %286 : vector<32xf32> to vector<32x1xf32>
    %cst_133 = arith.constant 3.200000e+01 : f32
    %288 = vector.broadcast %cst_133 : f32 to vector<32x1xf32>
    %289 = arith.divf %287, %288 : vector<32x1xf32>
    %290 = vector.broadcast %282 : vector<32x1xf32> to vector<32x32xf32>
    %291 = arith.subf %274, %290 : vector<32x32xf32>
    %cst_134 = arith.constant 9.99999974E-6 : f32
    %292 = vector.broadcast %cst_134 : f32 to vector<32x1xf32>
    %293 = arith.addf %289, %292 : vector<32x1xf32>
    %294 = math.rsqrt %293 : vector<32x1xf32>
    %295 = vector.broadcast %294 : vector<32x1xf32> to vector<32x32xf32>
    %296 = arith.mulf %291, %295 : vector<32x32xf32>
    %297 = vector.broadcast %276 : vector<1x32xf32> to vector<32x32xf32>
    %298 = arith.mulf %296, %297 : vector<32x32xf32>
    %299 = vector.broadcast %278 : vector<1x32xf32> to vector<32x32xf32>
    %300 = arith.addf %298, %299 : vector<32x32xf32>
    %301 = vector.shape_cast %300 : vector<32x32xf32> to vector<2x16x32xf32>
    %cst_135 = arith.constant dense<0.000000e+00> : vector<2x32xf32>
    %302 = vector.multi_reduction <add>, %301, %cst_135 [1] : vector<2x16x32xf32> to vector<2x32xf32>
    %cst_136 = arith.constant 1.600000e+01 : f32
    %303 = vector.broadcast %cst_136 : f32 to vector<2x32xf32>
    %304 = arith.divf %302, %303 : vector<2x32xf32>
    %c0_137 = arith.constant 0 : index
    %c0_138 = arith.constant 0 : index
    %305 = vector.load %arg16[%c0_137, %c0_138] : memref<32x64xf32, #tpu.memory_space<vmem>>, vector<32x64xf32>
    %cst_139 = arith.constant dense<0.000000e+00> : vector<2x64xf32>
    %306 = tpu.matmul %304, %305, %cst_139 {dimension_numbers = #tpu.dot_dimension_numbers<[1], [0], [0], [1], [0, 0, 1, 1], [], []>} : vector<2x32xf32>, vector<32x64xf32>, vector<2x64xf32> -> vector<2x64xf32>
    %c0_140 = arith.constant 0 : index
    %c0_141 = arith.constant 0 : index
    %307 = vector.load %arg2[%c0_140, %c0_141] : memref<2x32xf32, #tpu.memory_space<vmem>>, vector<2x32xf32>
    %c0_142 = arith.constant 0 : index
    %c0_143 = arith.constant 0 : index
    %308 = vector.load %arg17[%c0_142, %c0_143] : memref<32x64xf32, #tpu.memory_space<vmem>>, vector<32x64xf32>
    %cst_144 = arith.constant dense<0.000000e+00> : vector<2x64xf32>
    %309 = tpu.matmul %307, %308, %cst_144 {dimension_numbers = #tpu.dot_dimension_numbers<[1], [0], [0], [1], [0, 0, 1, 1], [], []>} : vector<2x32xf32>, vector<32x64xf32>, vector<2x64xf32> -> vector<2x64xf32>
    %310 = arith.addf %306, %309 : vector<2x64xf32>
    %c0_145 = arith.constant 0 : index
    %c0_146 = arith.constant 0 : index
    %311 = vector.load %arg3[%c0_145, %c0_146] : memref<2x32xf32, #tpu.memory_space<vmem>>, vector<2x32xf32>
    %c0_147 = arith.constant 0 : index
    %c0_148 = arith.constant 0 : index
    %312 = vector.load %arg18[%c0_147, %c0_148] : memref<32x64xf32, #tpu.memory_space<vmem>>, vector<32x64xf32>
    %cst_149 = arith.constant dense<0.000000e+00> : vector<2x64xf32>
    %313 = tpu.matmul %311, %312, %cst_149 {dimension_numbers = #tpu.dot_dimension_numbers<[1], [0], [0], [1], [0, 0, 1, 1], [], []>} : vector<2x32xf32>, vector<32x64xf32>, vector<2x64xf32> -> vector<2x64xf32>
    %314 = arith.addf %310, %313 : vector<2x64xf32>
    %c0_150 = arith.constant 0 : index
    %c0_151 = arith.constant 0 : index
    %315 = vector.load %arg19[%c0_150, %c0_151] : memref<1x64xf32, #tpu.memory_space<vmem>>, vector<1x64xf32>
    %316 = vector.broadcast %315 : vector<1x64xf32> to vector<2x64xf32>
    %317 = arith.addf %314, %316 : vector<2x64xf32>
    %cst_152 = arith.constant 0.000000e+00 : f32
    %318 = vector.broadcast %cst_152 : f32 to vector<2x64xf32>
    %319 = arith.maximumf %317, %318 : vector<2x64xf32>
    %c0_153 = arith.constant 0 : index
    %c0_154 = arith.constant 0 : index
    %320 = vector.load %arg20[%c0_153, %c0_154] : memref<64x1xf32, #tpu.memory_space<vmem>>, vector<64x1xf32>
    %cst_155 = arith.constant dense<0.000000e+00> : vector<2x1xf32>
    %321 = tpu.matmul %319, %320, %cst_155 {dimension_numbers = #tpu.dot_dimension_numbers<[1], [0], [0], [1], [0, 0, 1, 1], [], []>} : vector<2x64xf32>, vector<64x1xf32>, vector<2x1xf32> -> vector<2x1xf32>
    %c0_156 = arith.constant 0 : index
    %c0_157 = arith.constant 0 : index
    %322 = vector.load %arg21[%c0_156, %c0_157] : memref<1x1xf32, #tpu.memory_space<vmem>>, vector<1x1xf32>
    %323 = vector.broadcast %322 : vector<1x1xf32> to vector<2x1xf32>
    %324 = arith.addf %321, %323 : vector<2x1xf32>
    %c0_158 = arith.constant 0 : index
    %c0_159 = arith.constant 0 : index
    %325 = vector.load %arg22[%c0_158, %c0_159] : memref<2x1xf32, #tpu.memory_space<vmem>>, vector<2x1xf32>
    tpu.vector_store %arg22[%c0_158, %c0_159], %324 {strides = array<i32>} : memref<2x1xf32, #tpu.memory_space<vmem>>, vector<2x1xf32>,
    return
  }
  func.func @transform_0(%arg0: i32) -> (i32, i32, i32) {
    %c0_i32 = arith.constant 0 : i32
    %c0_i32_0 = arith.constant 0 : i32
    %c0_i32_1 = arith.constant 0 : i32
    return %arg0, %c0_i32, %c0_i32_0 : i32, i32, i32
  }
  func.func @transform_1(%arg0: i32) -> (i32, i32) {
    %c0_i32 = arith.constant 0 : i32
    %c0_i32_0 = arith.constant 0 : i32
    return %arg0, %c0_i32 : i32, i32
  }
  func.func @transform_2(%arg0: i32) -> (i32, i32) {
    %c0_i32 = arith.constant 0 : i32
    %c0_i32_0 = arith.constant 0 : i32
    return %arg0, %c0_i32 : i32, i32
  }
  func.func @transform_3(%arg0: i32) -> (i32, i32) {
    %c0_i32 = arith.constant 0 : i32
    %c0_i32_0 = arith.constant 0 : i32
    %c0_i32_1 = arith.constant 0 : i32
    return %c0_i32, %c0_i32_0 : i32, i32
  }
  func.func @transform_4(%arg0: i32) -> (i32, i32) {
    %c0_i32 = arith.constant 0 : i32
    %c0_i32_0 = arith.constant 0 : i32
    %c0_i32_1 = arith.constant 0 : i32
    return %c0_i32, %c0_i32_0 : i32, i32
  }
  func.func @transform_5(%arg0: i32) -> (i32, i32, i32) {
    %c0_i32 = arith.constant 0 : i32
    %c0_i32_0 = arith.constant 0 : i32
    %c0_i32_1 = arith.constant 0 : i32
    %c0_i32_2 = arith.constant 0 : i32
    return %c0_i32, %c0_i32_0, %c0_i32_1 : i32, i32, i32
  }
  func.func @transform_6(%arg0: i32) -> (i32, i32, i32) {
    %c0_i32 = arith.constant 0 : i32
    %c0_i32_0 = arith.constant 0 : i32
    %c0_i32_1 = arith.constant 0 : i32
    %c0_i32_2 = arith.constant 0 : i32
    return %c0_i32, %c0_i32_0, %c0_i32_1 : i32, i32, i32
  }
  func.func @transform_7(%arg0: i32) -> (i32, i32, i32) {
    %c0_i32 = arith.constant 0 : i32
    %c0_i32_0 = arith.constant 0 : i32
    %c0_i32_1 = arith.constant 0 : i32
    %c0_i32_2 = arith.constant 0 : i32
    return %c0_i32, %c0_i32_0, %c0_i32_1 : i32, i32, i32
  }
  func.func @transform_8(%arg0: i32) -> (i32, i32, i32) {
    %c0_i32 = arith.constant 0 : i32
    %c0_i32_0 = arith.constant 0 : i32
    %c0_i32_1 = arith.constant 0 : i32
    %c0_i32_2 = arith.constant 0 : i32
    return %c0_i32, %c0_i32_0, %c0_i32_1 : i32, i32, i32
  }
  func.func @transform_9(%arg0: i32) -> (i32, i32, i32) {
    %c0_i32 = arith.constant 0 : i32
    %c0_i32_0 = arith.constant 0 : i32
    %c0_i32_1 = arith.constant 0 : i32
    %c0_i32_2 = arith.constant 0 : i32
    return %c0_i32, %c0_i32_0, %c0_i32_1 : i32, i32, i32
  }
  func.func @transform_10(%arg0: i32) -> (i32, i32, i32) {
    %c0_i32 = arith.constant 0 : i32
    %c0_i32_0 = arith.constant 0 : i32
    %c0_i32_1 = arith.constant 0 : i32
    %c0_i32_2 = arith.constant 0 : i32
    return %c0_i32, %c0_i32_0, %c0_i32_1 : i32, i32, i32
  }
  func.func @transform_11(%arg0: i32) -> (i32, i32, i32) {
    %c0_i32 = arith.constant 0 : i32
    %c0_i32_0 = arith.constant 0 : i32
    %c0_i32_1 = arith.constant 0 : i32
    %c0_i32_2 = arith.constant 0 : i32
    return %c0_i32, %c0_i32_0, %c0_i32_1 : i32, i32, i32
  }
  func.func @transform_12(%arg0: i32) -> (i32, i32, i32) {
    %c0_i32 = arith.constant 0 : i32
    %c0_i32_0 = arith.constant 0 : i32
    %c0_i32_1 = arith.constant 0 : i32
    %c0_i32_2 = arith.constant 0 : i32
    return %c0_i32, %c0_i32_0, %c0_i32_1 : i32, i32, i32
  }
  func.func @transform_13(%arg0: i32) -> (i32, i32, i32) {
    %c0_i32 = arith.constant 0 : i32
    %c0_i32_0 = arith.constant 0 : i32
    %c0_i32_1 = arith.constant 0 : i32
    %c0_i32_2 = arith.constant 0 : i32
    return %c0_i32, %c0_i32_0, %c0_i32_1 : i32, i32, i32
  }
  func.func @transform_14(%arg0: i32) -> (i32, i32, i32) {
    %c0_i32 = arith.constant 0 : i32
    %c0_i32_0 = arith.constant 0 : i32
    %c0_i32_1 = arith.constant 0 : i32
    %c0_i32_2 = arith.constant 0 : i32
    return %c0_i32, %c0_i32_0, %c0_i32_1 : i32, i32, i32
  }
  func.func @transform_15(%arg0: i32) -> (i32, i32) {
    %c0_i32 = arith.constant 0 : i32
    %c0_i32_0 = arith.constant 0 : i32
    %c0_i32_1 = arith.constant 0 : i32
    return %c0_i32, %c0_i32_0 : i32, i32
  }
  func.func @transform_16(%arg0: i32) -> (i32, i32) {
    %c0_i32 = arith.constant 0 : i32
    %c0_i32_0 = arith.constant 0 : i32
    %c0_i32_1 = arith.constant 0 : i32
    return %c0_i32, %c0_i32_0 : i32, i32
  }
  func.func @transform_17(%arg0: i32) -> (i32, i32) {
    %c0_i32 = arith.constant 0 : i32
    %c0_i32_0 = arith.constant 0 : i32
    %c0_i32_1 = arith.constant 0 : i32
    return %c0_i32, %c0_i32_0 : i32, i32
  }
  func.func @transform_18(%arg0: i32) -> (i32, i32) {
    %c0_i32 = arith.constant 0 : i32
    %c0_i32_0 = arith.constant 0 : i32
    %c0_i32_1 = arith.constant 0 : i32
    return %c0_i32, %c0_i32_0 : i32, i32
  }
  func.func @transform_19(%arg0: i32) -> (i32, i32) {
    %c0_i32 = arith.constant 0 : i32
    %c0_i32_0 = arith.constant 0 : i32
    %c0_i32_1 = arith.constant 0 : i32
    return %c0_i32, %c0_i32_0 : i32, i32
  }
  func.func @transform_20(%arg0: i32) -> (i32, i32) {
    %c0_i32 = arith.constant 0 : i32
    %c0_i32_0 = arith.constant 0 : i32
    %c0_i32_1 = arith.constant 0 : i32
    return %c0_i32, %c0_i32_0 : i32, i32
  }
  func.func @transform_21(%arg0: i32) -> (i32, i32) {
    %c0_i32 = arith.constant 0 : i32
    %c0_i32_0 = arith.constant 0 : i32
    return %arg0, %c0_i32 : i32, i32
  }
}

</mosaic_0001>

<llo_original>
// kernel: tpu_custom_call.1
$region0: #{tpu_custom_call.1}
  #allocation0 [shape = 'u32[]', space=smem, size = 0x4, offset = 0x4, fixed_abs, tag = 'smem constant byte address 0x4 - core index']
  #allocation1 [shape = 'u32[144,128]{1,0:T(1,128)}', space=vmem, size = 0x12000, scoped, tag = 'internal scratch']
  #allocation2 [shape = 'f32[1,1]{1,0:T(1,128)S(1)}', space=vmem, size = 0x200, scoped, tag = 'scoped memory for tpu_custom_call.1']
  %s0 = inlined_call_operand.vmem [shape: f32[2,16,2], index: 0, kind: input, shape index: {}]
  %s1 = inlined_call_operand.hbm [shape: f32[2,32], index: 1, kind: input, shape index: {}]
  %s2 = inlined_call_operand.hbm [shape: f32[2,32], index: 2, kind: input, shape index: {}]
  %s3 = inlined_call_operand.hbm [shape: f32[2,32], index: 3, kind: input, shape index: {}]
  %s4 = inlined_call_operand.hbm [shape: f32[1,32], index: 4, kind: input, shape index: {}]
  %s5 = inlined_call_operand.vmem [shape: f32[2,32,96], index: 5, kind: input, shape index: {}]
  %s6 = inlined_call_operand.vmem [shape: f32[2,32,32], index: 6, kind: input, shape index: {}]
  %s7 = inlined_call_operand.hbm [shape: f32[2,1,32], index: 7, kind: input, shape index: {}]
  %s8 = inlined_call_operand.hbm [shape: f32[2,1,32], index: 8, kind: input, shape index: {}]
  %s9 = inlined_call_operand.vmem [shape: f32[2,32,64], index: 9, kind: input, shape index: {}]
  %s10 = inlined_call_operand.hbm [shape: f32[2,1,64], index: 10, kind: input, shape index: {}]
  %s11 = inlined_call_operand.vmem [shape: f32[2,64,32], index: 11, kind: input, shape index: {}]
  %s12 = inlined_call_operand.hbm [shape: f32[2,1,32], index: 12, kind: input, shape index: {}]
  %s13 = inlined_call_operand.hbm [shape: f32[2,1,32], index: 13, kind: input, shape index: {}]
  %s14 = inlined_call_operand.hbm [shape: f32[2,1,32], index: 14, kind: input, shape index: {}]
  %s15 = inlined_call_operand.vmem [shape: f32[32,64], index: 15, kind: input, shape index: {}]
  %s16 = inlined_call_operand.vmem [shape: f32[32,64], index: 16, kind: input, shape index: {}]
  %s17 = inlined_call_operand.vmem [shape: f32[32,64], index: 17, kind: input, shape index: {}]
  %s18 = inlined_call_operand.vmem [shape: f32[1,64], index: 18, kind: input, shape index: {}]
  %s19 = inlined_call_operand.vmem [shape: f32[64,1], index: 19, kind: input, shape index: {}]
  %s20 = inlined_call_operand.<no memory space> [shape: f32[1,1], index: 20, kind: input, shape index: {}]
  %s21 = inlined_call_operand.vmem [shape: f32[2,1], index: 21, kind: output, shape index: {}]
  %s22 = sld [smem:[#allocation0]]
  $region134: #{tpu_custom_call.1} parent=0
    _
  %s24 = ssub.s32 1, %s22
  %s25 = scalar_select 0, %s24, %s22
  %v26 = vstv %s20
  %27 = vst [vmem:[#allocation2] sm:$0x1] %v26
  $region1: #{tpu_custom_call.1} parent=0
    #allocation3 [shape = 'u8[1024]{0}', space=vmem, size = 0x400, scoped, tag = 'input window, operand 1, single buffered']
    #allocation4 [shape = 's32[1]{0}', space=sflag, size = 0x4, scoped, tag = 'scoped memory for tpu_custom_call.1']
    #allocation5 [shape = 'u8[1024]{0}', space=vmem, size = 0x400, scoped, tag = 'input window, operand 2, single buffered']
    #allocation6 [shape = 's32[1]{0}', space=sflag, size = 0x4, scoped, tag = 'scoped memory for tpu_custom_call.1']
    #allocation7 [shape = 'u8[1024]{0}', space=vmem, size = 0x400, scoped, tag = 'input window, operand 3, single buffered']
    #allocation8 [shape = 'u8[512]{0}', space=vmem, size = 0x400, scoped, tag = 'input window, operand 4, single buffered']
    #allocation9 [shape = 's32[1]{0}', space=sflag, size = 0x4, scoped, tag = 'scoped memory for tpu_custom_call.1']
    #allocation10 [shape = 'u8[1024]{0}', space=vmem, size = 0x400, scoped, tag = 'input window, operand 7, single buffered']
    #allocation11 [shape = 'u8[1024]{0}', space=vmem, size = 0x400, scoped, tag = 'input window, operand 8, single buffered']
    #allocation12 [shape = 's32[1]{0}', space=sflag, size = 0x4, scoped, tag = 'scoped memory for tpu_custom_call.1']
    #allocation13 [shape = 'u8[1024]{0}', space=vmem, size = 0x400, scoped, tag = 'input window, operand 10, single buffered']
    #allocation14 [shape = 'u8[1024]{0}', space=vmem, size = 0x400, scoped, tag = 'input window, operand 12, single buffered']
    #allocation15 [shape = 's32[1]{0}', space=sflag, size = 0x4, scoped, tag = 'scoped memory for tpu_custom_call.1']
    #allocation16 [shape = 'u8[1024]{0}', space=vmem, size = 0x400, scoped, tag = 'input window, operand 13, single buffered']
    #allocation17 [shape = 'u8[1024]{0}', space=vmem, size = 0x400, scoped, tag = 'input window, operand 14, single buffered']
    #allocation18 [shape = 's32[1]{0}', space=sflag, size = 0x4, scoped, tag = 'scoped memory for tpu_custom_call.1']
    %28 = vsyncpa [#allocation4], 0
    %29 = vsyncpa [#allocation6], 0
    %30 = vsyncpa [#allocation9], 0
    %31 = vsyncpa [#allocation12], 0
    %32 = vsyncpa [#allocation15], 0
    %33 = vsyncpa [#allocation18], 0
    // Predicated region
    $region2: #{tpu_custom_call.1} parent=1 // pred_check
      _
    $region3: #{tpu_custom_call.1} parent=1 // pred_check_branch
      %35 = sbr.rel (0) target = $region5
    $region4: #{tpu_custom_call.1} parent=1 // pred_region
      _
    $region5: #{tpu_custom_call.1} parent=1 // pred_fallthru
      _
    // Predicated region
    $region6: #{tpu_custom_call.1} parent=1 // pred_check
      _
    $region7: #{tpu_custom_call.1} parent=1 // pred_check_branch
      %37 = sbr.rel (0) target = $region9
    $region8: #{tpu_custom_call.1} parent=1 // pred_region
      %s39 = ssub.s32 32, 32
      %40 = vsyncadd [#allocation4], %s39
      %s42 = sshll.u32 [#allocation3], 4
      %s43 = int_to_ptr.vmem [resolvable:$true] %s42
      %45 = dma.hbm_to_vmem [thread:$0]  %s1, 32, %s43, [#allocation4]
    $region9: #{tpu_custom_call.1} parent=1 // pred_fallthru
      _
    // Predicated region
    $region10: #{tpu_custom_call.1} parent=1 // pred_check
      _
    $region11: #{tpu_custom_call.1} parent=1 // pred_check_branch
      %47 = sbr.rel (0) target = $region13
    $region12: #{tpu_custom_call.1} parent=1 // pred_region
      %s49 = ssub.s32 32, 32
      %50 = vsyncadd [#allocation6], %s49
      %s52 = sshll.u32 [#allocation5], 4
      %s53 = int_to_ptr.vmem [resolvable:$true] %s52
      %55 = dma.hbm_to_vmem [thread:$0]  %s2, 32, %s53, [#allocation6]
    $region13: #{tpu_custom_call.1} parent=1 // pred_fallthru
      _
    // Predicated region
    $region14: #{tpu_custom_call.1} parent=1 // pred_check
      _
    $region15: #{tpu_custom_call.1} parent=1 // pred_check_branch
      %57 = sbr.rel (0) target = $region17
    $region16: #{tpu_custom_call.1} parent=1 // pred_region
      %s59 = ssub.s32 32, 32
      %60 = vsyncadd [#allocation6], %s59
      %s62 = sshll.u32 [#allocation7], 4
      %s63 = int_to_ptr.vmem [resolvable:$true] %s62
      %65 = dma.hbm_to_vmem [thread:$0]  %s3, 32, %s63, [#allocation6]
    $region17: #{tpu_custom_call.1} parent=1 // pred_fallthru
      _
    // Predicated region
    $region18: #{tpu_custom_call.1} parent=1 // pred_check
      _
    $region19: #{tpu_custom_call.1} parent=1 // pred_check_branch
      %67 = sbr.rel (0) target = $region21
    $region20: #{tpu_custom_call.1} parent=1 // pred_region
      %s69 = ssub.s32 16, 16
      %70 = vsyncadd [#allocation9], %s69
      %s72 = sshll.u32 [#allocation8], 4
      %s73 = int_to_ptr.vmem [resolvable:$true] %s72
      %75 = dma.hbm_to_vmem [thread:$0]  %s4, 16, %s73, [#allocation9]
    $region21: #{tpu_custom_call.1} parent=1 // pred_fallthru
      _
    // Predicated region
    $region22: #{tpu_custom_call.1} parent=1 // pred_check
      _
    $region23: #{tpu_custom_call.1} parent=1 // pred_check_branch
      %77 = sbr.rel (0) target = $region25
    $region24: #{tpu_custom_call.1} parent=1 // pred_region
      _
    $region25: #{tpu_custom_call.1} parent=1 // pred_fallthru
      _
    // Predicated region
    $region26: #{tpu_custom_call.1} parent=1 // pred_check
      _
    $region27: #{tpu_custom_call.1} parent=1 // pred_check_branch
      %79 = sbr.rel (0) target = $region29
    $region28: #{tpu_custom_call.1} parent=1 // pred_region
      _
    $region29: #{tpu_custom_call.1} parent=1 // pred_fallthru
      _
    // Predicated region
    $region30: #{tpu_custom_call.1} parent=1 // pred_check
      _
    $region31: #{tpu_custom_call.1} parent=1 // pred_check_branch
      %81 = sbr.rel (0) target = $region33
    $region32: #{tpu_custom_call.1} parent=1 // pred_region
      %s83 = ssub.s32 32, 32
      %84 = vsyncadd [#allocation9], %s83
      %s85 = sshll.u32 [#allocation10], 4
      %s86 = int_to_ptr.vmem [resolvable:$true] %s85
      %91 = dma.hbm_to_vmem [thread:$0]  %s7, 32, %s86, [#allocation9], 16, 16, 1
    $region33: #{tpu_custom_call.1} parent=1 // pred_fallthru
      _
    // Predicated region
    $region34: #{tpu_custom_call.1} parent=1 // pred_check
      _
    $region35: #{tpu_custom_call.1} parent=1 // pred_check_branch
      %93 = sbr.rel (0) target = $region37
    $region36: #{tpu_custom_call.1} parent=1 // pred_region
      %s95 = ssub.s32 32, 32
      %96 = vsyncadd [#allocation12], %s95
      %s97 = sshll.u32 [#allocation11], 4
      %s98 = int_to_ptr.vmem [resolvable:$true] %s97
      %103 = dma.hbm_to_vmem [thread:$0]  %s8, 32, %s98, [#allocation12], 16, 16, 1
    $region37: #{tpu_custom_call.1} parent=1 // pred_fallthru
      _
    // Predicated region
    $region38: #{tpu_custom_call.1} parent=1 // pred_check
      _
    $region39: #{tpu_custom_call.1} parent=1 // pred_check_branch
      %105 = sbr.rel (0) target = $region41
    $region40: #{tpu_custom_call.1} parent=1 // pred_region
      _
    $region41: #{tpu_custom_call.1} parent=1 // pred_fallthru
      _
    // Predicated region
    $region42: #{tpu_custom_call.1} parent=1 // pred_check
      _
    $region43: #{tpu_custom_call.1} parent=1 // pred_check_branch
      %107 = sbr.rel (0) target = $region45
    $region44: #{tpu_custom_call.1} parent=1 // pred_region
      %s109 = ssub.s32 32, 32
      %110 = vsyncadd [#allocation12], %s109
      %s111 = sshll.u32 [#allocation13], 4
      %s112 = int_to_ptr.vmem [resolvable:$true] %s111
      %117 = dma.hbm_to_vmem [thread:$0]  %s10, 32, %s112, [#allocation12], 16, 16, 1
    $region45: #{tpu_custom_call.1} parent=1 // pred_fallthru
      _
    // Predicated region
    $region46: #{tpu_custom_call.1} parent=1 // pred_check
      _
    $region47: #{tpu_custom_call.1} parent=1 // pred_check_branch
      %119 = sbr.rel (0) target = $region49
    $region48: #{tpu_custom_call.1} parent=1 // pred_region
      _
    $region49: #{tpu_custom_call.1} parent=1 // pred_fallthru
      _
    // Predicated region
    $region50: #{tpu_custom_call.1} parent=1 // pred_check
      _
    $region51: #{tpu_custom_call.1} parent=1 // pred_check_branch
      %121 = sbr.rel (0) target = $region53
    $region52: #{tpu_custom_call.1} parent=1 // pred_region
      %s123 = ssub.s32 32, 32
      %124 = vsyncadd [#allocation15], %s123
      %s125 = sshll.u32 [#allocation14], 4
      %s126 = int_to_ptr.vmem [resolvable:$true] %s125
      %131 = dma.hbm_to_vmem [thread:$0]  %s12, 32, %s126, [#allocation15], 16, 16, 1
    $region53: #{tpu_custom_call.1} parent=1 // pred_fallthru
      _
    // Predicated region
    $region54: #{tpu_custom_call.1} parent=1 // pred_check
      _
    $region55: #{tpu_custom_call.1} parent=1 // pred_check_branch
      %133 = sbr.rel (0) target = $region57
    $region56: #{tpu_custom_call.1} parent=1 // pred_region
      %s135 = ssub.s32 32, 32
      %136 = vsyncadd [#allocation15], %s135
      %s137 = sshll.u32 [#allocation16], 4
      %s138 = int_to_ptr.vmem [resolvable:$true] %s137
      %143 = dma.hbm_to_vmem [thread:$0]  %s13, 32, %s138, [#allocation15], 16, 16, 1
    $region57: #{tpu_custom_call.1} parent=1 // pred_fallthru
      _
    // Predicated region
    $region58: #{tpu_custom_call.1} parent=1 // pred_check
      _
    $region59: #{tpu_custom_call.1} parent=1 // pred_check_branch
      %145 = sbr.rel (0) target = $region61
    $region60: #{tpu_custom_call.1} parent=1 // pred_region
      %s147 = ssub.s32 32, 32
      %148 = vsyncadd [#allocation18], %s147
      %s149 = sshll.u32 [#allocation17], 4
      %s150 = int_to_ptr.vmem [resolvable:$true] %s149
      %155 = dma.hbm_to_vmem [thread:$0]  %s14, 32, %s150, [#allocation18], 16, 16, 1
    $region61: #{tpu_custom_call.1} parent=1 // pred_fallthru
      _
    // Predicated region
    $region62: #{tpu_custom_call.1} parent=1 // pred_check
      _
    $region63: #{tpu_custom_call.1} parent=1 // pred_check_branch
      %157 = sbr.rel (0) target = $region65
    $region64: #{tpu_custom_call.1} parent=1 // pred_region
      _
    $region65: #{tpu_custom_call.1} parent=1 // pred_fallthru
      _
    // Predicated region
    $region66: #{tpu_custom_call.1} parent=1 // pred_check
      _
    $region67: #{tpu_custom_call.1} parent=1 // pred_check_branch
      %159 = sbr.rel (0) target = $region69
    $region68: #{tpu_custom_call.1} parent=1 // pred_region
      _
    $region69: #{tpu_custom_call.1} parent=1 // pred_fallthru
      _
    // Predicated region
    $region70: #{tpu_custom_call.1} parent=1 // pred_check
      _
    $region71: #{tpu_custom_call.1} parent=1 // pred_check_branch
      %161 = sbr.rel (0) target = $region73
    $region72: #{tpu_custom_call.1} parent=1 // pred_region
      _
    $region73: #{tpu_custom_call.1} parent=1 // pred_fallthru
      _
    // Predicated region
    $region74: #{tpu_custom_call.1} parent=1 // pred_check
      _
    $region75: #{tpu_custom_call.1} parent=1 // pred_check_branch
      %163 = sbr.rel (0) target = $region77
    $region76: #{tpu_custom_call.1} parent=1 // pred_region
      _
    $region77: #{tpu_custom_call.1} parent=1 // pred_fallthru
      _
    // Predicated region
    $region78: #{tpu_custom_call.1} parent=1 // pred_check
      _
    $region79: #{tpu_custom_call.1} parent=1 // pred_check_branch
      %165 = sbr.rel (0) target = $region81
    $region80: #{tpu_custom_call.1} parent=1 // pred_region
      _
    $region81: #{tpu_custom_call.1} parent=1 // pred_fallthru
      _
    // Predicated region
    $region82: #{tpu_custom_call.1} parent=1 // pred_check
      _
    $region83: #{tpu_custom_call.1} parent=1 // pred_check_branch
      %167 = sbr.rel (0) target = $region85
    $region84: #{tpu_custom_call.1} parent=1 // pred_region
      _
    $region85: #{tpu_custom_call.1} parent=1 // pred_fallthru
      _
    // Predicated region
    $region86: #{tpu_custom_call.1} parent=1 // pred_check
      _
    $region87: #{tpu_custom_call.1} parent=1 // pred_check_branch
      %169 = sbr.rel (0) target = $region89
    $region88: #{tpu_custom_call.1} parent=1 // pred_region
      %170 = dma.done [#allocation4], 32
    $region89: #{tpu_custom_call.1} parent=1 // pred_fallthru
      _
    // Predicated region
    $region90: #{tpu_custom_call.1} parent=1 // pred_check
      _
    $region91: #{tpu_custom_call.1} parent=1 // pred_check_branch
      %172 = sbr.rel (0) target = $region93
    $region92: #{tpu_custom_call.1} parent=1 // pred_region
      %173 = dma.done [#allocation6], 32
    $region93: #{tpu_custom_call.1} parent=1 // pred_fallthru
      _
    // Predicated region
    $region94: #{tpu_custom_call.1} parent=1 // pred_check
      _
    $region95: #{tpu_custom_call.1} parent=1 // pred_check_branch
      %175 = sbr.rel (0) target = $region97
    $region96: #{tpu_custom_call.1} parent=1 // pred_region
      %176 = dma.done [#allocation6], 32
    $region97: #{tpu_custom_call.1} parent=1 // pred_fallthru
      _
    // Predicated region
    $region98: #{tpu_custom_call.1} parent=1 // pred_check
      _
    $region99: #{tpu_custom_call.1} parent=1 // pred_check_branch
      %178 = sbr.rel (0) target = $region101
    $region100: #{tpu_custom_call.1} parent=1 // pred_region
      %179 = dma.done [#allocation9], 16
    $region101: #{tpu_custom_call.1} parent=1 // pred_fallthru
      _
    // Predicated region
    $region102: #{tpu_custom_call.1} parent=1 // pred_check
      _
    $region103: #{tpu_custom_call.1} parent=1 // pred_check_branch
      %181 = sbr.rel (0) target = $region105
    $region104: #{tpu_custom_call.1} parent=1 // pred_region
      %182 = dma.done [#allocation9], 32
    $region105: #{tpu_custom_call.1} parent=1 // pred_fallthru
      _
    // Predicated region
    $region106: #{tpu_custom_call.1} parent=1 // pred_check
      _
    $region107: #{tpu_custom_call.1} parent=1 // pred_check_branch
      %184 = sbr.rel (0) target = $region109
    $region108: #{tpu_custom_call.1} parent=1 // pred_region
      %185 = dma.done [#allocation12], 32
    $region109: #{tpu_custom_call.1} parent=1 // pred_fallthru
      _
    // Predicated region
    $region110: #{tpu_custom_call.1} parent=1 // pred_check
      _
    $region111: #{tpu_custom_call.1} parent=1 // pred_check_branch
      %187 = sbr.rel (0) target = $region113
    $region112: #{tpu_custom_call.1} parent=1 // pred_region
      %188 = dma.done [#allocation12], 32
    $region113: #{tpu_custom_call.1} parent=1 // pred_fallthru
      _
    // Predicated region
    $region114: #{tpu_custom_call.1} parent=1 // pred_check
      _
    $region115: #{tpu_custom_call.1} parent=1 // pred_check_branch
      %190 = sbr.rel (0) target = $region117
    $region116: #{tpu_custom_call.1} parent=1 // pred_region
      %191 = dma.done [#allocation15], 32
    $region117: #{tpu_custom_call.1} parent=1 // pred_fallthru
      _
    // Predicated region
    $region118: #{tpu_custom_call.1} parent=1 // pred_check
      _
    $region119: #{tpu_custom_call.1} parent=1 // pred_check_branch
      %193 = sbr.rel (0) target = $region121
    $region120: #{tpu_custom_call.1} parent=1 // pred_region
      %194 = dma.done [#allocation15], 32
    $region121: #{tpu_custom_call.1} parent=1 // pred_fallthru
      _
    // Predicated region
    $region122: #{tpu_custom_call.1} parent=1 // pred_check
      _
    $region123: #{tpu_custom_call.1} parent=1 // pred_check_branch
      %196 = sbr.rel (0) target = $region125
    $region124: #{tpu_custom_call.1} parent=1 // pred_region
      %197 = dma.done [#allocation18], 32
    $region125: #{tpu_custom_call.1} parent=1 // pred_fallthru
      _
    %v198 = vld [vmem:[%s0] sm:$0xff]
    %v199 = vld [vmem:[%s0 + $0x8] sm:$0xff]
    %v200 = vld [vmem:[%s0 + $0x10] sm:$0xff]
    %v201 = vld [vmem:[%s0 + $0x18] sm:$0xff]
    %v202 = vld [vmem:[#allocation7] sm:$0x3]
    %v203 = vld [vmem:[#allocation8] sm:$0x1]
    %v205 = vlaneseq
    %v206 = vshrl.u32 %v205, 7
    %v207 = vsub.s32 0, %v206
    %v208 = vrot.slane %v203, %v207
    %vm210 = vcmask 15360
    %v212 = vsel %vm210, %v198, 0
    %v215 = vsel %vm210, %v199, 0
    %v218 = vsel %vm210, %v200, 0
    %v221 = vsel %vm210, %v201, 0
    %vm223 = vcmask 1041408
    %v225 = vsel %vm223, %v202, 0
    %227 = vmatprep.subr.mxu0 0.0
    %228 = vmatpush1.msra.mxu0 %v225
    %229 = vmatprep.subr.mxu0 0.0
    %230 = vmatpush1.msra.mxu0 0.0
    %231 = vmatprep.subr.mxu0 0.0
    %232 = vmatpush1.msra.mxu0 0.0
    %233 = vmatprep.subr.mxu0 0.0
    %234 = vmatpush1.msra.mxu0 0.0
    %235 = vmatprep.subr.mxu0 0.0
    %236 = vmatpush1.msra.mxu0 0.0
    %237 = vmatprep.subr.mxu0 0.0
    %238 = vmatpush1.msra.mxu0 0.0
    %239 = vmatprep.subr.mxu0 0.0
    %240 = vmatpush1.msra.mxu0 0.0
    %241 = vmatprep.subr.mxu0 0.0
    %242 = vmatpush1.msra.mxu0 0.0
    %243 = vmatprep.subr.mxu0 0.0
    %244 = vmatpush1.msra.mxu0 0.0
    %245 = vmatprep.subr.mxu0 0.0
    %246 = vmatpush1.msra.mxu0 0.0
    %247 = vmatprep.subr.mxu0 0.0
    %248 = vmatpush1.msra.mxu0 0.0
    %249 = vmatprep.subr.mxu0 0.0
    %250 = vmatpush1.msra.mxu0 0.0
    %251 = vmatprep.subr.mxu0 0.0
    %252 = vmatpush1.msra.mxu0 0.0
    %253 = vmatprep.subr.mxu0 0.0
    %254 = vmatpush1.msra.mxu0 0.0
    %255 = vmatprep.subr.mxu0 0.0
    %256 = vmatpush1.msra.mxu0 0.0
    %257 = vmatprep.subr.mxu0 0.0
    %258 = vmatpush1.msra.mxu0 0.0
    %259 = vmatprep.subr.mxu0 0.0
    %260 = vmatpush1.msra.mxu0 0.0
    %261 = vmatprep.subr.mxu0 0.0
    %262 = vmatpush1.msra.mxu0 0.0
    %263 = vmatprep.subr.mxu0 0.0
    %264 = vmatpush1.msra.mxu0 0.0
    %265 = vmatprep.subr.mxu0 0.0
    %266 = vmatpush1.msra.mxu0 0.0
    %267 = vmatprep.subr.mxu0 0.0
    %268 = vmatpush1.msra.mxu0 0.0
    %269 = vmatprep.subr.mxu0 0.0
    %270 = vmatpush1.msra.mxu0 0.0
    %271 = vmatprep.subr.mxu0 0.0
    %272 = vmatpush1.msra.mxu0 0.0
    %273 = vmatprep.subr.mxu0 0.0
    %274 = vmatpush1.msra.mxu0 0.0
    %275 = vmatprep.subr.mxu0 0.0
    %276 = vmatpush1.msra.mxu0 0.0
    %277 = vmatprep.subr.mxu0 0.0
    %278 = vmatpush1.msra.mxu0 0.0
    %279 = vmatprep.subr.mxu0 0.0
    %280 = vmatpush1.msra.mxu0 0.0
    %281 = vmatprep.subr.mxu0 0.0
    %282 = vmatpush1.msra.mxu0 0.0
    %283 = vmatprep.subr.mxu0 0.0
    %284 = vmatpush1.msra.mxu0 0.0
    %285 = vmatprep.subr.mxu0 0.0
    %286 = vmatpush1.msra.mxu0 0.0
    %287 = vmatprep.subr.mxu0 0.0
    %288 = vmatpush1.msra.mxu0 0.0
    %289 = vmatprep.subr.mxu0 0.0
    %290 = vmatpush1.msra.mxu0 0.0
    %291 = vmatprep.mubr.f32.mxu0 0.0
    %292 = vmatmul.mubr.f32.gmra.mrb[0].mxu0 %v212
    %v293 = vpop.f32.mrb[0].mxu0
    %v294 = vadd.f32 %v208, %v293
    %v295 = vpop.f32.mrb[0].mxu0
    %296 = vmatprep.mubr.f32.mxu0 0.0
    %297 = vmatmul.mubr.f32.gmra.mrb[0].mxu0 %v215
    %v298 = vpop.f32.mrb[0].mxu0
    %v299 = vadd.f32 %v208, %v298
    %v300 = vpop.f32.mrb[0].mxu0
    %301 = vmatprep.mubr.f32.mxu0 0.0
    %302 = vmatmul.mubr.f32.gmra.mrb[0].mxu0 %v218
    %v303 = vpop.f32.mrb[0].mxu0
    %v304 = vadd.f32 %v208, %v303
    %v305 = vpop.f32.mrb[0].mxu0
    %306 = vmatprep.mubr.f32.mxu0 0.0
    %307 = vmatmul.mubr.f32.gmra.mrb[0].mxu0 %v221
    %v308 = vpop.f32.mrb[0].mxu0
    %v309 = vadd.f32 %v208, %v308
    %v310 = vpop.f32.mrb[0].mxu0
    %311 = vdwg.mxu0
    %v312 = vld [vmem:[%s5] sm:$0xff]
    %v313 = vld [vmem:[%s5 + $0x8] sm:$0xff]
    %v314 = vld [vmem:[%s5 + $0x10] sm:$0xff]
    %v315 = vld [vmem:[%s5 + $0x18] sm:$0xff]
    %vm316 = vcmask 261120
    %v318 = vsel %vm316, %v294, 0
    %v321 = vsel %vm316, %v299, 0
    %v324 = vsel %vm316, %v304, 0
    %v327 = vsel %vm316, %v309, 0
    %329 = vmatprep.subr.mxu0 0.0
    %330 = vmatpush1.msra.mxu0 %v312
    %331 = vmatprep.subr.mxu0 0.0
    %332 = vmatpush1.msra.mxu0 %v313
    %333 = vmatprep.subr.mxu0 0.0
    %334 = vmatpush1.msra.mxu0 %v314
    %335 = vmatprep.subr.mxu0 0.0
    %336 = vmatpush1.msra.mxu0 %v315
    %337 = vmatprep.subr.mxu0 0.0
    %338 = vmatpush1.msra.mxu0 0.0
    %339 = vmatprep.subr.mxu0 0.0
    %340 = vmatpush1.msra.mxu0 0.0
    %341 = vmatprep.subr.mxu0 0.0
    %342 = vmatpush1.msra.mxu0 0.0
    %343 = vmatprep.subr.mxu0 0.0
    %344 = vmatpush1.msra.mxu0 0.0
    %345 = vmatprep.subr.mxu0 0.0
    %346 = vmatpush1.msra.mxu0 0.0
    %347 = vmatprep.subr.mxu0 0.0
    %348 = vmatpush1.msra.mxu0 0.0
    %349 = vmatprep.subr.mxu0 0.0
    %350 = vmatpush1.msra.mxu0 0.0
    %351 = vmatprep.subr.mxu0 0.0
    %352 = vmatpush1.msra.mxu0 0.0
    %353 = vmatprep.subr.mxu0 0.0
    %354 = vmatpush1.msra.mxu0 0.0
    %355 = vmatprep.subr.mxu0 0.0
    %356 = vmatpush1.msra.mxu0 0.0
    %357 = vmatprep.subr.mxu0 0.0
    %358 = vmatpush1.msra.mxu0 0.0
    %359 = vmatprep.subr.mxu0 0.0
    %360 = vmatpush1.msra.mxu0 0.0
    %361 = vmatprep.subr.mxu0 0.0
    %362 = vmatpush1.msra.mxu0 0.0
    %363 = vmatprep.subr.mxu0 0.0
    %364 = vmatpush1.msra.mxu0 0.0
    %365 = vmatprep.subr.mxu0 0.0
    %366 = vmatpush1.msra.mxu0 0.0
    %367 = vmatprep.subr.mxu0 0.0
    %368 = vmatpush1.msra.mxu0 0.0
    %369 = vmatprep.subr.mxu0 0.0
    %370 = vmatpush1.msra.mxu0 0.0
    %371 = vmatprep.subr.mxu0 0.0
    %372 = vmatpush1.msra.mxu0 0.0
    %373 = vmatprep.subr.mxu0 0.0
    %374 = vmatpush1.msra.mxu0 0.0
    %375 = vmatprep.subr.mxu0 0.0
    %376 = vmatpush1.msra.mxu0 0.0
    %377 = vmatprep.subr.mxu0 0.0
    %378 = vmatpush1.msra.mxu0 0.0
    %379 = vmatprep.subr.mxu0 0.0
    %380 = vmatpush1.msra.mxu0 0.0
    %381 = vmatprep.subr.mxu0 0.0
    %382 = vmatpush1.msra.mxu0 0.0
    %383 = vmatprep.subr.mxu0 0.0
    %384 = vmatpush1.msra.mxu0 0.0
    %385 = vmatprep.subr.mxu0 0.0
    %386 = vmatpush1.msra.mxu0 0.0
    %387 = vmatprep.subr.mxu0 0.0
    %388 = vmatpush1.msra.mxu0 0.0
    %389 = vmatprep.subr.mxu0 0.0
    %390 = vmatpush1.msra.mxu0 0.0
    %391 = vmatprep.subr.mxu0 0.0
    %392 = vmatpush1.msra.mxu0 0.0
    %393 = vmatprep.mubr.f32.mxu0 0.0
    %394 = vmatmul.mubr.f32.gmra.mrb[0].mxu0 %v318
    %v395 = vpop.f32.mrb[0].mxu0
    %v396 = vadd.f32 0.0, %v395
    %v397 = vpop.f32.mrb[0].mxu0
    %398 = vmatprep.mubr.f32.mxu0 0.0
    %399 = vmatmul.mubr.f32.gmra.mrb[0].mxu0 %v321
    %v400 = vpop.f32.mrb[0].mxu0
    %v401 = vadd.f32 0.0, %v400
    %v402 = vpop.f32.mrb[0].mxu0
    %403 = vmatprep.mubr.f32.mxu0 0.0
    %404 = vmatmul.mubr.f32.gmra.mrb[0].mxu0 %v324
    %v405 = vpop.f32.mrb[0].mxu0
    %v406 = vadd.f32 0.0, %v405
    %v407 = vpop.f32.mrb[0].mxu0
    %408 = vmatprep.mubr.f32.mxu0 0.0
    %409 = vmatmul.mubr.f32.gmra.mrb[0].mxu0 %v327
    %v410 = vpop.f32.mrb[0].mxu0
    %v411 = vadd.f32 0.0, %v410
    %v412 = vpop.f32.mrb[0].mxu0
    %413 = vdwg.mxu0
    %416 = vrot.lane.b32.xlu0 %v396, 96
    %v417 = vpop.permute.xlu0 %416
    %418 = vrot.lane.b32.xlu0 %v401, 96
    %v419 = vpop.permute.xlu0 %418
    %vm420 = vcmask 64512
    %v421 = vsel %vm420, %v396, 0
    %v423 = vsel %vm420, %v401, 0
    %v425 = vsel %vm420, %v417, 0
    %v427 = vsel %vm420, %v419, 0
    %429 = vmatprep.subr.mxu0 0.0
    %430 = vmatpush1.xpose.msra.mxu0 %v425
    %431 = vmatprep.subr.mxu0 0.0
    %432 = vmatpush1.xpose.msra.mxu0 %v427
    %433 = vmatprep.subr.mxu0 0.0
    %434 = vmatpush1.xpose.msra.mxu0 0.0
    %435 = vmatprep.subr.mxu0 0.0
    %436 = vmatpush1.xpose.msra.mxu0 0.0
    %437 = vmatprep.subr.mxu0 0.0
    %438 = vmatpush1.xpose.msra.mxu0 0.0
    %439 = vmatprep.subr.mxu0 0.0
    %440 = vmatpush1.xpose.msra.mxu0 0.0
    %441 = vmatprep.subr.mxu0 0.0
    %442 = vmatpush1.xpose.msra.mxu0 0.0
    %443 = vmatprep.subr.mxu0 0.0
    %444 = vmatpush1.xpose.msra.mxu0 0.0
    %445 = vmatprep.subr.mxu0 0.0
    %446 = vmatpush1.xpose.msra.mxu0 0.0
    %447 = vmatprep.subr.mxu0 0.0
    %448 = vmatpush1.xpose.msra.mxu0 0.0
    %449 = vmatprep.subr.mxu0 0.0
    %450 = vmatpush1.xpose.msra.mxu0 0.0
    %451 = vmatprep.subr.mxu0 0.0
    %452 = vmatpush1.xpose.msra.mxu0 0.0
    %453 = vmatprep.subr.mxu0 0.0
    %454 = vmatpush1.xpose.msra.mxu0 0.0
    %455 = vmatprep.subr.mxu0 0.0
    %456 = vmatpush1.xpose.msra.mxu0 0.0
    %457 = vmatprep.subr.mxu0 0.0
    %458 = vmatpush1.xpose.msra.mxu0 0.0
    %459 = vmatprep.subr.mxu0 0.0
    %460 = vmatpush1.xpose.msra.mxu0 0.0
    %461 = vmatprep.subr.mxu0 0.0
    %462 = vmatpush1.xpose.msra.mxu0 0.0
    %463 = vmatprep.subr.mxu0 0.0
    %464 = vmatpush1.xpose.msra.mxu0 0.0
    %465 = vmatprep.subr.mxu0 0.0
    %466 = vmatpush1.xpose.msra.mxu0 0.0
    %467 = vmatprep.subr.mxu0 0.0
    %468 = vmatpush1.xpose.msra.mxu0 0.0
    %469 = vmatprep.subr.mxu0 0.0
    %470 = vmatpush1.xpose.msra.mxu0 0.0
    %471 = vmatprep.subr.mxu0 0.0
    %472 = vmatpush1.xpose.msra.mxu0 0.0
    %473 = vmatprep.subr.mxu0 0.0
    %474 = vmatpush1.xpose.msra.mxu0 0.0
    %475 = vmatprep.subr.mxu0 0.0
    %476 = vmatpush1.xpose.msra.mxu0 0.0
    %477 = vmatprep.subr.mxu0 0.0
    %478 = vmatpush1.xpose.msra.mxu0 0.0
    %479 = vmatprep.subr.mxu0 0.0
    %480 = vmatpush1.xpose.msra.mxu0 0.0
    %481 = vmatprep.subr.mxu0 0.0
    %482 = vmatpush1.xpose.msra.mxu0 0.0
    %483 = vmatprep.subr.mxu0 0.0
    %484 = vmatpush1.xpose.msra.mxu0 0.0
    %485 = vmatprep.subr.mxu0 0.0
    %486 = vmatpush1.xpose.msra.mxu0 0.0
    %487 = vmatprep.subr.mxu0 0.0
    %488 = vmatpush1.xpose.msra.mxu0 0.0
    %489 = vmatprep.subr.mxu0 0.0
    %490 = vmatpush1.xpose.msra.mxu0 0.0
    %491 = vmatprep.subr.mxu0 0.0
    %492 = vmatpush1.xpose.msra.mxu0 0.0
    %493 = vmatprep.mubr.f32.mxu0 0.0
    %494 = vmatmul.mubr.f32.gmra.mrb[0].mxu0 %v421
    %v495 = vpop.f32.mrb[0].mxu0
    %v496 = vadd.f32 0.0, %v495
    %v497 = vpop.f32.mrb[0].mxu0
    %498 = vmatprep.mubr.f32.mxu0 0.0
    %499 = vmatmul.mubr.f32.gmra.mrb[0].mxu0 %v423
    %v500 = vpop.f32.mrb[0].mxu0
    %v501 = vadd.f32 0.0, %v500
    %v502 = vpop.f32.mrb[0].mxu0
    %503 = vdwg.mxu0
    %506 = vrot.lane.b32.xlu0 %v406, 96
    %v507 = vpop.permute.xlu0 %506
    %508 = vrot.lane.b32.xlu0 %v411, 96
    %v509 = vpop.permute.xlu0 %508
    %v510 = vsel %vm420, %v406, 0
    %v512 = vsel %vm420, %v411, 0
    %v514 = vsel %vm420, %v507, 0
    %v516 = vsel %vm420, %v509, 0
    %518 = vmatprep.subr.mxu0 0.0
    %519 = vmatpush1.xpose.msra.mxu0 %v514
    %520 = vmatprep.subr.mxu0 0.0
    %521 = vmatpush1.xpose.msra.mxu0 %v516
    %522 = vmatprep.subr.mxu0 0.0
    %523 = vmatpush1.xpose.msra.mxu0 0.0
    %524 = vmatprep.subr.mxu0 0.0
    %525 = vmatpush1.xpose.msra.mxu0 0.0
    %526 = vmatprep.subr.mxu0 0.0
    %527 = vmatpush1.xpose.msra.mxu0 0.0
    %528 = vmatprep.subr.mxu0 0.0
    %529 = vmatpush1.xpose.msra.mxu0 0.0
    %530 = vmatprep.subr.mxu0 0.0
    %531 = vmatpush1.xpose.msra.mxu0 0.0
    %532 = vmatprep.subr.mxu0 0.0
    %533 = vmatpush1.xpose.msra.mxu0 0.0
    %534 = vmatprep.subr.mxu0 0.0
    %535 = vmatpush1.xpose.msra.mxu0 0.0
    %536 = vmatprep.subr.mxu0 0.0
    %537 = vmatpush1.xpose.msra.mxu0 0.0
    %538 = vmatprep.subr.mxu0 0.0
    %539 = vmatpush1.xpose.msra.mxu0 0.0
    %540 = vmatprep.subr.mxu0 0.0
    %541 = vmatpush1.xpose.msra.mxu0 0.0
    %542 = vmatprep.subr.mxu0 0.0
    %543 = vmatpush1.xpose.msra.mxu0 0.0
    %544 = vmatprep.subr.mxu0 0.0
    %545 = vmatpush1.xpose.msra.mxu0 0.0
    %546 = vmatprep.subr.mxu0 0.0
    %547 = vmatpush1.xpose.msra.mxu0 0.0
    %548 = vmatprep.subr.mxu0 0.0
    %549 = vmatpush1.xpose.msra.mxu0 0.0
    %550 = vmatprep.subr.mxu0 0.0
    %551 = vmatpush1.xpose.msra.mxu0 0.0
    %552 = vmatprep.subr.mxu0 0.0
    %553 = vmatpush1.xpose.msra.mxu0 0.0
    %554 = vmatprep.subr.mxu0 0.0
    %555 = vmatpush1.xpose.msra.mxu0 0.0
    %556 = vmatprep.subr.mxu0 0.0
    %557 = vmatpush1.xpose.msra.mxu0 0.0
    %558 = vmatprep.subr.mxu0 0.0
    %559 = vmatpush1.xpose.msra.mxu0 0.0
    %560 = vmatprep.subr.mxu0 0.0
    %561 = vmatpush1.xpose.msra.mxu0 0.0
    %562 = vmatprep.subr.mxu0 0.0
    %563 = vmatpush1.xpose.msra.mxu0 0.0
    %564 = vmatprep.subr.mxu0 0.0
    %565 = vmatpush1.xpose.msra.mxu0 0.0
    %566 = vmatprep.subr.mxu0 0.0
    %567 = vmatpush1.xpose.msra.mxu0 0.0
    %568 = vmatprep.subr.mxu0 0.0
    %569 = vmatpush1.xpose.msra.mxu0 0.0
    %570 = vmatprep.subr.mxu0 0.0
    %571 = vmatpush1.xpose.msra.mxu0 0.0
    %572 = vmatprep.subr.mxu0 0.0
    %573 = vmatpush1.xpose.msra.mxu0 0.0
    %574 = vmatprep.subr.mxu0 0.0
    %575 = vmatpush1.xpose.msra.mxu0 0.0
    %576 = vmatprep.subr.mxu0 0.0
    %577 = vmatpush1.xpose.msra.mxu0 0.0
    %578 = vmatprep.subr.mxu0 0.0
    %579 = vmatpush1.xpose.msra.mxu0 0.0
    %580 = vmatprep.subr.mxu0 0.0
    %581 = vmatpush1.xpose.msra.mxu0 0.0
    %582 = vmatprep.mubr.f32.mxu0 0.0
    %583 = vmatmul.mubr.f32.gmra.mrb[0].mxu0 %v510
    %v584 = vpop.f32.mrb[0].mxu0
    %v585 = vadd.f32 0.0, %v584
    %v586 = vpop.f32.mrb[0].mxu0
    %587 = vmatprep.mubr.f32.mxu0 0.0
    %588 = vmatmul.mubr.f32.gmra.mrb[0].mxu0 %v512
    %v589 = vpop.f32.mrb[0].mxu0
    %v590 = vadd.f32 0.0, %v589
    %v591 = vpop.f32.mrb[0].mxu0
    %592 = vdwg.mxu0
    %v593 = vmul.f32 %v496, 0.35355338
    %v594 = vmul.f32 %v501, 0.35355338
    %v595 = vmul.f32 %v585, 0.35355338
    %v596 = vmul.f32 %v590, 0.35355338
    %vm597 = vcmask 130048
    %v598 = vsel %vm597, %v593, -inf
    %599 = vmax.xlane.f32.xlu0 %v598
    %v600 = vpop.xlane.xlu0 %599
    %v601 = vsel %vm597, %v594, -inf
    %602 = vmax.xlane.f32.xlu0 %v601
    %v603 = vpop.xlane.xlu0 %602
    %v604 = vsel %vm597, %v595, -inf
    %605 = vmax.xlane.f32.xlu0 %v604
    %v606 = vpop.xlane.xlu0 %605
    %v607 = vsel %vm597, %v596, -inf
    %608 = vmax.xlane.f32.xlu0 %v607
    %v609 = vpop.xlane.xlu0 %608
    %v610 = vsub.f32 %v593, %v600
    %v611 = vsub.f32 %v594, %v603
    %v612 = vsub.f32 %v595, %v606
    %v613 = vsub.f32 %v596, %v609
    %v614 = vmul.f32 %v610, 1.442695
    %v615 = vpow.pop %v614
    %v616 = vmul.f32 %v611, 1.442695
    %v617 = vpow.pop %v616
    %v618 = vmul.f32 %v612, 1.442695
    %v619 = vpow.pop %v618
    %v620 = vmul.f32 %v613, 1.442695
    %v621 = vpow.pop %v620
    %v622 = vsel %vm597, %v615, 0.0
    %623 = vadd.xlane.f32.xlu0 %v622
    %v624 = vpop.xlane.xlu0 %623
    %v625 = vsel %vm597, %v617, 0.0
    %626 = vadd.xlane.f32.xlu0 %v625
    %v627 = vpop.xlane.xlu0 %626
    %v628 = vsel %vm597, %v619, 0.0
    %629 = vadd.xlane.f32.xlu0 %v628
    %v630 = vpop.xlane.xlu0 %629
    %v631 = vsel %vm597, %v621, 0.0
    %632 = vadd.xlane.f32.xlu0 %v631
    %v633 = vpop.xlane.xlu0 %632
    %v634 = vrcp.pop %v624
    %v635 = vrcp.pop %v627
    %v636 = vrcp.pop %v630
    %v637 = vrcp.pop %v633
    %v638 = vmul.f32 %v615, %v634
    %v639 = vmul.f32 %v617, %v635
    %v640 = vmul.f32 %v619, %v636
    %v641 = vmul.f32 %v621, %v637
    %642 = vrot.lane.b32.xlu0 %v396, 64
    %v643 = vpop.permute.xlu0 %642
    %644 = vrot.lane.b32.xlu0 %v401, 64
    %v645 = vpop.permute.xlu0 %644
    %v649 = vsel %vm597, %v638, 0
    %v652 = vsel %vm597, %v639, 0
    %654 = vmatprep.subr.mxu0 0.0
    %655 = vmatpush1.msra.mxu0 %v643
    %656 = vmatprep.subr.mxu0 0.0
    %657 = vmatpush1.msra.mxu0 %v645
    %658 = vmatprep.subr.mxu0 0.0
    %659 = vmatpush1.msra.mxu0 0.0
    %660 = vmatprep.subr.mxu0 0.0
    %661 = vmatpush1.msra.mxu0 0.0
    %662 = vmatprep.subr.mxu0 0.0
    %663 = vmatpush1.msra.mxu0 0.0
    %664 = vmatprep.subr.mxu0 0.0
    %665 = vmatpush1.msra.mxu0 0.0
    %666 = vmatprep.subr.mxu0 0.0
    %667 = vmatpush1.msra.mxu0 0.0
    %668 = vmatprep.subr.mxu0 0.0
    %669 = vmatpush1.msra.mxu0 0.0
    %670 = vmatprep.subr.mxu0 0.0
    %671 = vmatpush1.msra.mxu0 0.0
    %672 = vmatprep.subr.mxu0 0.0
    %673 = vmatpush1.msra.mxu0 0.0
    %674 = vmatprep.subr.mxu0 0.0
    %675 = vmatpush1.msra.mxu0 0.0
    %676 = vmatprep.subr.mxu0 0.0
    %677 = vmatpush1.msra.mxu0 0.0
    %678 = vmatprep.subr.mxu0 0.0
    %679 = vmatpush1.msra.mxu0 0.0
    %680 = vmatprep.subr.mxu0 0.0
    %681 = vmatpush1.msra.mxu0 0.0
    %682 = vmatprep.subr.mxu0 0.0
    %683 = vmatpush1.msra.mxu0 0.0
    %684 = vmatprep.subr.mxu0 0.0
    %685 = vmatpush1.msra.mxu0 0.0
    %686 = vmatprep.subr.mxu0 0.0
    %687 = vmatpush1.msra.mxu0 0.0
    %688 = vmatprep.subr.mxu0 0.0
    %689 = vmatpush1.msra.mxu0 0.0
    %690 = vmatprep.subr.mxu0 0.0
    %691 = vmatpush1.msra.mxu0 0.0
    %692 = vmatprep.subr.mxu0 0.0
    %693 = vmatpush1.msra.mxu0 0.0
    %694 = vmatprep.subr.mxu0 0.0
    %695 = vmatpush1.msra.mxu0 0.0
    %696 = vmatprep.subr.mxu0 0.0
    %697 = vmatpush1.msra.mxu0 0.0
    %698 = vmatprep.subr.mxu0 0.0
    %699 = vmatpush1.msra.mxu0 0.0
    %700 = vmatprep.subr.mxu0 0.0
    %701 = vmatpush1.msra.mxu0 0.0
    %702 = vmatprep.subr.mxu0 0.0
    %703 = vmatpush1.msra.mxu0 0.0
    %704 = vmatprep.subr.mxu0 0.0
    %705 = vmatpush1.msra.mxu0 0.0
    %706 = vmatprep.subr.mxu0 0.0
    %707 = vmatpush1.msra.mxu0 0.0
    %708 = vmatprep.subr.mxu0 0.0
    %709 = vmatpush1.msra.mxu0 0.0
    %710 = vmatprep.subr.mxu0 0.0
    %711 = vmatpush1.msra.mxu0 0.0
    %712 = vmatprep.subr.mxu0 0.0
    %713 = vmatpush1.msra.mxu0 0.0
    %714 = vmatprep.subr.mxu0 0.0
    %715 = vmatpush1.msra.mxu0 0.0
    %716 = vmatprep.subr.mxu0 0.0
    %717 = vmatpush1.msra.mxu0 0.0
    %718 = vmatprep.mubr.f32.mxu0 0.0
    %719 = vmatmul.mubr.f32.gmra.mrb[0].mxu0 %v649
    %v720 = vpop.f32.mrb[0].mxu0
    %v721 = vadd.f32 0.0, %v720
    %v722 = vpop.f32.mrb[0].mxu0
    %723 = vmatprep.mubr.f32.mxu0 0.0
    %724 = vmatmul.mubr.f32.gmra.mrb[0].mxu0 %v652
    %v725 = vpop.f32.mrb[0].mxu0
    %v726 = vadd.f32 0.0, %v725
    %v727 = vpop.f32.mrb[0].mxu0
    %728 = vdwg.mxu0
    %729 = vrot.lane.b32.xlu0 %v406, 64
    %v730 = vpop.permute.xlu0 %729
    %731 = vrot.lane.b32.xlu0 %v411, 64
    %v732 = vpop.permute.xlu0 %731
    %v736 = vsel %vm597, %v640, 0
    %v739 = vsel %vm597, %v641, 0
    %741 = vmatprep.subr.mxu0 0.0
    %742 = vmatpush1.msra.mxu0 %v730
    %743 = vmatprep.subr.mxu0 0.0
    %744 = vmatpush1.msra.mxu0 %v732
    %745 = vmatprep.subr.mxu0 0.0
    %746 = vmatpush1.msra.mxu0 0.0
    %747 = vmatprep.subr.mxu0 0.0
    %748 = vmatpush1.msra.mxu0 0.0
    %749 = vmatprep.subr.mxu0 0.0
    %750 = vmatpush1.msra.mxu0 0.0
    %751 = vmatprep.subr.mxu0 0.0
    %752 = vmatpush1.msra.mxu0 0.0
    %753 = vmatprep.subr.mxu0 0.0
    %754 = vmatpush1.msra.mxu0 0.0
    %755 = vmatprep.subr.mxu0 0.0
    %756 = vmatpush1.msra.mxu0 0.0
    %757 = vmatprep.subr.mxu0 0.0
    %758 = vmatpush1.msra.mxu0 0.0
    %759 = vmatprep.subr.mxu0 0.0
    %760 = vmatpush1.msra.mxu0 0.0
    %761 = vmatprep.subr.mxu0 0.0
    %762 = vmatpush1.msra.mxu0 0.0
    %763 = vmatprep.subr.mxu0 0.0
    %764 = vmatpush1.msra.mxu0 0.0
    %765 = vmatprep.subr.mxu0 0.0
    %766 = vmatpush1.msra.mxu0 0.0
    %767 = vmatprep.subr.mxu0 0.0
    %768 = vmatpush1.msra.mxu0 0.0
    %769 = vmatprep.subr.mxu0 0.0
    %770 = vmatpush1.msra.mxu0 0.0
    %771 = vmatprep.subr.mxu0 0.0
    %772 = vmatpush1.msra.mxu0 0.0
    %773 = vmatprep.subr.mxu0 0.0
    %774 = vmatpush1.msra.mxu0 0.0
    %775 = vmatprep.subr.mxu0 0.0
    %776 = vmatpush1.msra.mxu0 0.0
    %777 = vmatprep.subr.mxu0 0.0
    %778 = vmatpush1.msra.mxu0 0.0
    %779 = vmatprep.subr.mxu0 0.0
    %780 = vmatpush1.msra.mxu0 0.0
    %781 = vmatprep.subr.mxu0 0.0
    %782 = vmatpush1.msra.mxu0 0.0
    %783 = vmatprep.subr.mxu0 0.0
    %784 = vmatpush1.msra.mxu0 0.0
    %785 = vmatprep.subr.mxu0 0.0
    %786 = vmatpush1.msra.mxu0 0.0
    %787 = vmatprep.subr.mxu0 0.0
    %788 = vmatpush1.msra.mxu0 0.0
    %789 = vmatprep.subr.mxu0 0.0
    %790 = vmatpush1.msra.mxu0 0.0
    %791 = vmatprep.subr.mxu0 0.0
    %792 = vmatpush1.msra.mxu0 0.0
    %793 = vmatprep.subr.mxu0 0.0
    %794 = vmatpush1.msra.mxu0 0.0
    %795 = vmatprep.subr.mxu0 0.0
    %796 = vmatpush1.msra.mxu0 0.0
    %797 = vmatprep.subr.mxu0 0.0
    %798 = vmatpush1.msra.mxu0 0.0
    %799 = vmatprep.subr.mxu0 0.0
    %800 = vmatpush1.msra.mxu0 0.0
    %801 = vmatprep.subr.mxu0 0.0
    %802 = vmatpush1.msra.mxu0 0.0
    %803 = vmatprep.subr.mxu0 0.0
    %804 = vmatpush1.msra.mxu0 0.0
    %805 = vmatprep.mubr.f32.mxu0 0.0
    %806 = vmatmul.mubr.f32.gmra.mrb[0].mxu0 %v736
    %v807 = vpop.f32.mrb[0].mxu0
    %v808 = vadd.f32 0.0, %v807
    %v809 = vpop.f32.mrb[0].mxu0
    %810 = vmatprep.mubr.f32.mxu0 0.0
    %811 = vmatmul.mubr.f32.gmra.mrb[0].mxu0 %v739
    %v812 = vpop.f32.mrb[0].mxu0
    %v813 = vadd.f32 0.0, %v812
    %v814 = vpop.f32.mrb[0].mxu0
    %815 = vdwg.mxu0
    %816 = vrot.lane.b32.xlu0 %v396, 120
    %v817 = vpop.permute.xlu0 %816
    %818 = vrot.lane.b32.xlu0 %v401, 120
    %v819 = vpop.permute.xlu0 %818
    %820 = vrot.lane.b32.xlu0 %v396, 88
    %v821 = vpop.permute.xlu0 %820
    %822 = vrot.lane.b32.xlu0 %v401, 88
    %v823 = vpop.permute.xlu0 %822
    %v824 = vsel %vm420, %v817, 0
    %v826 = vsel %vm420, %v819, 0
    %v828 = vsel %vm420, %v821, 0
    %v830 = vsel %vm420, %v823, 0
    %832 = vmatprep.subr.mxu0 0.0
    %833 = vmatpush1.xpose.msra.mxu0 %v828
    %834 = vmatprep.subr.mxu0 0.0
    %835 = vmatpush1.xpose.msra.mxu0 %v830
    %836 = vmatprep.subr.mxu0 0.0
    %837 = vmatpush1.xpose.msra.mxu0 0.0
    %838 = vmatprep.subr.mxu0 0.0
    %839 = vmatpush1.xpose.msra.mxu0 0.0
    %840 = vmatprep.subr.mxu0 0.0
    %841 = vmatpush1.xpose.msra.mxu0 0.0
    %842 = vmatprep.subr.mxu0 0.0
    %843 = vmatpush1.xpose.msra.mxu0 0.0
    %844 = vmatprep.subr.mxu0 0.0
    %845 = vmatpush1.xpose.msra.mxu0 0.0
    %846 = vmatprep.subr.mxu0 0.0
    %847 = vmatpush1.xpose.msra.mxu0 0.0
    %848 = vmatprep.subr.mxu0 0.0
    %849 = vmatpush1.xpose.msra.mxu0 0.0
    %850 = vmatprep.subr.mxu0 0.0
    %851 = vmatpush1.xpose.msra.mxu0 0.0
    %852 = vmatprep.subr.mxu0 0.0
    %853 = vmatpush1.xpose.msra.mxu0 0.0
    %854 = vmatprep.subr.mxu0 0.0
    %855 = vmatpush1.xpose.msra.mxu0 0.0
    %856 = vmatprep.subr.mxu0 0.0
    %857 = vmatpush1.xpose.msra.mxu0 0.0
    %858 = vmatprep.subr.mxu0 0.0
    %859 = vmatpush1.xpose.msra.mxu0 0.0
    %860 = vmatprep.subr.mxu0 0.0
    %861 = vmatpush1.xpose.msra.mxu0 0.0
    %862 = vmatprep.subr.mxu0 0.0
    %863 = vmatpush1.xpose.msra.mxu0 0.0
    %864 = vmatprep.subr.mxu0 0.0
    %865 = vmatpush1.xpose.msra.mxu0 0.0
    %866 = vmatprep.subr.mxu0 0.0
    %867 = vmatpush1.xpose.msra.mxu0 0.0
    %868 = vmatprep.subr.mxu0 0.0
    %869 = vmatpush1.xpose.msra.mxu0 0.0
    %870 = vmatprep.subr.mxu0 0.0
    %871 = vmatpush1.xpose.msra.mxu0 0.0
    %872 = vmatprep.subr.mxu0 0.0
    %873 = vmatpush1.xpose.msra.mxu0 0.0
    %874 = vmatprep.subr.mxu0 0.0
    %875 = vmatpush1.xpose.msra.mxu0 0.0
    %876 = vmatprep.subr.mxu0 0.0
    %877 = vmatpush1.xpose.msra.mxu0 0.0
    %878 = vmatprep.subr.mxu0 0.0
    %879 = vmatpush1.xpose.msra.mxu0 0.0
    %880 = vmatprep.subr.mxu0 0.0
    %881 = vmatpush1.xpose.msra.mxu0 0.0
    %882 = vmatprep.subr.mxu0 0.0
    %883 = vmatpush1.xpose.msra.mxu0 0.0
    %884 = vmatprep.subr.mxu0 0.0
    %885 = vmatpush1.xpose.msra.mxu0 0.0
    %886 = vmatprep.subr.mxu0 0.0
    %887 = vmatpush1.xpose.msra.mxu0 0.0
    %888 = vmatprep.subr.mxu0 0.0
    %889 = vmatpush1.xpose.msra.mxu0 0.0
    %890 = vmatprep.subr.mxu0 0.0
    %891 = vmatpush1.xpose.msra.mxu0 0.0
    %892 = vmatprep.subr.mxu0 0.0
    %893 = vmatpush1.xpose.msra.mxu0 0.0
    %894 = vmatprep.subr.mxu0 0.0
    %895 = vmatpush1.xpose.msra.mxu0 0.0
    %896 = vmatprep.mubr.f32.mxu0 0.0
    %897 = vmatmul.mubr.f32.gmra.mrb[0].mxu0 %v824
    %v898 = vpop.f32.mrb[0].mxu0
    %v899 = vadd.f32 0.0, %v898
    %v900 = vpop.f32.mrb[0].mxu0
    %901 = vmatprep.mubr.f32.mxu0 0.0
    %902 = vmatmul.mubr.f32.gmra.mrb[0].mxu0 %v826
    %v903 = vpop.f32.mrb[0].mxu0
    %v904 = vadd.f32 0.0, %v903
    %v905 = vpop.f32.mrb[0].mxu0
    %906 = vdwg.mxu0
    %907 = vrot.lane.b32.xlu0 %v406, 120
    %v908 = vpop.permute.xlu0 %907
    %909 = vrot.lane.b32.xlu0 %v411, 120
    %v910 = vpop.permute.xlu0 %909
    %911 = vrot.lane.b32.xlu0 %v406, 88
    %v912 = vpop.permute.xlu0 %911
    %913 = vrot.lane.b32.xlu0 %v411, 88
    %v914 = vpop.permute.xlu0 %913
    %v915 = vsel %vm420, %v908, 0
    %v917 = vsel %vm420, %v910, 0
    %v919 = vsel %vm420, %v912, 0
    %v921 = vsel %vm420, %v914, 0
    %923 = vmatprep.subr.mxu0 0.0
    %924 = vmatpush1.xpose.msra.mxu0 %v919
    %925 = vmatprep.subr.mxu0 0.0
    %926 = vmatpush1.xpose.msra.mxu0 %v921
    %927 = vmatprep.subr.mxu0 0.0
    %928 = vmatpush1.xpose.msra.mxu0 0.0
    %929 = vmatprep.subr.mxu0 0.0
    %930 = vmatpush1.xpose.msra.mxu0 0.0
    %931 = vmatprep.subr.mxu0 0.0
    %932 = vmatpush1.xpose.msra.mxu0 0.0
    %933 = vmatprep.subr.mxu0 0.0
    %934 = vmatpush1.xpose.msra.mxu0 0.0
    %935 = vmatprep.subr.mxu0 0.0
    %936 = vmatpush1.xpose.msra.mxu0 0.0
    %937 = vmatprep.subr.mxu0 0.0
    %938 = vmatpush1.xpose.msra.mxu0 0.0
    %939 = vmatprep.subr.mxu0 0.0
    %940 = vmatpush1.xpose.msra.mxu0 0.0
    %941 = vmatprep.subr.mxu0 0.0
    %942 = vmatpush1.xpose.msra.mxu0 0.0
    %943 = vmatprep.subr.mxu0 0.0
    %944 = vmatpush1.xpose.msra.mxu0 0.0
    %945 = vmatprep.subr.mxu0 0.0
    %946 = vmatpush1.xpose.msra.mxu0 0.0
    %947 = vmatprep.subr.mxu0 0.0
    %948 = vmatpush1.xpose.msra.mxu0 0.0
    %949 = vmatprep.subr.mxu0 0.0
    %950 = vmatpush1.xpose.msra.mxu0 0.0
    %951 = vmatprep.subr.mxu0 0.0
    %952 = vmatpush1.xpose.msra.mxu0 0.0
    %953 = vmatprep.subr.mxu0 0.0
    %954 = vmatpush1.xpose.msra.mxu0 0.0
    %955 = vmatprep.subr.mxu0 0.0
    %956 = vmatpush1.xpose.msra.mxu0 0.0
    %957 = vmatprep.subr.mxu0 0.0
    %958 = vmatpush1.xpose.msra.mxu0 0.0
    %959 = vmatprep.subr.mxu0 0.0
    %960 = vmatpush1.xpose.msra.mxu0 0.0
    %961 = vmatprep.subr.mxu0 0.0
    %962 = vmatpush1.xpose.msra.mxu0 0.0
    %963 = vmatprep.subr.mxu0 0.0
    %964 = vmatpush1.xpose.msra.mxu0 0.0
    %965 = vmatprep.subr.mxu0 0.0
    %966 = vmatpush1.xpose.msra.mxu0 0.0
    %967 = vmatprep.subr.mxu0 0.0
    %968 = vmatpush1.xpose.msra.mxu0 0.0
    %969 = vmatprep.subr.mxu0 0.0
    %970 = vmatpush1.xpose.msra.mxu0 0.0
    %971 = vmatprep.subr.mxu0 0.0
    %972 = vmatpush1.xpose.msra.mxu0 0.0
    %973 = vmatprep.subr.mxu0 0.0
    %974 = vmatpush1.xpose.msra.mxu0 0.0
    %975 = vmatprep.subr.mxu0 0.0
    %976 = vmatpush1.xpose.msra.mxu0 0.0
    %977 = vmatprep.subr.mxu0 0.0
    %978 = vmatpush1.xpose.msra.mxu0 0.0
    %979 = vmatprep.subr.mxu0 0.0
    %980 = vmatpush1.xpose.msra.mxu0 0.0
    %981 = vmatprep.subr.mxu0 0.0
    %982 = vmatpush1.xpose.msra.mxu0 0.0
    %983 = vmatprep.subr.mxu0 0.0
    %984 = vmatpush1.xpose.msra.mxu0 0.0
    %985 = vmatprep.subr.mxu0 0.0
    %986 = vmatpush1.xpose.msra.mxu0 0.0
    %987 = vmatprep.mubr.f32.mxu0 0.0
    %988 = vmatmul.mubr.f32.gmra.mrb[0].mxu0 %v915
    %v989 = vpop.f32.mrb[0].mxu0
    %v990 = vadd.f32 0.0, %v989
    %v991 = vpop.f32.mrb[0].mxu0
    %992 = vmatprep.mubr.f32.mxu0 0.0
    %993 = vmatmul.mubr.f32.gmra.mrb[0].mxu0 %v917
    %v994 = vpop.f32.mrb[0].mxu0
    %v995 = vadd.f32 0.0, %v994
    %v996 = vpop.f32.mrb[0].mxu0
    %997 = vdwg.mxu0
    %v998 = vmul.f32 %v899, 0.35355338
    %v999 = vmul.f32 %v904, 0.35355338
    %v1000 = vmul.f32 %v990, 0.35355338
    %v1001 = vmul.f32 %v995, 0.35355338
    %v1002 = vsel %vm597, %v998, -inf
    %1003 = vmax.xlane.f32.xlu0 %v1002
    %v1004 = vpop.xlane.xlu0 %1003
    %v1005 = vsel %vm597, %v999, -inf
    %1006 = vmax.xlane.f32.xlu0 %v1005
    %v1007 = vpop.xlane.xlu0 %1006
    %v1008 = vsel %vm597, %v1000, -inf
    %1009 = vmax.xlane.f32.xlu0 %v1008
    %v1010 = vpop.xlane.xlu0 %1009
    %v1011 = vsel %vm597, %v1001, -inf
    %1012 = vmax.xlane.f32.xlu0 %v1011
    %v1013 = vpop.xlane.xlu0 %1012
    %v1014 = vsub.f32 %v998, %v1004
    %v1015 = vsub.f32 %v999, %v1007
    %v1016 = vsub.f32 %v1000, %v1010
    %v1017 = vsub.f32 %v1001, %v1013
    %v1018 = vmul.f32 %v1014, 1.442695
    %v1019 = vpow.pop %v1018
    %v1020 = vmul.f32 %v1015, 1.442695
    %v1021 = vpow.pop %v1020
    %v1022 = vmul.f32 %v1016, 1.442695
    %v1023 = vpow.pop %v1022
    %v1024 = vmul.f32 %v1017, 1.442695
    %v1025 = vpow.pop %v1024
    %v1026 = vsel %vm597, %v1019, 0.0
    %1027 = vadd.xlane.f32.xlu0 %v1026
    %v1028 = vpop.xlane.xlu0 %1027
    %v1029 = vsel %vm597, %v1021, 0.0
    %1030 = vadd.xlane.f32.xlu0 %v1029
    %v1031 = vpop.xlane.xlu0 %1030
    %v1032 = vsel %vm597, %v1023, 0.0
    %1033 = vadd.xlane.f32.xlu0 %v1032
    %v1034 = vpop.xlane.xlu0 %1033
    %v1035 = vsel %vm597, %v1025, 0.0
    %1036 = vadd.xlane.f32.xlu0 %v1035
    %v1037 = vpop.xlane.xlu0 %1036
    %v1038 = vrcp.pop %v1028
    %v1039 = vrcp.pop %v1031
    %v1040 = vrcp.pop %v1034
    %v1041 = vrcp.pop %v1037
    %v1042 = vmul.f32 %v1019, %v1038
    %v1043 = vmul.f32 %v1021, %v1039
    %v1044 = vmul.f32 %v1023, %v1040
    %v1045 = vmul.f32 %v1025, %v1041
    %1046 = vrot.lane.b32.xlu0 %v396, 56
    %v1047 = vpop.permute.xlu0 %1046
    %1048 = vrot.lane.b32.xlu0 %v401, 56
    %v1049 = vpop.permute.xlu0 %1048
    %v1053 = vsel %vm597, %v1042, 0
    %v1056 = vsel %vm597, %v1043, 0
    %1058 = vmatprep.subr.mxu0 0.0
    %1059 = vmatpush1.msra.mxu0 %v1047
    %1060 = vmatprep.subr.mxu0 0.0
    %1061 = vmatpush1.msra.mxu0 %v1049
    %1062 = vmatprep.subr.mxu0 0.0
    %1063 = vmatpush1.msra.mxu0 0.0
    %1064 = vmatprep.subr.mxu0 0.0
    %1065 = vmatpush1.msra.mxu0 0.0
    %1066 = vmatprep.subr.mxu0 0.0
    %1067 = vmatpush1.msra.mxu0 0.0
    %1068 = vmatprep.subr.mxu0 0.0
    %1069 = vmatpush1.msra.mxu0 0.0
    %1070 = vmatprep.subr.mxu0 0.0
    %1071 = vmatpush1.msra.mxu0 0.0
    %1072 = vmatprep.subr.mxu0 0.0
    %1073 = vmatpush1.msra.mxu0 0.0
    %1074 = vmatprep.subr.mxu0 0.0
    %1075 = vmatpush1.msra.mxu0 0.0
    %1076 = vmatprep.subr.mxu0 0.0
    %1077 = vmatpush1.msra.mxu0 0.0
    %1078 = vmatprep.subr.mxu0 0.0
    %1079 = vmatpush1.msra.mxu0 0.0
    %1080 = vmatprep.subr.mxu0 0.0
    %1081 = vmatpush1.msra.mxu0 0.0
    %1082 = vmatprep.subr.mxu0 0.0
    %1083 = vmatpush1.msra.mxu0 0.0
    %1084 = vmatprep.subr.mxu0 0.0
    %1085 = vmatpush1.msra.mxu0 0.0
    %1086 = vmatprep.subr.mxu0 0.0
    %1087 = vmatpush1.msra.mxu0 0.0
    %1088 = vmatprep.subr.mxu0 0.0
    %1089 = vmatpush1.msra.mxu0 0.0
    %1090 = vmatprep.subr.mxu0 0.0
    %1091 = vmatpush1.msra.mxu0 0.0
    %1092 = vmatprep.subr.mxu0 0.0
    %1093 = vmatpush1.msra.mxu0 0.0
    %1094 = vmatprep.subr.mxu0 0.0
    %1095 = vmatpush1.msra.mxu0 0.0
    %1096 = vmatprep.subr.mxu0 0.0
    %1097 = vmatpush1.msra.mxu0 0.0
    %1098 = vmatprep.subr.mxu0 0.0
    %1099 = vmatpush1.msra.mxu0 0.0
    %1100 = vmatprep.subr.mxu0 0.0
    %1101 = vmatpush1.msra.mxu0 0.0
    %1102 = vmatprep.subr.mxu0 0.0
    %1103 = vmatpush1.msra.mxu0 0.0
    %1104 = vmatprep.subr.mxu0 0.0
    %1105 = vmatpush1.msra.mxu0 0.0
    %1106 = vmatprep.subr.mxu0 0.0
    %1107 = vmatpush1.msra.mxu0 0.0
    %1108 = vmatprep.subr.mxu0 0.0
    %1109 = vmatpush1.msra.mxu0 0.0
    %1110 = vmatprep.subr.mxu0 0.0
    %1111 = vmatpush1.msra.mxu0 0.0
    %1112 = vmatprep.subr.mxu0 0.0
    %1113 = vmatpush1.msra.mxu0 0.0
    %1114 = vmatprep.subr.mxu0 0.0
    %1115 = vmatpush1.msra.mxu0 0.0
    %1116 = vmatprep.subr.mxu0 0.0
    %1117 = vmatpush1.msra.mxu0 0.0
    %1118 = vmatprep.subr.mxu0 0.0
    %1119 = vmatpush1.msra.mxu0 0.0
    %1120 = vmatprep.subr.mxu0 0.0
    %1121 = vmatpush1.msra.mxu0 0.0
    %1122 = vmatprep.mubr.f32.mxu0 0.0
    %1123 = vmatmul.mubr.f32.gmra.mrb[0].mxu0 %v1053
    %v1124 = vpop.f32.mrb[0].mxu0
    %v1125 = vadd.f32 0.0, %v1124
    %v1126 = vpop.f32.mrb[0].mxu0
    %1127 = vmatprep.mubr.f32.mxu0 0.0
    %1128 = vmatmul.mubr.f32.gmra.mrb[0].mxu0 %v1056
    %v1129 = vpop.f32.mrb[0].mxu0
    %v1130 = vadd.f32 0.0, %v1129
    %v1131 = vpop.f32.mrb[0].mxu0
    %1132 = vdwg.mxu0
    %1133 = vrot.lane.b32.xlu0 %v406, 56
    %v1134 = vpop.permute.xlu0 %1133
    %1135 = vrot.lane.b32.xlu0 %v411, 56
    %v1136 = vpop.permute.xlu0 %1135
    %v1140 = vsel %vm597, %v1044, 0
    %v1143 = vsel %vm597, %v1045, 0
    %1145 = vmatprep.subr.mxu0 0.0
    %1146 = vmatpush1.msra.mxu0 %v1134
    %1147 = vmatprep.subr.mxu0 0.0
    %1148 = vmatpush1.msra.mxu0 %v1136
    %1149 = vmatprep.subr.mxu0 0.0
    %1150 = vmatpush1.msra.mxu0 0.0
    %1151 = vmatprep.subr.mxu0 0.0
    %1152 = vmatpush1.msra.mxu0 0.0
    %1153 = vmatprep.subr.mxu0 0.0
    %1154 = vmatpush1.msra.mxu0 0.0
    %1155 = vmatprep.subr.mxu0 0.0
    %1156 = vmatpush1.msra.mxu0 0.0
    %1157 = vmatprep.subr.mxu0 0.0
    %1158 = vmatpush1.msra.mxu0 0.0
    %1159 = vmatprep.subr.mxu0 0.0
    %1160 = vmatpush1.msra.mxu0 0.0
    %1161 = vmatprep.subr.mxu0 0.0
    %1162 = vmatpush1.msra.mxu0 0.0
    %1163 = vmatprep.subr.mxu0 0.0
    %1164 = vmatpush1.msra.mxu0 0.0
    %1165 = vmatprep.subr.mxu0 0.0
    %1166 = vmatpush1.msra.mxu0 0.0
    %1167 = vmatprep.subr.mxu0 0.0
    %1168 = vmatpush1.msra.mxu0 0.0
    %1169 = vmatprep.subr.mxu0 0.0
    %1170 = vmatpush1.msra.mxu0 0.0
    %1171 = vmatprep.subr.mxu0 0.0
    %1172 = vmatpush1.msra.mxu0 0.0
    %1173 = vmatprep.subr.mxu0 0.0
    %1174 = vmatpush1.msra.mxu0 0.0
    %1175 = vmatprep.subr.mxu0 0.0
    %1176 = vmatpush1.msra.mxu0 0.0
    %1177 = vmatprep.subr.mxu0 0.0
    %1178 = vmatpush1.msra.mxu0 0.0
    %1179 = vmatprep.subr.mxu0 0.0
    %1180 = vmatpush1.msra.mxu0 0.0
    %1181 = vmatprep.subr.mxu0 0.0
    %1182 = vmatpush1.msra.mxu0 0.0
    %1183 = vmatprep.subr.mxu0 0.0
    %1184 = vmatpush1.msra.mxu0 0.0
    %1185 = vmatprep.subr.mxu0 0.0
    %1186 = vmatpush1.msra.mxu0 0.0
    %1187 = vmatprep.subr.mxu0 0.0
    %1188 = vmatpush1.msra.mxu0 0.0
    %1189 = vmatprep.subr.mxu0 0.0
    %1190 = vmatpush1.msra.mxu0 0.0
    %1191 = vmatprep.subr.mxu0 0.0
    %1192 = vmatpush1.msra.mxu0 0.0
    %1193 = vmatprep.subr.mxu0 0.0
    %1194 = vmatpush1.msra.mxu0 0.0
    %1195 = vmatprep.subr.mxu0 0.0
    %1196 = vmatpush1.msra.mxu0 0.0
    %1197 = vmatprep.subr.mxu0 0.0
    %1198 = vmatpush1.msra.mxu0 0.0
    %1199 = vmatprep.subr.mxu0 0.0
    %1200 = vmatpush1.msra.mxu0 0.0
    %1201 = vmatprep.subr.mxu0 0.0
    %1202 = vmatpush1.msra.mxu0 0.0
    %1203 = vmatprep.subr.mxu0 0.0
    %1204 = vmatpush1.msra.mxu0 0.0
    %1205 = vmatprep.subr.mxu0 0.0
    %1206 = vmatpush1.msra.mxu0 0.0
    %1207 = vmatprep.subr.mxu0 0.0
    %1208 = vmatpush1.msra.mxu0 0.0
    %1209 = vmatprep.mubr.f32.mxu0 0.0
    %1210 = vmatmul.mubr.f32.gmra.mrb[0].mxu0 %v1140
    %v1211 = vpop.f32.mrb[0].mxu0
    %v1212 = vadd.f32 0.0, %v1211
    %v1213 = vpop.f32.mrb[0].mxu0
    %1214 = vmatprep.mubr.f32.mxu0 0.0
    %1215 = vmatmul.mubr.f32.gmra.mrb[0].mxu0 %v1143
    %v1216 = vpop.f32.mrb[0].mxu0
    %v1217 = vadd.f32 0.0, %v1216
    %v1218 = vpop.f32.mrb[0].mxu0
    %1219 = vdwg.mxu0
    %1220 = vrot.lane.b32.xlu0 %v396, 112
    %v1221 = vpop.permute.xlu0 %1220
    %1222 = vrot.lane.b32.xlu0 %v401, 112
    %v1223 = vpop.permute.xlu0 %1222
    %1224 = vrot.lane.b32.xlu0 %v396, 80
    %v1225 = vpop.permute.xlu0 %1224
    %1226 = vrot.lane.b32.xlu0 %v401, 80
    %v1227 = vpop.permute.xlu0 %1226
    %v1228 = vsel %vm420, %v1221, 0
    %v1230 = vsel %vm420, %v1223, 0
    %v1232 = vsel %vm420, %v1225, 0
    %v1234 = vsel %vm420, %v1227, 0
    %1236 = vmatprep.subr.mxu0 0.0
    %1237 = vmatpush1.xpose.msra.mxu0 %v1232
    %1238 = vmatprep.subr.mxu0 0.0
    %1239 = vmatpush1.xpose.msra.mxu0 %v1234
    %1240 = vmatprep.subr.mxu0 0.0
    %1241 = vmatpush1.xpose.msra.mxu0 0.0
    %1242 = vmatprep.subr.mxu0 0.0
    %1243 = vmatpush1.xpose.msra.mxu0 0.0
    %1244 = vmatprep.subr.mxu0 0.0
    %1245 = vmatpush1.xpose.msra.mxu0 0.0
    %1246 = vmatprep.subr.mxu0 0.0
    %1247 = vmatpush1.xpose.msra.mxu0 0.0
    %1248 = vmatprep.subr.mxu0 0.0
    %1249 = vmatpush1.xpose.msra.mxu0 0.0
    %1250 = vmatprep.subr.mxu0 0.0
    %1251 = vmatpush1.xpose.msra.mxu0 0.0
    %1252 = vmatprep.subr.mxu0 0.0
    %1253 = vmatpush1.xpose.msra.mxu0 0.0
    %1254 = vmatprep.subr.mxu0 0.0
    %1255 = vmatpush1.xpose.msra.mxu0 0.0
    %1256 = vmatprep.subr.mxu0 0.0
    %1257 = vmatpush1.xpose.msra.mxu0 0.0
    %1258 = vmatprep.subr.mxu0 0.0
    %1259 = vmatpush1.xpose.msra.mxu0 0.0
    %1260 = vmatprep.subr.mxu0 0.0
    %1261 = vmatpush1.xpose.msra.mxu0 0.0
    %1262 = vmatprep.subr.mxu0 0.0
    %1263 = vmatpush1.xpose.msra.mxu0 0.0
    %1264 = vmatprep.subr.mxu0 0.0
    %1265 = vmatpush1.xpose.msra.mxu0 0.0
    %1266 = vmatprep.subr.mxu0 0.0
    %1267 = vmatpush1.xpose.msra.mxu0 0.0
    %1268 = vmatprep.subr.mxu0 0.0
    %1269 = vmatpush1.xpose.msra.mxu0 0.0
    %1270 = vmatprep.subr.mxu0 0.0
    %1271 = vmatpush1.xpose.msra.mxu0 0.0
    %1272 = vmatprep.subr.mxu0 0.0
    %1273 = vmatpush1.xpose.msra.mxu0 0.0
    %1274 = vmatprep.subr.mxu0 0.0
    %1275 = vmatpush1.xpose.msra.mxu0 0.0
    %1276 = vmatprep.subr.mxu0 0.0
    %1277 = vmatpush1.xpose.msra.mxu0 0.0
    %1278 = vmatprep.subr.mxu0 0.0
    %1279 = vmatpush1.xpose.msra.mxu0 0.0
    %1280 = vmatprep.subr.mxu0 0.0
    %1281 = vmatpush1.xpose.msra.mxu0 0.0
    %1282 = vmatprep.subr.mxu0 0.0
    %1283 = vmatpush1.xpose.msra.mxu0 0.0
    %1284 = vmatprep.subr.mxu0 0.0
    %1285 = vmatpush1.xpose.msra.mxu0 0.0
    %1286 = vmatprep.subr.mxu0 0.0
    %1287 = vmatpush1.xpose.msra.mxu0 0.0
    %1288 = vmatprep.subr.mxu0 0.0
    %1289 = vmatpush1.xpose.msra.mxu0 0.0
    %1290 = vmatprep.subr.mxu0 0.0
    %1291 = vmatpush1.xpose.msra.mxu0 0.0
    %1292 = vmatprep.subr.mxu0 0.0
    %1293 = vmatpush1.xpose.msra.mxu0 0.0
    %1294 = vmatprep.subr.mxu0 0.0
    %1295 = vmatpush1.xpose.msra.mxu0 0.0
    %1296 = vmatprep.subr.mxu0 0.0
    %1297 = vmatpush1.xpose.msra.mxu0 0.0
    %1298 = vmatprep.subr.mxu0 0.0
    %1299 = vmatpush1.xpose.msra.mxu0 0.0
    %1300 = vmatprep.mubr.f32.mxu0 0.0
    %1301 = vmatmul.mubr.f32.gmra.mrb[0].mxu0 %v1228
    %v1302 = vpop.f32.mrb[0].mxu0
    %v1303 = vadd.f32 0.0, %v1302
    %v1304 = vpop.f32.mrb[0].mxu0
    %1305 = vmatprep.mubr.f32.mxu0 0.0
    %1306 = vmatmul.mubr.f32.gmra.mrb[0].mxu0 %v1230
    %v1307 = vpop.f32.mrb[0].mxu0
    %v1308 = vadd.f32 0.0, %v1307
    %v1309 = vpop.f32.mrb[0].mxu0
    %1310 = vdwg.mxu0
    %1311 = vrot.lane.b32.xlu0 %v406, 112
    %v1312 = vpop.permute.xlu0 %1311
    %1313 = vrot.lane.b32.xlu0 %v411, 112
    %v1314 = vpop.permute.xlu0 %1313
    %1315 = vrot.lane.b32.xlu0 %v406, 80
    %v1316 = vpop.permute.xlu0 %1315
    %1317 = vrot.lane.b32.xlu0 %v411, 80
    %v1318 = vpop.permute.xlu0 %1317
    %v1319 = vsel %vm420, %v1312, 0
    %v1321 = vsel %vm420, %v1314, 0
    %v1323 = vsel %vm420, %v1316, 0
    %v1325 = vsel %vm420, %v1318, 0
    %1327 = vmatprep.subr.mxu0 0.0
    %1328 = vmatpush1.xpose.msra.mxu0 %v1323
    %1329 = vmatprep.subr.mxu0 0.0
    %1330 = vmatpush1.xpose.msra.mxu0 %v1325
    %1331 = vmatprep.subr.mxu0 0.0
    %1332 = vmatpush1.xpose.msra.mxu0 0.0
    %1333 = vmatprep.subr.mxu0 0.0
    %1334 = vmatpush1.xpose.msra.mxu0 0.0
    %1335 = vmatprep.subr.mxu0 0.0
    %1336 = vmatpush1.xpose.msra.mxu0 0.0
    %1337 = vmatprep.subr.mxu0 0.0
    %1338 = vmatpush1.xpose.msra.mxu0 0.0
    %1339 = vmatprep.subr.mxu0 0.0
    %1340 = vmatpush1.xpose.msra.mxu0 0.0
    %1341 = vmatprep.subr.mxu0 0.0
    %1342 = vmatpush1.xpose.msra.mxu0 0.0
    %1343 = vmatprep.subr.mxu0 0.0
    %1344 = vmatpush1.xpose.msra.mxu0 0.0
    %1345 = vmatprep.subr.mxu0 0.0
    %1346 = vmatpush1.xpose.msra.mxu0 0.0
    %1347 = vmatprep.subr.mxu0 0.0
    %1348 = vmatpush1.xpose.msra.mxu0 0.0
    %1349 = vmatprep.subr.mxu0 0.0
    %1350 = vmatpush1.xpose.msra.mxu0 0.0
    %1351 = vmatprep.subr.mxu0 0.0
    %1352 = vmatpush1.xpose.msra.mxu0 0.0
    %1353 = vmatprep.subr.mxu0 0.0
    %1354 = vmatpush1.xpose.msra.mxu0 0.0
    %1355 = vmatprep.subr.mxu0 0.0
    %1356 = vmatpush1.xpose.msra.mxu0 0.0
    %1357 = vmatprep.subr.mxu0 0.0
    %1358 = vmatpush1.xpose.msra.mxu0 0.0
    %1359 = vmatprep.subr.mxu0 0.0
    %1360 = vmatpush1.xpose.msra.mxu0 0.0
    %1361 = vmatprep.subr.mxu0 0.0
    %1362 = vmatpush1.xpose.msra.mxu0 0.0
    %1363 = vmatprep.subr.mxu0 0.0
    %1364 = vmatpush1.xpose.msra.mxu0 0.0
    %1365 = vmatprep.subr.mxu0 0.0
    %1366 = vmatpush1.xpose.msra.mxu0 0.0
    %1367 = vmatprep.subr.mxu0 0.0
    %1368 = vmatpush1.xpose.msra.mxu0 0.0
    %1369 = vmatprep.subr.mxu0 0.0
    %1370 = vmatpush1.xpose.msra.mxu0 0.0
    %1371 = vmatprep.subr.mxu0 0.0
    %1372 = vmatpush1.xpose.msra.mxu0 0.0
    %1373 = vmatprep.subr.mxu0 0.0
    %1374 = vmatpush1.xpose.msra.mxu0 0.0
    %1375 = vmatprep.subr.mxu0 0.0
    %1376 = vmatpush1.xpose.msra.mxu0 0.0
    %1377 = vmatprep.subr.mxu0 0.0
    %1378 = vmatpush1.xpose.msra.mxu0 0.0
    %1379 = vmatprep.subr.mxu0 0.0
    %1380 = vmatpush1.xpose.msra.mxu0 0.0
    %1381 = vmatprep.subr.mxu0 0.0
    %1382 = vmatpush1.xpose.msra.mxu0 0.0
    %1383 = vmatprep.subr.mxu0 0.0
    %1384 = vmatpush1.xpose.msra.mxu0 0.0
    %1385 = vmatprep.subr.mxu0 0.0
    %1386 = vmatpush1.xpose.msra.mxu0 0.0
    %1387 = vmatprep.subr.mxu0 0.0
    %1388 = vmatpush1.xpose.msra.mxu0 0.0
    %1389 = vmatprep.subr.mxu0 0.0
    %1390 = vmatpush1.xpose.msra.mxu0 0.0
    %1391 = vmatprep.mubr.f32.mxu0 0.0
    %1392 = vmatmul.mubr.f32.gmra.mrb[0].mxu0 %v1319
    %v1393 = vpop.f32.mrb[0].mxu0
    %v1394 = vadd.f32 0.0, %v1393
    %v1395 = vpop.f32.mrb[0].mxu0
    %1396 = vmatprep.mubr.f32.mxu0 0.0
    %1397 = vmatmul.mubr.f32.gmra.mrb[0].mxu0 %v1321
    %v1398 = vpop.f32.mrb[0].mxu0
    %v1399 = vadd.f32 0.0, %v1398
    %v1400 = vpop.f32.mrb[0].mxu0
    %1401 = vdwg.mxu0
    %v1402 = vmul.f32 %v1303, 0.35355338
    %v1403 = vmul.f32 %v1308, 0.35355338
    %v1404 = vmul.f32 %v1394, 0.35355338
    %v1405 = vmul.f32 %v1399, 0.35355338
    %v1406 = vsel %vm597, %v1402, -inf
    %1407 = vmax.xlane.f32.xlu0 %v1406
    %v1408 = vpop.xlane.xlu0 %1407
    %v1409 = vsel %vm597, %v1403, -inf
    %1410 = vmax.xlane.f32.xlu0 %v1409
    %v1411 = vpop.xlane.xlu0 %1410
    %v1412 = vsel %vm597, %v1404, -inf
    %1413 = vmax.xlane.f32.xlu0 %v1412
    %v1414 = vpop.xlane.xlu0 %1413
    %v1415 = vsel %vm597, %v1405, -inf
    %1416 = vmax.xlane.f32.xlu0 %v1415
    %v1417 = vpop.xlane.xlu0 %1416
    %v1418 = vsub.f32 %v1402, %v1408
    %v1419 = vsub.f32 %v1403, %v1411
    %v1420 = vsub.f32 %v1404, %v1414
    %v1421 = vsub.f32 %v1405, %v1417
    %v1422 = vmul.f32 %v1418, 1.442695
    %v1423 = vpow.pop %v1422
    %v1424 = vmul.f32 %v1419, 1.442695
    %v1425 = vpow.pop %v1424
    %v1426 = vmul.f32 %v1420, 1.442695
    %v1427 = vpow.pop %v1426
    %v1428 = vmul.f32 %v1421, 1.442695
    %v1429 = vpow.pop %v1428
    %v1430 = vsel %vm597, %v1423, 0.0
    %1431 = vadd.xlane.f32.xlu0 %v1430
    %v1432 = vpop.xlane.xlu0 %1431
    %v1433 = vsel %vm597, %v1425, 0.0
    %1434 = vadd.xlane.f32.xlu0 %v1433
    %v1435 = vpop.xlane.xlu0 %1434
    %v1436 = vsel %vm597, %v1427, 0.0
    %1437 = vadd.xlane.f32.xlu0 %v1436
    %v1438 = vpop.xlane.xlu0 %1437
    %v1439 = vsel %vm597, %v1429, 0.0
    %1440 = vadd.xlane.f32.xlu0 %v1439
    %v1441 = vpop.xlane.xlu0 %1440
    %v1442 = vrcp.pop %v1432
    %v1443 = vrcp.pop %v1435
    %v1444 = vrcp.pop %v1438
    %v1445 = vrcp.pop %v1441
    %v1446 = vmul.f32 %v1423, %v1442
    %v1447 = vmul.f32 %v1425, %v1443
    %v1448 = vmul.f32 %v1427, %v1444
    %v1449 = vmul.f32 %v1429, %v1445
    %1450 = vrot.lane.b32.xlu0 %v396, 48
    %v1451 = vpop.permute.xlu0 %1450
    %1452 = vrot.lane.b32.xlu0 %v401, 48
    %v1453 = vpop.permute.xlu0 %1452
    %v1457 = vsel %vm597, %v1446, 0
    %v1460 = vsel %vm597, %v1447, 0
    %1462 = vmatprep.subr.mxu0 0.0
    %1463 = vmatpush1.msra.mxu0 %v1451
    %1464 = vmatprep.subr.mxu0 0.0
    %1465 = vmatpush1.msra.mxu0 %v1453
    %1466 = vmatprep.subr.mxu0 0.0
    %1467 = vmatpush1.msra.mxu0 0.0
    %1468 = vmatprep.subr.mxu0 0.0
    %1469 = vmatpush1.msra.mxu0 0.0
    %1470 = vmatprep.subr.mxu0 0.0
    %1471 = vmatpush1.msra.mxu0 0.0
    %1472 = vmatprep.subr.mxu0 0.0
    %1473 = vmatpush1.msra.mxu0 0.0
    %1474 = vmatprep.subr.mxu0 0.0
    %1475 = vmatpush1.msra.mxu0 0.0
    %1476 = vmatprep.subr.mxu0 0.0
    %1477 = vmatpush1.msra.mxu0 0.0
    %1478 = vmatprep.subr.mxu0 0.0
    %1479 = vmatpush1.msra.mxu0 0.0
    %1480 = vmatprep.subr.mxu0 0.0
    %1481 = vmatpush1.msra.mxu0 0.0
    %1482 = vmatprep.subr.mxu0 0.0
    %1483 = vmatpush1.msra.mxu0 0.0
    %1484 = vmatprep.subr.mxu0 0.0
    %1485 = vmatpush1.msra.mxu0 0.0
    %1486 = vmatprep.subr.mxu0 0.0
    %1487 = vmatpush1.msra.mxu0 0.0
    %1488 = vmatprep.subr.mxu0 0.0
    %1489 = vmatpush1.msra.mxu0 0.0
    %1490 = vmatprep.subr.mxu0 0.0
    %1491 = vmatpush1.msra.mxu0 0.0
    %1492 = vmatprep.subr.mxu0 0.0
    %1493 = vmatpush1.msra.mxu0 0.0
    %1494 = vmatprep.subr.mxu0 0.0
    %1495 = vmatpush1.msra.mxu0 0.0
    %1496 = vmatprep.subr.mxu0 0.0
    %1497 = vmatpush1.msra.mxu0 0.0
    %1498 = vmatprep.subr.mxu0 0.0
    %1499 = vmatpush1.msra.mxu0 0.0
    %1500 = vmatprep.subr.mxu0 0.0
    %1501 = vmatpush1.msra.mxu0 0.0
    %1502 = vmatprep.subr.mxu0 0.0
    %1503 = vmatpush1.msra.mxu0 0.0
    %1504 = vmatprep.subr.mxu0 0.0
    %1505 = vmatpush1.msra.mxu0 0.0
    %1506 = vmatprep.subr.mxu0 0.0
    %1507 = vmatpush1.msra.mxu0 0.0
    %1508 = vmatprep.subr.mxu0 0.0
    %1509 = vmatpush1.msra.mxu0 0.0
    %1510 = vmatprep.subr.mxu0 0.0
    %1511 = vmatpush1.msra.mxu0 0.0
    %1512 = vmatprep.subr.mxu0 0.0
    %1513 = vmatpush1.msra.mxu0 0.0
    %1514 = vmatprep.subr.mxu0 0.0
    %1515 = vmatpush1.msra.mxu0 0.0
    %1516 = vmatprep.subr.mxu0 0.0
    %1517 = vmatpush1.msra.mxu0 0.0
    %1518 = vmatprep.subr.mxu0 0.0
    %1519 = vmatpush1.msra.mxu0 0.0
    %1520 = vmatprep.subr.mxu0 0.0
    %1521 = vmatpush1.msra.mxu0 0.0
    %1522 = vmatprep.subr.mxu0 0.0
    %1523 = vmatpush1.msra.mxu0 0.0
    %1524 = vmatprep.subr.mxu0 0.0
    %1525 = vmatpush1.msra.mxu0 0.0
    %1526 = vmatprep.mubr.f32.mxu0 0.0
    %1527 = vmatmul.mubr.f32.gmra.mrb[0].mxu0 %v1457
    %v1528 = vpop.f32.mrb[0].mxu0
    %v1529 = vadd.f32 0.0, %v1528
    %v1530 = vpop.f32.mrb[0].mxu0
    %1531 = vmatprep.mubr.f32.mxu0 0.0
    %1532 = vmatmul.mubr.f32.gmra.mrb[0].mxu0 %v1460
    %v1533 = vpop.f32.mrb[0].mxu0
    %v1534 = vadd.f32 0.0, %v1533
    %v1535 = vpop.f32.mrb[0].mxu0
    %1536 = vdwg.mxu0
    %1537 = vrot.lane.b32.xlu0 %v406, 48
    %v1538 = vpop.permute.xlu0 %1537
    %1539 = vrot.lane.b32.xlu0 %v411, 48
    %v1540 = vpop.permute.xlu0 %1539
    %v1544 = vsel %vm597, %v1448, 0
    %v1547 = vsel %vm597, %v1449, 0
    %1549 = vmatprep.subr.mxu0 0.0
    %1550 = vmatpush1.msra.mxu0 %v1538
    %1551 = vmatprep.subr.mxu0 0.0
    %1552 = vmatpush1.msra.mxu0 %v1540
    %1553 = vmatprep.subr.mxu0 0.0
    %1554 = vmatpush1.msra.mxu0 0.0
    %1555 = vmatprep.subr.mxu0 0.0
    %1556 = vmatpush1.msra.mxu0 0.0
    %1557 = vmatprep.subr.mxu0 0.0
    %1558 = vmatpush1.msra.mxu0 0.0
    %1559 = vmatprep.subr.mxu0 0.0
    %1560 = vmatpush1.msra.mxu0 0.0
    %1561 = vmatprep.subr.mxu0 0.0
    %1562 = vmatpush1.msra.mxu0 0.0
    %1563 = vmatprep.subr.mxu0 0.0
    %1564 = vmatpush1.msra.mxu0 0.0
    %1565 = vmatprep.subr.mxu0 0.0
    %1566 = vmatpush1.msra.mxu0 0.0
    %1567 = vmatprep.subr.mxu0 0.0
    %1568 = vmatpush1.msra.mxu0 0.0
    %1569 = vmatprep.subr.mxu0 0.0
    %1570 = vmatpush1.msra.mxu0 0.0
    %1571 = vmatprep.subr.mxu0 0.0
    %1572 = vmatpush1.msra.mxu0 0.0
    %1573 = vmatprep.subr.mxu0 0.0
    %1574 = vmatpush1.msra.mxu0 0.0
    %1575 = vmatprep.subr.mxu0 0.0
    %1576 = vmatpush1.msra.mxu0 0.0
    %1577 = vmatprep.subr.mxu0 0.0
    %1578 = vmatpush1.msra.mxu0 0.0
    %1579 = vmatprep.subr.mxu0 0.0
    %1580 = vmatpush1.msra.mxu0 0.0
    %1581 = vmatprep.subr.mxu0 0.0
    %1582 = vmatpush1.msra.mxu0 0.0
    %1583 = vmatprep.subr.mxu0 0.0
    %1584 = vmatpush1.msra.mxu0 0.0
    %1585 = vmatprep.subr.mxu0 0.0
    %1586 = vmatpush1.msra.mxu0 0.0
    %1587 = vmatprep.subr.mxu0 0.0
    %1588 = vmatpush1.msra.mxu0 0.0
    %1589 = vmatprep.subr.mxu0 0.0
    %1590 = vmatpush1.msra.mxu0 0.0
    %1591 = vmatprep.subr.mxu0 0.0
    %1592 = vmatpush1.msra.mxu0 0.0
    %1593 = vmatprep.subr.mxu0 0.0
    %1594 = vmatpush1.msra.mxu0 0.0
    %1595 = vmatprep.subr.mxu0 0.0
    %1596 = vmatpush1.msra.mxu0 0.0
    %1597 = vmatprep.subr.mxu0 0.0
    %1598 = vmatpush1.msra.mxu0 0.0
    %1599 = vmatprep.subr.mxu0 0.0
    %1600 = vmatpush1.msra.mxu0 0.0
    %1601 = vmatprep.subr.mxu0 0.0
    %1602 = vmatpush1.msra.mxu0 0.0
    %1603 = vmatprep.subr.mxu0 0.0
    %1604 = vmatpush1.msra.mxu0 0.0
    %1605 = vmatprep.subr.mxu0 0.0
    %1606 = vmatpush1.msra.mxu0 0.0
    %1607 = vmatprep.subr.mxu0 0.0
    %1608 = vmatpush1.msra.mxu0 0.0
    %1609 = vmatprep.subr.mxu0 0.0
    %1610 = vmatpush1.msra.mxu0 0.0
    %1611 = vmatprep.subr.mxu0 0.0
    %1612 = vmatpush1.msra.mxu0 0.0
    %1613 = vmatprep.mubr.f32.mxu0 0.0
    %1614 = vmatmul.mubr.f32.gmra.mrb[0].mxu0 %v1544
    %v1615 = vpop.f32.mrb[0].mxu0
    %v1616 = vadd.f32 0.0, %v1615
    %v1617 = vpop.f32.mrb[0].mxu0
    %1618 = vmatprep.mubr.f32.mxu0 0.0
    %1619 = vmatmul.mubr.f32.gmra.mrb[0].mxu0 %v1547
    %v1620 = vpop.f32.mrb[0].mxu0
    %v1621 = vadd.f32 0.0, %v1620
    %v1622 = vpop.f32.mrb[0].mxu0
    %1623 = vdwg.mxu0
    %1624 = vrot.lane.b32.xlu0 %v396, 104
    %v1625 = vpop.permute.xlu0 %1624
    %1626 = vrot.lane.b32.xlu0 %v401, 104
    %v1627 = vpop.permute.xlu0 %1626
    %1628 = vrot.lane.b32.xlu0 %v396, 72
    %v1629 = vpop.permute.xlu0 %1628
    %1630 = vrot.lane.b32.xlu0 %v401, 72
    %v1631 = vpop.permute.xlu0 %1630
    %v1632 = vsel %vm420, %v1625, 0
    %v1634 = vsel %vm420, %v1627, 0
    %v1636 = vsel %vm420, %v1629, 0
    %v1638 = vsel %vm420, %v1631, 0
    %1640 = vmatprep.subr.mxu0 0.0
    %1641 = vmatpush1.xpose.msra.mxu0 %v1636
    %1642 = vmatprep.subr.mxu0 0.0
    %1643 = vmatpush1.xpose.msra.mxu0 %v1638
    %1644 = vmatprep.subr.mxu0 0.0
    %1645 = vmatpush1.xpose.msra.mxu0 0.0
    %1646 = vmatprep.subr.mxu0 0.0
    %1647 = vmatpush1.xpose.msra.mxu0 0.0
    %1648 = vmatprep.subr.mxu0 0.0
    %1649 = vmatpush1.xpose.msra.mxu0 0.0
    %1650 = vmatprep.subr.mxu0 0.0
    %1651 = vmatpush1.xpose.msra.mxu0 0.0
    %1652 = vmatprep.subr.mxu0 0.0
    %1653 = vmatpush1.xpose.msra.mxu0 0.0
    %1654 = vmatprep.subr.mxu0 0.0
    %1655 = vmatpush1.xpose.msra.mxu0 0.0
    %1656 = vmatprep.subr.mxu0 0.0
    %1657 = vmatpush1.xpose.msra.mxu0 0.0
    %1658 = vmatprep.subr.mxu0 0.0
    %1659 = vmatpush1.xpose.msra.mxu0 0.0
    %1660 = vmatprep.subr.mxu0 0.0
    %1661 = vmatpush1.xpose.msra.mxu0 0.0
    %1662 = vmatprep.subr.mxu0 0.0
    %1663 = vmatpush1.xpose.msra.mxu0 0.0
    %1664 = vmatprep.subr.mxu0 0.0
    %1665 = vmatpush1.xpose.msra.mxu0 0.0
    %1666 = vmatprep.subr.mxu0 0.0
    %1667 = vmatpush1.xpose.msra.mxu0 0.0
    %1668 = vmatprep.subr.mxu0 0.0
    %1669 = vmatpush1.xpose.msra.mxu0 0.0
    %1670 = vmatprep.subr.mxu0 0.0
    %1671 = vmatpush1.xpose.msra.mxu0 0.0
    %1672 = vmatprep.subr.mxu0 0.0
    %1673 = vmatpush1.xpose.msra.mxu0 0.0
    %1674 = vmatprep.subr.mxu0 0.0
    %1675 = vmatpush1.xpose.msra.mxu0 0.0
    %1676 = vmatprep.subr.mxu0 0.0
    %1677 = vmatpush1.xpose.msra.mxu0 0.0
    %1678 = vmatprep.subr.mxu0 0.0
    %1679 = vmatpush1.xpose.msra.mxu0 0.0
    %1680 = vmatprep.subr.mxu0 0.0
    %1681 = vmatpush1.xpose.msra.mxu0 0.0
    %1682 = vmatprep.subr.mxu0 0.0
    %1683 = vmatpush1.xpose.msra.mxu0 0.0
    %1684 = vmatprep.subr.mxu0 0.0
    %1685 = vmatpush1.xpose.msra.mxu0 0.0
    %1686 = vmatprep.subr.mxu0 0.0
    %1687 = vmatpush1.xpose.msra.mxu0 0.0
    %1688 = vmatprep.subr.mxu0 0.0
    %1689 = vmatpush1.xpose.msra.mxu0 0.0
    %1690 = vmatprep.subr.mxu0 0.0
    %1691 = vmatpush1.xpose.msra.mxu0 0.0
    %1692 = vmatprep.subr.mxu0 0.0
    %1693 = vmatpush1.xpose.msra.mxu0 0.0
    %1694 = vmatprep.subr.mxu0 0.0
    %1695 = vmatpush1.xpose.msra.mxu0 0.0
    %1696 = vmatprep.subr.mxu0 0.0
    %1697 = vmatpush1.xpose.msra.mxu0 0.0
    %1698 = vmatprep.subr.mxu0 0.0
    %1699 = vmatpush1.xpose.msra.mxu0 0.0
    %1700 = vmatprep.subr.mxu0 0.0
    %1701 = vmatpush1.xpose.msra.mxu0 0.0
    %1702 = vmatprep.subr.mxu0 0.0
    %1703 = vmatpush1.xpose.msra.mxu0 0.0
    %1704 = vmatprep.mubr.f32.mxu0 0.0
    %1705 = vmatmul.mubr.f32.gmra.mrb[0].mxu0 %v1632
    %v1706 = vpop.f32.mrb[0].mxu0
    %v1707 = vadd.f32 0.0, %v1706
    %v1708 = vpop.f32.mrb[0].mxu0
    %1709 = vmatprep.mubr.f32.mxu0 0.0
    %1710 = vmatmul.mubr.f32.gmra.mrb[0].mxu0 %v1634
    %v1711 = vpop.f32.mrb[0].mxu0
    %v1712 = vadd.f32 0.0, %v1711
    %v1713 = vpop.f32.mrb[0].mxu0
    %1714 = vdwg.mxu0
    %1715 = vrot.lane.b32.xlu0 %v406, 104
    %v1716 = vpop.permute.xlu0 %1715
    %1717 = vrot.lane.b32.xlu0 %v411, 104
    %v1718 = vpop.permute.xlu0 %1717
    %1719 = vrot.lane.b32.xlu0 %v406, 72
    %v1720 = vpop.permute.xlu0 %1719
    %1721 = vrot.lane.b32.xlu0 %v411, 72
    %v1722 = vpop.permute.xlu0 %1721
    %v1723 = vsel %vm420, %v1716, 0
    %v1725 = vsel %vm420, %v1718, 0
    %v1727 = vsel %vm420, %v1720, 0
    %v1729 = vsel %vm420, %v1722, 0
    %1731 = vmatprep.subr.mxu0 0.0
    %1732 = vmatpush1.xpose.msra.mxu0 %v1727
    %1733 = vmatprep.subr.mxu0 0.0
    %1734 = vmatpush1.xpose.msra.mxu0 %v1729
    %1735 = vmatprep.subr.mxu0 0.0
    %1736 = vmatpush1.xpose.msra.mxu0 0.0
    %1737 = vmatprep.subr.mxu0 0.0
    %1738 = vmatpush1.xpose.msra.mxu0 0.0
    %1739 = vmatprep.subr.mxu0 0.0
    %1740 = vmatpush1.xpose.msra.mxu0 0.0
    %1741 = vmatprep.subr.mxu0 0.0
    %1742 = vmatpush1.xpose.msra.mxu0 0.0
    %1743 = vmatprep.subr.mxu0 0.0
    %1744 = vmatpush1.xpose.msra.mxu0 0.0
    %1745 = vmatprep.subr.mxu0 0.0
    %1746 = vmatpush1.xpose.msra.mxu0 0.0
    %1747 = vmatprep.subr.mxu0 0.0
    %1748 = vmatpush1.xpose.msra.mxu0 0.0
    %1749 = vmatprep.subr.mxu0 0.0
    %1750 = vmatpush1.xpose.msra.mxu0 0.0
    %1751 = vmatprep.subr.mxu0 0.0
    %1752 = vmatpush1.xpose.msra.mxu0 0.0
    %1753 = vmatprep.subr.mxu0 0.0
    %1754 = vmatpush1.xpose.msra.mxu0 0.0
    %1755 = vmatprep.subr.mxu0 0.0
    %1756 = vmatpush1.xpose.msra.mxu0 0.0
    %1757 = vmatprep.subr.mxu0 0.0
    %1758 = vmatpush1.xpose.msra.mxu0 0.0
    %1759 = vmatprep.subr.mxu0 0.0
    %1760 = vmatpush1.xpose.msra.mxu0 0.0
    %1761 = vmatprep.subr.mxu0 0.0
    %1762 = vmatpush1.xpose.msra.mxu0 0.0
    %1763 = vmatprep.subr.mxu0 0.0
    %1764 = vmatpush1.xpose.msra.mxu0 0.0
    %1765 = vmatprep.subr.mxu0 0.0
    %1766 = vmatpush1.xpose.msra.mxu0 0.0
    %1767 = vmatprep.subr.mxu0 0.0
    %1768 = vmatpush1.xpose.msra.mxu0 0.0
    %1769 = vmatprep.subr.mxu0 0.0
    %1770 = vmatpush1.xpose.msra.mxu0 0.0
    %1771 = vmatprep.subr.mxu0 0.0
    %1772 = vmatpush1.xpose.msra.mxu0 0.0
    %1773 = vmatprep.subr.mxu0 0.0
    %1774 = vmatpush1.xpose.msra.mxu0 0.0
    %1775 = vmatprep.subr.mxu0 0.0
    %1776 = vmatpush1.xpose.msra.mxu0 0.0
    %1777 = vmatprep.subr.mxu0 0.0
    %1778 = vmatpush1.xpose.msra.mxu0 0.0
    %1779 = vmatprep.subr.mxu0 0.0
    %1780 = vmatpush1.xpose.msra.mxu0 0.0
    %1781 = vmatprep.subr.mxu0 0.0
    %1782 = vmatpush1.xpose.msra.mxu0 0.0
    %1783 = vmatprep.subr.mxu0 0.0
    %1784 = vmatpush1.xpose.msra.mxu0 0.0
    %1785 = vmatprep.subr.mxu0 0.0
    %1786 = vmatpush1.xpose.msra.mxu0 0.0
    %1787 = vmatprep.subr.mxu0 0.0
    %1788 = vmatpush1.xpose.msra.mxu0 0.0
    %1789 = vmatprep.subr.mxu0 0.0
    %1790 = vmatpush1.xpose.msra.mxu0 0.0
    %1791 = vmatprep.subr.mxu0 0.0
    %1792 = vmatpush1.xpose.msra.mxu0 0.0
    %1793 = vmatprep.subr.mxu0 0.0
    %1794 = vmatpush1.xpose.msra.mxu0 0.0
    %1795 = vmatprep.mubr.f32.mxu0 0.0
    %1796 = vmatmul.mubr.f32.gmra.mrb[0].mxu0 %v1723
    %v1797 = vpop.f32.mrb[0].mxu0
    %v1798 = vadd.f32 0.0, %v1797
    %v1799 = vpop.f32.mrb[0].mxu0
    %1800 = vmatprep.mubr.f32.mxu0 0.0
    %1801 = vmatmul.mubr.f32.gmra.mrb[0].mxu0 %v1725
    %v1802 = vpop.f32.mrb[0].mxu0
    %v1803 = vadd.f32 0.0, %v1802
    %v1804 = vpop.f32.mrb[0].mxu0
    %1805 = vdwg.mxu0
    %v1806 = vmul.f32 %v1707, 0.35355338
    %v1807 = vmul.f32 %v1712, 0.35355338
    %v1808 = vmul.f32 %v1798, 0.35355338
    %v1809 = vmul.f32 %v1803, 0.35355338
    %v1810 = vsel %vm597, %v1806, -inf
    %1811 = vmax.xlane.f32.xlu0 %v1810
    %v1812 = vpop.xlane.xlu0 %1811
    %v1813 = vsel %vm597, %v1807, -inf
    %1814 = vmax.xlane.f32.xlu0 %v1813
    %v1815 = vpop.xlane.xlu0 %1814
    %v1816 = vsel %vm597, %v1808, -inf
    %1817 = vmax.xlane.f32.xlu0 %v1816
    %v1818 = vpop.xlane.xlu0 %1817
    %v1819 = vsel %vm597, %v1809, -inf
    %1820 = vmax.xlane.f32.xlu0 %v1819
    %v1821 = vpop.xlane.xlu0 %1820
    %v1822 = vsub.f32 %v1806, %v1812
    %v1823 = vsub.f32 %v1807, %v1815
    %v1824 = vsub.f32 %v1808, %v1818
    %v1825 = vsub.f32 %v1809, %v1821
    %v1826 = vmul.f32 %v1822, 1.442695
    %v1827 = vpow.pop %v1826
    %v1828 = vmul.f32 %v1823, 1.442695
    %v1829 = vpow.pop %v1828
    %v1830 = vmul.f32 %v1824, 1.442695
    %v1831 = vpow.pop %v1830
    %v1832 = vmul.f32 %v1825, 1.442695
    %v1833 = vpow.pop %v1832
    %v1834 = vsel %vm597, %v1827, 0.0
    %1835 = vadd.xlane.f32.xlu0 %v1834
    %v1836 = vpop.xlane.xlu0 %1835
    %v1837 = vsel %vm597, %v1829, 0.0
    %1838 = vadd.xlane.f32.xlu0 %v1837
    %v1839 = vpop.xlane.xlu0 %1838
    %v1840 = vsel %vm597, %v1831, 0.0
    %1841 = vadd.xlane.f32.xlu0 %v1840
    %v1842 = vpop.xlane.xlu0 %1841
    %v1843 = vsel %vm597, %v1833, 0.0
    %1844 = vadd.xlane.f32.xlu0 %v1843
    %v1845 = vpop.xlane.xlu0 %1844
    %v1846 = vrcp.pop %v1836
    %v1847 = vrcp.pop %v1839
    %v1848 = vrcp.pop %v1842
    %v1849 = vrcp.pop %v1845
    %v1850 = vmul.f32 %v1827, %v1846
    %v1851 = vmul.f32 %v1829, %v1847
    %v1852 = vmul.f32 %v1831, %v1848
    %v1853 = vmul.f32 %v1833, %v1849
    %1854 = vrot.lane.b32.xlu0 %v396, 40
    %v1855 = vpop.permute.xlu0 %1854
    %1856 = vrot.lane.b32.xlu0 %v401, 40
    %v1857 = vpop.permute.xlu0 %1856
    %v1861 = vsel %vm597, %v1850, 0
    %v1864 = vsel %vm597, %v1851, 0
    %1866 = vmatprep.subr.mxu0 0.0
    %1867 = vmatpush1.msra.mxu0 %v1855
    %1868 = vmatprep.subr.mxu0 0.0
    %1869 = vmatpush1.msra.mxu0 %v1857
    %1870 = vmatprep.subr.mxu0 0.0
    %1871 = vmatpush1.msra.mxu0 0.0
    %1872 = vmatprep.subr.mxu0 0.0
    %1873 = vmatpush1.msra.mxu0 0.0
    %1874 = vmatprep.subr.mxu0 0.0
    %1875 = vmatpush1.msra.mxu0 0.0
    %1876 = vmatprep.subr.mxu0 0.0
    %1877 = vmatpush1.msra.mxu0 0.0
    %1878 = vmatprep.subr.mxu0 0.0
    %1879 = vmatpush1.msra.mxu0 0.0
    %1880 = vmatprep.subr.mxu0 0.0
    %1881 = vmatpush1.msra.mxu0 0.0
    %1882 = vmatprep.subr.mxu0 0.0
    %1883 = vmatpush1.msra.mxu0 0.0
    %1884 = vmatprep.subr.mxu0 0.0
    %1885 = vmatpush1.msra.mxu0 0.0
    %1886 = vmatprep.subr.mxu0 0.0
    %1887 = vmatpush1.msra.mxu0 0.0
    %1888 = vmatprep.subr.mxu0 0.0
    %1889 = vmatpush1.msra.mxu0 0.0
    %1890 = vmatprep.subr.mxu0 0.0
    %1891 = vmatpush1.msra.mxu0 0.0
    %1892 = vmatprep.subr.mxu0 0.0
    %1893 = vmatpush1.msra.mxu0 0.0
    %1894 = vmatprep.subr.mxu0 0.0
    %1895 = vmatpush1.msra.mxu0 0.0
    %1896 = vmatprep.subr.mxu0 0.0
    %1897 = vmatpush1.msra.mxu0 0.0
    %1898 = vmatprep.subr.mxu0 0.0
    %1899 = vmatpush1.msra.mxu0 0.0
    %1900 = vmatprep.subr.mxu0 0.0
    %1901 = vmatpush1.msra.mxu0 0.0
    %1902 = vmatprep.subr.mxu0 0.0
    %1903 = vmatpush1.msra.mxu0 0.0
    %1904 = vmatprep.subr.mxu0 0.0
    %1905 = vmatpush1.msra.mxu0 0.0
    %1906 = vmatprep.subr.mxu0 0.0
    %1907 = vmatpush1.msra.mxu0 0.0
    %1908 = vmatprep.subr.mxu0 0.0
    %1909 = vmatpush1.msra.mxu0 0.0
    %1910 = vmatprep.subr.mxu0 0.0
    %1911 = vmatpush1.msra.mxu0 0.0
    %1912 = vmatprep.subr.mxu0 0.0
    %1913 = vmatpush1.msra.mxu0 0.0
    %1914 = vmatprep.subr.mxu0 0.0
    %1915 = vmatpush1.msra.mxu0 0.0
    %1916 = vmatprep.subr.mxu0 0.0
    %1917 = vmatpush1.msra.mxu0 0.0
    %1918 = vmatprep.subr.mxu0 0.0
    %1919 = vmatpush1.msra.mxu0 0.0
    %1920 = vmatprep.subr.mxu0 0.0
    %1921 = vmatpush1.msra.mxu0 0.0
    %1922 = vmatprep.subr.mxu0 0.0
    %1923 = vmatpush1.msra.mxu0 0.0
    %1924 = vmatprep.subr.mxu0 0.0
    %1925 = vmatpush1.msra.mxu0 0.0
    %1926 = vmatprep.subr.mxu0 0.0
    %1927 = vmatpush1.msra.mxu0 0.0
    %1928 = vmatprep.subr.mxu0 0.0
    %1929 = vmatpush1.msra.mxu0 0.0
    %1930 = vmatprep.mubr.f32.mxu0 0.0
    %1931 = vmatmul.mubr.f32.gmra.mrb[0].mxu0 %v1861
    %v1932 = vpop.f32.mrb[0].mxu0
    %v1933 = vadd.f32 0.0, %v1932
    %v1934 = vpop.f32.mrb[0].mxu0
    %1935 = vmatprep.mubr.f32.mxu0 0.0
    %1936 = vmatmul.mubr.f32.gmra.mrb[0].mxu0 %v1864
    %v1937 = vpop.f32.mrb[0].mxu0
    %v1938 = vadd.f32 0.0, %v1937
    %v1939 = vpop.f32.mrb[0].mxu0
    %1940 = vdwg.mxu0
    %1941 = vrot.lane.b32.xlu0 %v406, 40
    %v1942 = vpop.permute.xlu0 %1941
    %1943 = vrot.lane.b32.xlu0 %v411, 40
    %v1944 = vpop.permute.xlu0 %1943
    %v1948 = vsel %vm597, %v1852, 0
    %v1951 = vsel %vm597, %v1853, 0
    %1953 = vmatprep.subr.mxu0 0.0
    %1954 = vmatpush1.msra.mxu0 %v1942
    %1955 = vmatprep.subr.mxu0 0.0
    %1956 = vmatpush1.msra.mxu0 %v1944
    %1957 = vmatprep.subr.mxu0 0.0
    %1958 = vmatpush1.msra.mxu0 0.0
    %1959 = vmatprep.subr.mxu0 0.0
    %1960 = vmatpush1.msra.mxu0 0.0
    %1961 = vmatprep.subr.mxu0 0.0
    %1962 = vmatpush1.msra.mxu0 0.0
    %1963 = vmatprep.subr.mxu0 0.0
    %1964 = vmatpush1.msra.mxu0 0.0
    %1965 = vmatprep.subr.mxu0 0.0
    %1966 = vmatpush1.msra.mxu0 0.0
    %1967 = vmatprep.subr.mxu0 0.0
    %1968 = vmatpush1.msra.mxu0 0.0
    %1969 = vmatprep.subr.mxu0 0.0
    %1970 = vmatpush1.msra.mxu0 0.0
    %1971 = vmatprep.subr.mxu0 0.0
    %1972 = vmatpush1.msra.mxu0 0.0
    %1973 = vmatprep.subr.mxu0 0.0
    %1974 = vmatpush1.msra.mxu0 0.0
    %1975 = vmatprep.subr.mxu0 0.0
    %1976 = vmatpush1.msra.mxu0 0.0
    %1977 = vmatprep.subr.mxu0 0.0
    %1978 = vmatpush1.msra.mxu0 0.0
    %1979 = vmatprep.subr.mxu0 0.0
    %1980 = vmatpush1.msra.mxu0 0.0
    %1981 = vmatprep.subr.mxu0 0.0
    %1982 = vmatpush1.msra.mxu0 0.0
    %1983 = vmatprep.subr.mxu0 0.0
    %1984 = vmatpush1.msra.mxu0 0.0
    %1985 = vmatprep.subr.mxu0 0.0
    %1986 = vmatpush1.msra.mxu0 0.0
    %1987 = vmatprep.subr.mxu0 0.0
    %1988 = vmatpush1.msra.mxu0 0.0
    %1989 = vmatprep.subr.mxu0 0.0
    %1990 = vmatpush1.msra.mxu0 0.0
    %1991 = vmatprep.subr.mxu0 0.0
    %1992 = vmatpush1.msra.mxu0 0.0
    %1993 = vmatprep.subr.mxu0 0.0
    %1994 = vmatpush1.msra.mxu0 0.0
    %1995 = vmatprep.subr.mxu0 0.0
    %1996 = vmatpush1.msra.mxu0 0.0
    %1997 = vmatprep.subr.mxu0 0.0
    %1998 = vmatpush1.msra.mxu0 0.0
    %1999 = vmatprep.subr.mxu0 0.0
    %2000 = vmatpush1.msra.mxu0 0.0
    %2001 = vmatprep.subr.mxu0 0.0
    %2002 = vmatpush1.msra.mxu0 0.0
    %2003 = vmatprep.subr.mxu0 0.0
    %2004 = vmatpush1.msra.mxu0 0.0
    %2005 = vmatprep.subr.mxu0 0.0
    %2006 = vmatpush1.msra.mxu0 0.0
    %2007 = vmatprep.subr.mxu0 0.0
    %2008 = vmatpush1.msra.mxu0 0.0
    %2009 = vmatprep.subr.mxu0 0.0
    %2010 = vmatpush1.msra.mxu0 0.0
    %2011 = vmatprep.subr.mxu0 0.0
    %2012 = vmatpush1.msra.mxu0 0.0
    %2013 = vmatprep.subr.mxu0 0.0
    %2014 = vmatpush1.msra.mxu0 0.0
    %2015 = vmatprep.subr.mxu0 0.0
    %2016 = vmatpush1.msra.mxu0 0.0
    %2017 = vmatprep.mubr.f32.mxu0 0.0
    %2018 = vmatmul.mubr.f32.gmra.mrb[0].mxu0 %v1948
    %v2019 = vpop.f32.mrb[0].mxu0
    %v2020 = vadd.f32 0.0, %v2019
    %v2021 = vpop.f32.mrb[0].mxu0
    %2022 = vmatprep.mubr.f32.mxu0 0.0
    %2023 = vmatmul.mubr.f32.gmra.mrb[0].mxu0 %v1951
    %v2024 = vpop.f32.mrb[0].mxu0
    %v2025 = vadd.f32 0.0, %v2024
    %v2026 = vpop.f32.mrb[0].mxu0
    %2027 = vdwg.mxu0
    %2032 = vrot.lane.b32.xlu0 %v1125, 8
    %v2033 = vpop.permute.xlu0 %2032
    %2034 = vrot.lane.b32.xlu0 %v1130, 8
    %v2035 = vpop.permute.xlu0 %2034
    %2036 = vrot.lane.b32.xlu0 %v1212, 8
    %v2037 = vpop.permute.xlu0 %2036
    %2038 = vrot.lane.b32.xlu0 %v1217, 8
    %v2039 = vpop.permute.xlu0 %2038
    %2048 = vrot.lane.b32.xlu0 %v1529, 16
    %v2049 = vpop.permute.xlu0 %2048
    %2050 = vrot.lane.b32.xlu0 %v1534, 16
    %v2051 = vpop.permute.xlu0 %2050
    %2052 = vrot.lane.b32.xlu0 %v1616, 16
    %v2053 = vpop.permute.xlu0 %2052
    %2054 = vrot.lane.b32.xlu0 %v1621, 16
    %v2055 = vpop.permute.xlu0 %2054
    %2064 = vrot.lane.b32.xlu0 %v1933, 24
    %v2065 = vpop.permute.xlu0 %2064
    %2066 = vrot.lane.b32.xlu0 %v1938, 24
    %v2067 = vpop.permute.xlu0 %2066
    %2068 = vrot.lane.b32.xlu0 %v2020, 24
    %v2069 = vpop.permute.xlu0 %2068
    %2070 = vrot.lane.b32.xlu0 %v2025, 24
    %v2071 = vpop.permute.xlu0 %2070
    %v2076 = vsel %vm420, %v721, %v2033
    %v2077 = vsel %vm420, %v726, %v2035
    %v2078 = vsel %vm420, %v808, %v2037
    %v2079 = vsel %vm420, %v813, %v2039
    %v2080 = vsel %vm597, %v2076, %v2049
    %v2081 = vsel %vm597, %v2077, %v2051
    %v2082 = vsel %vm597, %v2078, %v2053
    %v2083 = vsel %vm597, %v2079, %v2055
    %vm2084 = vcmask 195584
    %v2085 = vsel %vm2084, %v2080, %v2065
    %v2086 = vsel %vm2084, %v2081, %v2067
    %v2087 = vsel %vm2084, %v2082, %v2069
    %v2088 = vsel %vm2084, %v2083, %v2071
    %v2089 = vld [vmem:[%s6] sm:$0xff]
    %v2090 = vld [vmem:[%s6 + $0x8] sm:$0xff]
    %v2091 = vld [vmem:[%s6 + $0x10] sm:$0xff]
    %v2092 = vld [vmem:[%s6 + $0x18] sm:$0xff]
    %v2094 = vsel %vm316, %v2085, 0
    %v2097 = vsel %vm316, %v2086, 0
    %v2100 = vsel %vm316, %v2087, 0
    %v2103 = vsel %vm316, %v2088, 0
    %2105 = vmatprep.subr.mxu0 0.0
    %2106 = vmatpush1.msra.mxu0 %v2089
    %2107 = vmatprep.subr.mxu0 0.0
    %2108 = vmatpush1.msra.mxu0 %v2090
    %2109 = vmatprep.subr.mxu0 0.0
    %2110 = vmatpush1.msra.mxu0 %v2091
    %2111 = vmatprep.subr.mxu0 0.0
    %2112 = vmatpush1.msra.mxu0 %v2092
    %2113 = vmatprep.subr.mxu0 0.0
    %2114 = vmatpush1.msra.mxu0 0.0
    %2115 = vmatprep.subr.mxu0 0.0
    %2116 = vmatpush1.msra.mxu0 0.0
    %2117 = vmatprep.subr.mxu0 0.0
    %2118 = vmatpush1.msra.mxu0 0.0
    %2119 = vmatprep.subr.mxu0 0.0
    %2120 = vmatpush1.msra.mxu0 0.0
    %2121 = vmatprep.subr.mxu0 0.0
    %2122 = vmatpush1.msra.mxu0 0.0
    %2123 = vmatprep.subr.mxu0 0.0
    %2124 = vmatpush1.msra.mxu0 0.0
    %2125 = vmatprep.subr.mxu0 0.0
    %2126 = vmatpush1.msra.mxu0 0.0
    %2127 = vmatprep.subr.mxu0 0.0
    %2128 = vmatpush1.msra.mxu0 0.0
    %2129 = vmatprep.subr.mxu0 0.0
    %2130 = vmatpush1.msra.mxu0 0.0
    %2131 = vmatprep.subr.mxu0 0.0
    %2132 = vmatpush1.msra.mxu0 0.0
    %2133 = vmatprep.subr.mxu0 0.0
    %2134 = vmatpush1.msra.mxu0 0.0
    %2135 = vmatprep.subr.mxu0 0.0
    %2136 = vmatpush1.msra.mxu0 0.0
    %2137 = vmatprep.subr.mxu0 0.0
    %2138 = vmatpush1.msra.mxu0 0.0
    %2139 = vmatprep.subr.mxu0 0.0
    %2140 = vmatpush1.msra.mxu0 0.0
    %2141 = vmatprep.subr.mxu0 0.0
    %2142 = vmatpush1.msra.mxu0 0.0
    %2143 = vmatprep.subr.mxu0 0.0
    %2144 = vmatpush1.msra.mxu0 0.0
    %2145 = vmatprep.subr.mxu0 0.0
    %2146 = vmatpush1.msra.mxu0 0.0
    %2147 = vmatprep.subr.mxu0 0.0
    %2148 = vmatpush1.msra.mxu0 0.0
    %2149 = vmatprep.subr.mxu0 0.0
    %2150 = vmatpush1.msra.mxu0 0.0
    %2151 = vmatprep.subr.mxu0 0.0
    %2152 = vmatpush1.msra.mxu0 0.0
    %2153 = vmatprep.subr.mxu0 0.0
    %2154 = vmatpush1.msra.mxu0 0.0
    %2155 = vmatprep.subr.mxu0 0.0
    %2156 = vmatpush1.msra.mxu0 0.0
    %2157 = vmatprep.subr.mxu0 0.0
    %2158 = vmatpush1.msra.mxu0 0.0
    %2159 = vmatprep.subr.mxu0 0.0
    %2160 = vmatpush1.msra.mxu0 0.0
    %2161 = vmatprep.subr.mxu0 0.0
    %2162 = vmatpush1.msra.mxu0 0.0
    %2163 = vmatprep.subr.mxu0 0.0
    %2164 = vmatpush1.msra.mxu0 0.0
    %2165 = vmatprep.subr.mxu0 0.0
    %2166 = vmatpush1.msra.mxu0 0.0
    %2167 = vmatprep.subr.mxu0 0.0
    %2168 = vmatpush1.msra.mxu0 0.0
    %2169 = vmatprep.mubr.f32.mxu0 0.0
    %2170 = vmatmul.mubr.f32.gmra.mrb[0].mxu0 %v2094
    %v2171 = vpop.f32.mrb[0].mxu0
    %v2172 = vadd.f32 0.0, %v2171
    %v2173 = vpop.f32.mrb[0].mxu0
    %2174 = vmatprep.mubr.f32.mxu0 0.0
    %2175 = vmatmul.mubr.f32.gmra.mrb[0].mxu0 %v2097
    %v2176 = vpop.f32.mrb[0].mxu0
    %v2177 = vadd.f32 0.0, %v2176
    %v2178 = vpop.f32.mrb[0].mxu0
    %2179 = vmatprep.mubr.f32.mxu0 0.0
    %2180 = vmatmul.mubr.f32.gmra.mrb[0].mxu0 %v2100
    %v2181 = vpop.f32.mrb[0].mxu0
    %v2182 = vadd.f32 0.0, %v2181
    %v2183 = vpop.f32.mrb[0].mxu0
    %2184 = vmatprep.mubr.f32.mxu0 0.0
    %2185 = vmatmul.mubr.f32.gmra.mrb[0].mxu0 %v2103
    %v2186 = vpop.f32.mrb[0].mxu0
    %v2187 = vadd.f32 0.0, %v2186
    %v2188 = vpop.f32.mrb[0].mxu0
    %2189 = vdwg.mxu0
    %v2190 = vadd.f32 %v294, %v2172
    %v2191 = vadd.f32 %v299, %v2177
    %v2192 = vadd.f32 %v304, %v2182
    %v2193 = vadd.f32 %v309, %v2187
    %v2194 = vld [vmem:[#allocation10] sm:$0x1]
    %v2195 = vld [vmem:[#allocation11] sm:$0x1]
    %v2196 = vsel %vm316, %v2190, 0.0
    %2197 = vadd.xlane.f32.xlu0 %v2196
    %v2198 = vpop.xlane.xlu0 %2197
    %v2199 = vsel %vm316, %v2191, 0.0
    %2200 = vadd.xlane.f32.xlu0 %v2199
    %v2201 = vpop.xlane.xlu0 %2200
    %v2202 = vsel %vm316, %v2192, 0.0
    %2203 = vadd.xlane.f32.xlu0 %v2202
    %v2204 = vpop.xlane.xlu0 %2203
    %v2205 = vsel %vm316, %v2193, 0.0
    %2206 = vadd.xlane.f32.xlu0 %v2205
    %v2207 = vpop.xlane.xlu0 %2206
    %v2208 = vrcp.pop 32.0
    %v2209 = vmul.f32 %v2198, %v2208
    %v2210 = vmul.f32 %v2201, %v2208
    %v2211 = vmul.f32 %v2204, %v2208
    %v2212 = vmul.f32 %v2207, %v2208
    %v2213 = vsub.f32 %v2190, %v2209
    %v2214 = vsub.f32 %v2191, %v2210
    %v2215 = vsub.f32 %v2192, %v2211
    %v2216 = vsub.f32 %v2193, %v2212
    %v2217 = vmul.f32 %v2213, %v2213
    %v2218 = vmul.f32 %v2214, %v2214
    %v2219 = vmul.f32 %v2215, %v2215
    %v2220 = vmul.f32 %v2216, %v2216
    %v2221 = vsel %vm316, %v2217, 0.0
    %2222 = vadd.xlane.f32.xlu0 %v2221
    %v2223 = vpop.xlane.xlu0 %2222
    %v2224 = vsel %vm316, %v2218, 0.0
    %2225 = vadd.xlane.f32.xlu0 %v2224
    %v2226 = vpop.xlane.xlu0 %2225
    %v2227 = vsel %vm316, %v2219, 0.0
    %2228 = vadd.xlane.f32.xlu0 %v2227
    %v2229 = vpop.xlane.xlu0 %2228
    %v2230 = vsel %vm316, %v2220, 0.0
    %2231 = vadd.xlane.f32.xlu0 %v2230
    %v2232 = vpop.xlane.xlu0 %2231
    %v2233 = vmul.f32 %v2223, %v2208
    %v2234 = vmul.f32 %v2226, %v2208
    %v2235 = vmul.f32 %v2229, %v2208
    %v2236 = vmul.f32 %v2232, %v2208
    %v2237 = vadd.f32 %v2233, 1e-05
    %v2238 = vadd.f32 %v2234, 1e-05
    %v2239 = vadd.f32 %v2235, 1e-05
    %v2240 = vadd.f32 %v2236, 1e-05
    %v2241 = vrsqrt.pop %v2237
    %v2242 = vrsqrt.pop %v2238
    %v2243 = vrsqrt.pop %v2239
    %v2244 = vrsqrt.pop %v2240
    %v2245 = vmul.f32 %v2213, %v2241
    %v2246 = vmul.f32 %v2214, %v2242
    %v2247 = vmul.f32 %v2215, %v2243
    %v2248 = vmul.f32 %v2216, %v2244
    %v2250 = vlaneseq
    %v2251 = vshrl.u32 %v2250, 7
    %v2252 = vsub.s32 0, %v2251
    %v2253 = vrot.slane %v2194, %v2252
    %v2255 = vmul.f32 %v2245, %v2253
    %v2256 = vmul.f32 %v2246, %v2253
    %v2257 = vmul.f32 %v2247, %v2253
    %v2258 = vmul.f32 %v2248, %v2253
    %v2260 = vlaneseq
    %v2261 = vshrl.u32 %v2260, 7
    %v2262 = vsub.s32 0, %v2261
    %v2263 = vrot.slane %v2195, %v2262
    %v2265 = vadd.f32 %v2255, %v2263
    %v2266 = vadd.f32 %v2256, %v2263
    %v2267 = vadd.f32 %v2257, %v2263
    %v2268 = vadd.f32 %v2258, %v2263
    %v2269 = vld [vmem:[%s9] sm:$0xff]
    %v2270 = vld [vmem:[%s9 + $0x8] sm:$0xff]
    %v2271 = vld [vmem:[%s9 + $0x10] sm:$0xff]
    %v2272 = vld [vmem:[%s9 + $0x18] sm:$0xff]
    %v2273 = vld [vmem:[#allocation13] sm:$0x1]
    %v2275 = vlaneseq
    %v2276 = vshrl.u32 %v2275, 7
    %v2277 = vsub.s32 0, %v2276
    %v2278 = vrot.slane %v2273, %v2277
    %v2281 = vsel %vm316, %v2265, 0
    %v2284 = vsel %vm316, %v2266, 0
    %v2287 = vsel %vm316, %v2267, 0
    %v2290 = vsel %vm316, %v2268, 0
    %2292 = vmatprep.subr.mxu0 0.0
    %2293 = vmatpush1.msra.mxu0 %v2269
    %2294 = vmatprep.subr.mxu0 0.0
    %2295 = vmatpush1.msra.mxu0 %v2270
    %2296 = vmatprep.subr.mxu0 0.0
    %2297 = vmatpush1.msra.mxu0 %v2271
    %2298 = vmatprep.subr.mxu0 0.0
    %2299 = vmatpush1.msra.mxu0 %v2272
    %2300 = vmatprep.subr.mxu0 0.0
    %2301 = vmatpush1.msra.mxu0 0.0
    %2302 = vmatprep.subr.mxu0 0.0
    %2303 = vmatpush1.msra.mxu0 0.0
    %2304 = vmatprep.subr.mxu0 0.0
    %2305 = vmatpush1.msra.mxu0 0.0
    %2306 = vmatprep.subr.mxu0 0.0
    %2307 = vmatpush1.msra.mxu0 0.0
    %2308 = vmatprep.subr.mxu0 0.0
    %2309 = vmatpush1.msra.mxu0 0.0
    %2310 = vmatprep.subr.mxu0 0.0
    %2311 = vmatpush1.msra.mxu0 0.0
    %2312 = vmatprep.subr.mxu0 0.0
    %2313 = vmatpush1.msra.mxu0 0.0
    %2314 = vmatprep.subr.mxu0 0.0
    %2315 = vmatpush1.msra.mxu0 0.0
    %2316 = vmatprep.subr.mxu0 0.0
    %2317 = vmatpush1.msra.mxu0 0.0
    %2318 = vmatprep.subr.mxu0 0.0
    %2319 = vmatpush1.msra.mxu0 0.0
    %2320 = vmatprep.subr.mxu0 0.0
    %2321 = vmatpush1.msra.mxu0 0.0
    %2322 = vmatprep.subr.mxu0 0.0
    %2323 = vmatpush1.msra.mxu0 0.0
    %2324 = vmatprep.subr.mxu0 0.0
    %2325 = vmatpush1.msra.mxu0 0.0
    %2326 = vmatprep.subr.mxu0 0.0
    %2327 = vmatpush1.msra.mxu0 0.0
    %2328 = vmatprep.subr.mxu0 0.0
    %2329 = vmatpush1.msra.mxu0 0.0
    %2330 = vmatprep.subr.mxu0 0.0
    %2331 = vmatpush1.msra.mxu0 0.0
    %2332 = vmatprep.subr.mxu0 0.0
    %2333 = vmatpush1.msra.mxu0 0.0
    %2334 = vmatprep.subr.mxu0 0.0
    %2335 = vmatpush1.msra.mxu0 0.0
    %2336 = vmatprep.subr.mxu0 0.0
    %2337 = vmatpush1.msra.mxu0 0.0
    %2338 = vmatprep.subr.mxu0 0.0
    %2339 = vmatpush1.msra.mxu0 0.0
    %2340 = vmatprep.subr.mxu0 0.0
    %2341 = vmatpush1.msra.mxu0 0.0
    %2342 = vmatprep.subr.mxu0 0.0
    %2343 = vmatpush1.msra.mxu0 0.0
    %2344 = vmatprep.subr.mxu0 0.0
    %2345 = vmatpush1.msra.mxu0 0.0
    %2346 = vmatprep.subr.mxu0 0.0
    %2347 = vmatpush1.msra.mxu0 0.0
    %2348 = vmatprep.subr.mxu0 0.0
    %2349 = vmatpush1.msra.mxu0 0.0
    %2350 = vmatprep.subr.mxu0 0.0
    %2351 = vmatpush1.msra.mxu0 0.0
    %2352 = vmatprep.subr.mxu0 0.0
    %2353 = vmatpush1.msra.mxu0 0.0
    %2354 = vmatprep.subr.mxu0 0.0
    %2355 = vmatpush1.msra.mxu0 0.0
    %2356 = vmatprep.mubr.f32.mxu0 0.0
    %2357 = vmatmul.mubr.f32.gmra.mrb[0].mxu0 %v2281
    %v2358 = vpop.f32.mrb[0].mxu0
    %v2359 = vadd.f32 %v2278, %v2358
    %v2360 = vpop.f32.mrb[0].mxu0
    %2361 = vmatprep.mubr.f32.mxu0 0.0
    %2362 = vmatmul.mubr.f32.gmra.mrb[0].mxu0 %v2284
    %v2363 = vpop.f32.mrb[0].mxu0
    %v2364 = vadd.f32 %v2278, %v2363
    %v2365 = vpop.f32.mrb[0].mxu0
    %2366 = vmatprep.mubr.f32.mxu0 0.0
    %2367 = vmatmul.mubr.f32.gmra.mrb[0].mxu0 %v2287
    %v2368 = vpop.f32.mrb[0].mxu0
    %v2369 = vadd.f32 %v2278, %v2368
    %v2370 = vpop.f32.mrb[0].mxu0
    %2371 = vmatprep.mubr.f32.mxu0 0.0
    %2372 = vmatmul.mubr.f32.gmra.mrb[0].mxu0 %v2290
    %v2373 = vpop.f32.mrb[0].mxu0
    %v2374 = vadd.f32 %v2278, %v2373
    %v2375 = vpop.f32.mrb[0].mxu0
    %2376 = vdwg.mxu0
    %v2377 = vmax.f32 %v2359, 0.0
    %v2378 = vmax.f32 %v2364, 0.0
    %v2379 = vmax.f32 %v2369, 0.0
    %v2380 = vmax.f32 %v2374, 0.0
    %v2381 = vld [vmem:[%s11] sm:$0xff]
    %v2382 = vld [vmem:[%s11 + $0x8] sm:$0xff]
    %v2383 = vld [vmem:[%s11 + $0x10] sm:$0xff]
    %v2384 = vld [vmem:[%s11 + $0x18] sm:$0xff]
    %v2385 = vld [vmem:[%s11 + $0x20] sm:$0xff]
    %v2386 = vld [vmem:[%s11 + $0x28] sm:$0xff]
    %v2387 = vld [vmem:[%s11 + $0x30] sm:$0xff]
    %v2388 = vld [vmem:[%s11 + $0x38] sm:$0xff]
    %v2389 = vld [vmem:[#allocation14] sm:$0x1]
    %v2391 = vlaneseq
    %v2392 = vshrl.u32 %v2391, 7
    %v2393 = vsub.s32 0, %v2392
    %v2394 = vrot.slane %v2389, %v2393
    %vm2396 = vcmask 523264
    %v2398 = vsel %vm2396, %v2377, 0
    %v2401 = vsel %vm2396, %v2378, 0
    %v2404 = vsel %vm2396, %v2379, 0
    %v2407 = vsel %vm2396, %v2380, 0
    %2409 = vmatprep.subr.mxu0 0.0
    %2410 = vmatpush1.msra.mxu0 %v2381
    %2411 = vmatprep.subr.mxu0 0.0
    %2412 = vmatpush1.msra.mxu0 %v2382
    %2413 = vmatprep.subr.mxu0 0.0
    %2414 = vmatpush1.msra.mxu0 %v2383
    %2415 = vmatprep.subr.mxu0 0.0
    %2416 = vmatpush1.msra.mxu0 %v2384
    %2417 = vmatprep.subr.mxu0 0.0
    %2418 = vmatpush1.msra.mxu0 %v2385
    %2419 = vmatprep.subr.mxu0 0.0
    %2420 = vmatpush1.msra.mxu0 %v2386
    %2421 = vmatprep.subr.mxu0 0.0
    %2422 = vmatpush1.msra.mxu0 %v2387
    %2423 = vmatprep.subr.mxu0 0.0
    %2424 = vmatpush1.msra.mxu0 %v2388
    %2425 = vmatprep.subr.mxu0 0.0
    %2426 = vmatpush1.msra.mxu0 0.0
    %2427 = vmatprep.subr.mxu0 0.0
    %2428 = vmatpush1.msra.mxu0 0.0
    %2429 = vmatprep.subr.mxu0 0.0
    %2430 = vmatpush1.msra.mxu0 0.0
    %2431 = vmatprep.subr.mxu0 0.0
    %2432 = vmatpush1.msra.mxu0 0.0
    %2433 = vmatprep.subr.mxu0 0.0
    %2434 = vmatpush1.msra.mxu0 0.0
    %2435 = vmatprep.subr.mxu0 0.0
    %2436 = vmatpush1.msra.mxu0 0.0
    %2437 = vmatprep.subr.mxu0 0.0
    %2438 = vmatpush1.msra.mxu0 0.0
    %2439 = vmatprep.subr.mxu0 0.0
    %2440 = vmatpush1.msra.mxu0 0.0
    %2441 = vmatprep.subr.mxu0 0.0
    %2442 = vmatpush1.msra.mxu0 0.0
    %2443 = vmatprep.subr.mxu0 0.0
    %2444 = vmatpush1.msra.mxu0 0.0
    %2445 = vmatprep.subr.mxu0 0.0
    %2446 = vmatpush1.msra.mxu0 0.0
    %2447 = vmatprep.subr.mxu0 0.0
    %2448 = vmatpush1.msra.mxu0 0.0
    %2449 = vmatprep.subr.mxu0 0.0
    %2450 = vmatpush1.msra.mxu0 0.0
    %2451 = vmatprep.subr.mxu0 0.0
    %2452 = vmatpush1.msra.mxu0 0.0
    %2453 = vmatprep.subr.mxu0 0.0
    %2454 = vmatpush1.msra.mxu0 0.0
    %2455 = vmatprep.subr.mxu0 0.0
    %2456 = vmatpush1.msra.mxu0 0.0
    %2457 = vmatprep.subr.mxu0 0.0
    %2458 = vmatpush1.msra.mxu0 0.0
    %2459 = vmatprep.subr.mxu0 0.0
    %2460 = vmatpush1.msra.mxu0 0.0
    %2461 = vmatprep.subr.mxu0 0.0
    %2462 = vmatpush1.msra.mxu0 0.0
    %2463 = vmatprep.subr.mxu0 0.0
    %2464 = vmatpush1.msra.mxu0 0.0
    %2465 = vmatprep.subr.mxu0 0.0
    %2466 = vmatpush1.msra.mxu0 0.0
    %2467 = vmatprep.subr.mxu0 0.0
    %2468 = vmatpush1.msra.mxu0 0.0
    %2469 = vmatprep.subr.mxu0 0.0
    %2470 = vmatpush1.msra.mxu0 0.0
    %2471 = vmatprep.subr.mxu0 0.0
    %2472 = vmatpush1.msra.mxu0 0.0
    %2473 = vmatprep.mubr.f32.mxu0 0.0
    %2474 = vmatmul.mubr.f32.gmra.mrb[0].mxu0 %v2398
    %v2475 = vpop.f32.mrb[0].mxu0
    %v2476 = vadd.f32 %v2394, %v2475
    %v2477 = vpop.f32.mrb[0].mxu0
    %2478 = vmatprep.mubr.f32.mxu0 0.0
    %2479 = vmatmul.mubr.f32.gmra.mrb[0].mxu0 %v2401
    %v2480 = vpop.f32.mrb[0].mxu0
    %v2481 = vadd.f32 %v2394, %v2480
    %v2482 = vpop.f32.mrb[0].mxu0
    %2483 = vmatprep.mubr.f32.mxu0 0.0
    %2484 = vmatmul.mubr.f32.gmra.mrb[0].mxu0 %v2404
    %v2485 = vpop.f32.mrb[0].mxu0
    %v2486 = vadd.f32 %v2394, %v2485
    %v2487 = vpop.f32.mrb[0].mxu0
    %2488 = vmatprep.mubr.f32.mxu0 0.0
    %2489 = vmatmul.mubr.f32.gmra.mrb[0].mxu0 %v2407
    %v2490 = vpop.f32.mrb[0].mxu0
    %v2491 = vadd.f32 %v2394, %v2490
    %v2492 = vpop.f32.mrb[0].mxu0
    %2493 = vdwg.mxu0
    %v2494 = vadd.f32 %v2265, %v2476
    %v2495 = vadd.f32 %v2266, %v2481
    %v2496 = vadd.f32 %v2267, %v2486
    %v2497 = vadd.f32 %v2268, %v2491
    %v2498 = vld [vmem:[#allocation16] sm:$0x1]
    %v2499 = vld [vmem:[#allocation17] sm:$0x1]
    %v2500 = vsel %vm316, %v2494, 0.0
    %2501 = vadd.xlane.f32.xlu0 %v2500
    %v2502 = vpop.xlane.xlu0 %2501
    %v2503 = vsel %vm316, %v2495, 0.0
    %2504 = vadd.xlane.f32.xlu0 %v2503
    %v2505 = vpop.xlane.xlu0 %2504
    %v2506 = vsel %vm316, %v2496, 0.0
    %2507 = vadd.xlane.f32.xlu0 %v2506
    %v2508 = vpop.xlane.xlu0 %2507
    %v2509 = vsel %vm316, %v2497, 0.0
    %2510 = vadd.xlane.f32.xlu0 %v2509
    %v2511 = vpop.xlane.xlu0 %2510
    %v2512 = vmul.f32 %v2502, %v2208
    %v2513 = vmul.f32 %v2505, %v2208
    %v2514 = vmul.f32 %v2508, %v2208
    %v2515 = vmul.f32 %v2511, %v2208
    %v2516 = vsub.f32 %v2494, %v2512
    %v2517 = vsub.f32 %v2495, %v2513
    %v2518 = vsub.f32 %v2496, %v2514
    %v2519 = vsub.f32 %v2497, %v2515
    %v2520 = vmul.f32 %v2516, %v2516
    %v2521 = vmul.f32 %v2517, %v2517
    %v2522 = vmul.f32 %v2518, %v2518
    %v2523 = vmul.f32 %v2519, %v2519
    %v2524 = vsel %vm316, %v2520, 0.0
    %2525 = vadd.xlane.f32.xlu0 %v2524
    %v2526 = vpop.xlane.xlu0 %2525
    %v2527 = vsel %vm316, %v2521, 0.0
    %2528 = vadd.xlane.f32.xlu0 %v2527
    %v2529 = vpop.xlane.xlu0 %2528
    %v2530 = vsel %vm316, %v2522, 0.0
    %2531 = vadd.xlane.f32.xlu0 %v2530
    %v2532 = vpop.xlane.xlu0 %2531
    %v2533 = vsel %vm316, %v2523, 0.0
    %2534 = vadd.xlane.f32.xlu0 %v2533
    %v2535 = vpop.xlane.xlu0 %2534
    %v2536 = vmul.f32 %v2526, %v2208
    %v2537 = vmul.f32 %v2529, %v2208
    %v2538 = vmul.f32 %v2532, %v2208
    %v2539 = vmul.f32 %v2535, %v2208
    %v2540 = vadd.f32 %v2536, 1e-05
    %v2541 = vadd.f32 %v2537, 1e-05
    %v2542 = vadd.f32 %v2538, 1e-05
    %v2543 = vadd.f32 %v2539, 1e-05
    %v2544 = vrsqrt.pop %v2540
    %v2545 = vrsqrt.pop %v2541
    %v2546 = vrsqrt.pop %v2542
    %v2547 = vrsqrt.pop %v2543
    %v2548 = vmul.f32 %v2516, %v2544
    %v2549 = vmul.f32 %v2517, %v2545
    %v2550 = vmul.f32 %v2518, %v2546
    %v2551 = vmul.f32 %v2519, %v2547
    %v2553 = vlaneseq
    %v2554 = vshrl.u32 %v2553, 7
    %v2555 = vsub.s32 0, %v2554
    %v2556 = vrot.slane %v2498, %v2555
    %v2558 = vmul.f32 %v2548, %v2556
    %v2559 = vmul.f32 %v2549, %v2556
    %v2560 = vmul.f32 %v2550, %v2556
    %v2561 = vmul.f32 %v2551, %v2556
    %v2563 = vlaneseq
    %v2564 = vshrl.u32 %v2563, 7
    %v2565 = vsub.s32 0, %v2564
    %v2566 = vrot.slane %v2499, %v2565
    %v2568 = vadd.f32 %v2558, %v2566
    %v2569 = vadd.f32 %v2559, %v2566
    %v2570 = vadd.f32 %v2560, %v2566
    %v2571 = vadd.f32 %v2561, %v2566
    %s2572 = scalar_lea.vmem %s5, 32
    %v2573 = vld [vmem:[%s2572] sm:$0xff]
    %v2574 = vld [vmem:[%s2572 + $0x8] sm:$0xff]
    %v2575 = vld [vmem:[%s2572 + $0x10] sm:$0xff]
    %v2576 = vld [vmem:[%s2572 + $0x18] sm:$0xff]
    %v2578 = vsel %vm316, %v2568, 0
    %v2581 = vsel %vm316, %v2569, 0
    %v2584 = vsel %vm316, %v2570, 0
    %v2587 = vsel %vm316, %v2571, 0
    %2589 = vmatprep.subr.mxu0 0.0
    %2590 = vmatpush1.msra.mxu0 %v2573
    %2591 = vmatprep.subr.mxu0 0.0
    %2592 = vmatpush1.msra.mxu0 %v2574
    %2593 = vmatprep.subr.mxu0 0.0
    %2594 = vmatpush1.msra.mxu0 %v2575
    %2595 = vmatprep.subr.mxu0 0.0
    %2596 = vmatpush1.msra.mxu0 %v2576
    %2597 = vmatprep.subr.mxu0 0.0
    %2598 = vmatpush1.msra.mxu0 0.0
    %2599 = vmatprep.subr.mxu0 0.0
    %2600 = vmatpush1.msra.mxu0 0.0
    %2601 = vmatprep.subr.mxu0 0.0
    %2602 = vmatpush1.msra.mxu0 0.0
    %2603 = vmatprep.subr.mxu0 0.0
    %2604 = vmatpush1.msra.mxu0 0.0
    %2605 = vmatprep.subr.mxu0 0.0
    %2606 = vmatpush1.msra.mxu0 0.0
    %2607 = vmatprep.subr.mxu0 0.0
    %2608 = vmatpush1.msra.mxu0 0.0
    %2609 = vmatprep.subr.mxu0 0.0
    %2610 = vmatpush1.msra.mxu0 0.0
    %2611 = vmatprep.subr.mxu0 0.0
    %2612 = vmatpush1.msra.mxu0 0.0
    %2613 = vmatprep.subr.mxu0 0.0
    %2614 = vmatpush1.msra.mxu0 0.0
    %2615 = vmatprep.subr.mxu0 0.0
    %2616 = vmatpush1.msra.mxu0 0.0
    %2617 = vmatprep.subr.mxu0 0.0
    %2618 = vmatpush1.msra.mxu0 0.0
    %2619 = vmatprep.subr.mxu0 0.0
    %2620 = vmatpush1.msra.mxu0 0.0
    %2621 = vmatprep.subr.mxu0 0.0
    %2622 = vmatpush1.msra.mxu0 0.0
    %2623 = vmatprep.subr.mxu0 0.0
    %2624 = vmatpush1.msra.mxu0 0.0
    %2625 = vmatprep.subr.mxu0 0.0
    %2626 = vmatpush1.msra.mxu0 0.0
    %2627 = vmatprep.subr.mxu0 0.0
    %2628 = vmatpush1.msra.mxu0 0.0
    %2629 = vmatprep.subr.mxu0 0.0
    %2630 = vmatpush1.msra.mxu0 0.0
    %2631 = vmatprep.subr.mxu0 0.0
    %2632 = vmatpush1.msra.mxu0 0.0
    %2633 = vmatprep.subr.mxu0 0.0
    %2634 = vmatpush1.msra.mxu0 0.0
    %2635 = vmatprep.subr.mxu0 0.0
    %2636 = vmatpush1.msra.mxu0 0.0
    %2637 = vmatprep.subr.mxu0 0.0
    %2638 = vmatpush1.msra.mxu0 0.0
    %2639 = vmatprep.subr.mxu0 0.0
    %2640 = vmatpush1.msra.mxu0 0.0
    %2641 = vmatprep.subr.mxu0 0.0
    %2642 = vmatpush1.msra.mxu0 0.0
    %2643 = vmatprep.subr.mxu0 0.0
    %2644 = vmatpush1.msra.mxu0 0.0
    %2645 = vmatprep.subr.mxu0 0.0
    %2646 = vmatpush1.msra.mxu0 0.0
    %2647 = vmatprep.subr.mxu0 0.0
    %2648 = vmatpush1.msra.mxu0 0.0
    %2649 = vmatprep.subr.mxu0 0.0
    %2650 = vmatpush1.msra.mxu0 0.0
    %2651 = vmatprep.subr.mxu0 0.0
    %2652 = vmatpush1.msra.mxu0 0.0
    %2653 = vmatprep.mubr.f32.mxu0 0.0
    %2654 = vmatmul.mubr.f32.gmra.mrb[0].mxu0 %v2578
    %v2655 = vpop.f32.mrb[0].mxu0
    %v2656 = vadd.f32 0.0, %v2655
    %v2657 = vpop.f32.mrb[0].mxu0
    %2658 = vmatprep.mubr.f32.mxu0 0.0
    %2659 = vmatmul.mubr.f32.gmra.mrb[0].mxu0 %v2581
    %v2660 = vpop.f32.mrb[0].mxu0
    %v2661 = vadd.f32 0.0, %v2660
    %v2662 = vpop.f32.mrb[0].mxu0
    %2663 = vmatprep.mubr.f32.mxu0 0.0
    %2664 = vmatmul.mubr.f32.gmra.mrb[0].mxu0 %v2584
    %v2665 = vpop.f32.mrb[0].mxu0
    %v2666 = vadd.f32 0.0, %v2665
    %v2667 = vpop.f32.mrb[0].mxu0
    %2668 = vmatprep.mubr.f32.mxu0 0.0
    %2669 = vmatmul.mubr.f32.gmra.mrb[0].mxu0 %v2587
    %v2670 = vpop.f32.mrb[0].mxu0
    %v2671 = vadd.f32 0.0, %v2670
    %v2672 = vpop.f32.mrb[0].mxu0
    %2673 = vdwg.mxu0
    %2676 = vrot.lane.b32.xlu0 %v2656, 96
    %v2677 = vpop.permute.xlu0 %2676
    %2678 = vrot.lane.b32.xlu0 %v2661, 96
    %v2679 = vpop.permute.xlu0 %2678
    %v2680 = vsel %vm420, %v2656, 0
    %v2682 = vsel %vm420, %v2661, 0
    %v2684 = vsel %vm420, %v2677, 0
    %v2686 = vsel %vm420, %v2679, 0
    %2688 = vmatprep.subr.mxu0 0.0
    %2689 = vmatpush1.xpose.msra.mxu0 %v2684
    %2690 = vmatprep.subr.mxu0 0.0
    %2691 = vmatpush1.xpose.msra.mxu0 %v2686
    %2692 = vmatprep.subr.mxu0 0.0
    %2693 = vmatpush1.xpose.msra.mxu0 0.0
    %2694 = vmatprep.subr.mxu0 0.0
    %2695 = vmatpush1.xpose.msra.mxu0 0.0
    %2696 = vmatprep.subr.mxu0 0.0
    %2697 = vmatpush1.xpose.msra.mxu0 0.0
    %2698 = vmatprep.subr.mxu0 0.0
    %2699 = vmatpush1.xpose.msra.mxu0 0.0
    %2700 = vmatprep.subr.mxu0 0.0
    %2701 = vmatpush1.xpose.msra.mxu0 0.0
    %2702 = vmatprep.subr.mxu0 0.0
    %2703 = vmatpush1.xpose.msra.mxu0 0.0
    %2704 = vmatprep.subr.mxu0 0.0
    %2705 = vmatpush1.xpose.msra.mxu0 0.0
    %2706 = vmatprep.subr.mxu0 0.0
    %2707 = vmatpush1.xpose.msra.mxu0 0.0
    %2708 = vmatprep.subr.mxu0 0.0
    %2709 = vmatpush1.xpose.msra.mxu0 0.0
    %2710 = vmatprep.subr.mxu0 0.0
    %2711 = vmatpush1.xpose.msra.mxu0 0.0
    %2712 = vmatprep.subr.mxu0 0.0
    %2713 = vmatpush1.xpose.msra.mxu0 0.0
    %2714 = vmatprep.subr.mxu0 0.0
    %2715 = vmatpush1.xpose.msra.mxu0 0.0
    %2716 = vmatprep.subr.mxu0 0.0
    %2717 = vmatpush1.xpose.msra.mxu0 0.0
    %2718 = vmatprep.subr.mxu0 0.0
    %2719 = vmatpush1.xpose.msra.mxu0 0.0
    %2720 = vmatprep.subr.mxu0 0.0
    %2721 = vmatpush1.xpose.msra.mxu0 0.0
    %2722 = vmatprep.subr.mxu0 0.0
    %2723 = vmatpush1.xpose.msra.mxu0 0.0
    %2724 = vmatprep.subr.mxu0 0.0
    %2725 = vmatpush1.xpose.msra.mxu0 0.0
    %2726 = vmatprep.subr.mxu0 0.0
    %2727 = vmatpush1.xpose.msra.mxu0 0.0
    %2728 = vmatprep.subr.mxu0 0.0
    %2729 = vmatpush1.xpose.msra.mxu0 0.0
    %2730 = vmatprep.subr.mxu0 0.0
    %2731 = vmatpush1.xpose.msra.mxu0 0.0
    %2732 = vmatprep.subr.mxu0 0.0
    %2733 = vmatpush1.xpose.msra.mxu0 0.0
    %2734 = vmatprep.subr.mxu0 0.0
    %2735 = vmatpush1.xpose.msra.mxu0 0.0
    %2736 = vmatprep.subr.mxu0 0.0
    %2737 = vmatpush1.xpose.msra.mxu0 0.0
    %2738 = vmatprep.subr.mxu0 0.0
    %2739 = vmatpush1.xpose.msra.mxu0 0.0
    %2740 = vmatprep.subr.mxu0 0.0
    %2741 = vmatpush1.xpose.msra.mxu0 0.0
    %2742 = vmatprep.subr.mxu0 0.0
    %2743 = vmatpush1.xpose.msra.mxu0 0.0
    %2744 = vmatprep.subr.mxu0 0.0
    %2745 = vmatpush1.xpose.msra.mxu0 0.0
    %2746 = vmatprep.subr.mxu0 0.0
    %2747 = vmatpush1.xpose.msra.mxu0 0.0
    %2748 = vmatprep.subr.mxu0 0.0
    %2749 = vmatpush1.xpose.msra.mxu0 0.0
    %2750 = vmatprep.subr.mxu0 0.0
    %2751 = vmatpush1.xpose.msra.mxu0 0.0
    %2752 = vmatprep.mubr.f32.mxu0 0.0
    %2753 = vmatmul.mubr.f32.gmra.mrb[0].mxu0 %v2680
    %v2754 = vpop.f32.mrb[0].mxu0
    %v2755 = vadd.f32 0.0, %v2754
    %v2756 = vpop.f32.mrb[0].mxu0
    %2757 = vmatprep.mubr.f32.mxu0 0.0
    %2758 = vmatmul.mubr.f32.gmra.mrb[0].mxu0 %v2682
    %v2759 = vpop.f32.mrb[0].mxu0
    %v2760 = vadd.f32 0.0, %v2759
    %v2761 = vpop.f32.mrb[0].mxu0
    %2762 = vdwg.mxu0
    %2765 = vrot.lane.b32.xlu0 %v2666, 96
    %v2766 = vpop.permute.xlu0 %2765
    %2767 = vrot.lane.b32.xlu0 %v2671, 96
    %v2768 = vpop.permute.xlu0 %2767
    %v2769 = vsel %vm420, %v2666, 0
    %v2771 = vsel %vm420, %v2671, 0
    %v2773 = vsel %vm420, %v2766, 0
    %v2775 = vsel %vm420, %v2768, 0
    %2777 = vmatprep.subr.mxu0 0.0
    %2778 = vmatpush1.xpose.msra.mxu0 %v2773
    %2779 = vmatprep.subr.mxu0 0.0
    %2780 = vmatpush1.xpose.msra.mxu0 %v2775
    %2781 = vmatprep.subr.mxu0 0.0
    %2782 = vmatpush1.xpose.msra.mxu0 0.0
    %2783 = vmatprep.subr.mxu0 0.0
    %2784 = vmatpush1.xpose.msra.mxu0 0.0
    %2785 = vmatprep.subr.mxu0 0.0
    %2786 = vmatpush1.xpose.msra.mxu0 0.0
    %2787 = vmatprep.subr.mxu0 0.0
    %2788 = vmatpush1.xpose.msra.mxu0 0.0
    %2789 = vmatprep.subr.mxu0 0.0
    %2790 = vmatpush1.xpose.msra.mxu0 0.0
    %2791 = vmatprep.subr.mxu0 0.0
    %2792 = vmatpush1.xpose.msra.mxu0 0.0
    %2793 = vmatprep.subr.mxu0 0.0
    %2794 = vmatpush1.xpose.msra.mxu0 0.0
    %2795 = vmatprep.subr.mxu0 0.0
    %2796 = vmatpush1.xpose.msra.mxu0 0.0
    %2797 = vmatprep.subr.mxu0 0.0
    %2798 = vmatpush1.xpose.msra.mxu0 0.0
    %2799 = vmatprep.subr.mxu0 0.0
    %2800 = vmatpush1.xpose.msra.mxu0 0.0
    %2801 = vmatprep.subr.mxu0 0.0
    %2802 = vmatpush1.xpose.msra.mxu0 0.0
    %2803 = vmatprep.subr.mxu0 0.0
    %2804 = vmatpush1.xpose.msra.mxu0 0.0
    %2805 = vmatprep.subr.mxu0 0.0
    %2806 = vmatpush1.xpose.msra.mxu0 0.0
    %2807 = vmatprep.subr.mxu0 0.0
    %2808 = vmatpush1.xpose.msra.mxu0 0.0
    %2809 = vmatprep.subr.mxu0 0.0
    %2810 = vmatpush1.xpose.msra.mxu0 0.0
    %2811 = vmatprep.subr.mxu0 0.0
    %2812 = vmatpush1.xpose.msra.mxu0 0.0
    %2813 = vmatprep.subr.mxu0 0.0
    %2814 = vmatpush1.xpose.msra.mxu0 0.0
    %2815 = vmatprep.subr.mxu0 0.0
    %2816 = vmatpush1.xpose.msra.mxu0 0.0
    %2817 = vmatprep.subr.mxu0 0.0
    %2818 = vmatpush1.xpose.msra.mxu0 0.0
    %2819 = vmatprep.subr.mxu0 0.0
    %2820 = vmatpush1.xpose.msra.mxu0 0.0
    %2821 = vmatprep.subr.mxu0 0.0
    %2822 = vmatpush1.xpose.msra.mxu0 0.0
    %2823 = vmatprep.subr.mxu0 0.0
    %2824 = vmatpush1.xpose.msra.mxu0 0.0
    %2825 = vmatprep.subr.mxu0 0.0
    %2826 = vmatpush1.xpose.msra.mxu0 0.0
    %2827 = vmatprep.subr.mxu0 0.0
    %2828 = vmatpush1.xpose.msra.mxu0 0.0
    %2829 = vmatprep.subr.mxu0 0.0
    %2830 = vmatpush1.xpose.msra.mxu0 0.0
    %2831 = vmatprep.subr.mxu0 0.0
    %2832 = vmatpush1.xpose.msra.mxu0 0.0
    %2833 = vmatprep.subr.mxu0 0.0
    %2834 = vmatpush1.xpose.msra.mxu0 0.0
    %2835 = vmatprep.subr.mxu0 0.0
    %2836 = vmatpush1.xpose.msra.mxu0 0.0
    %2837 = vmatprep.subr.mxu0 0.0
    %2838 = vmatpush1.xpose.msra.mxu0 0.0
    %2839 = vmatprep.subr.mxu0 0.0
    %2840 = vmatpush1.xpose.msra.mxu0 0.0
    %2841 = vmatprep.mubr.f32.mxu0 0.0
    %2842 = vmatmul.mubr.f32.gmra.mrb[0].mxu0 %v2769
    %v2843 = vpop.f32.mrb[0].mxu0
    %v2844 = vadd.f32 0.0, %v2843
    %v2845 = vpop.f32.mrb[0].mxu0
    %2846 = vmatprep.mubr.f32.mxu0 0.0
    %2847 = vmatmul.mubr.f32.gmra.mrb[0].mxu0 %v2771
    %v2848 = vpop.f32.mrb[0].mxu0
    %v2849 = vadd.f32 0.0, %v2848
    %v2850 = vpop.f32.mrb[0].mxu0
    %2851 = vdwg.mxu0
    %v2852 = vmul.f32 %v2755, 0.35355338
    %v2853 = vmul.f32 %v2760, 0.35355338
    %v2854 = vmul.f32 %v2844, 0.35355338
    %v2855 = vmul.f32 %v2849, 0.35355338
    %v2856 = vsel %vm597, %v2852, -inf
    %2857 = vmax.xlane.f32.xlu0 %v2856
    %v2858 = vpop.xlane.xlu0 %2857
    %v2859 = vsel %vm597, %v2853, -inf
    %2860 = vmax.xlane.f32.xlu0 %v2859
    %v2861 = vpop.xlane.xlu0 %2860
    %v2862 = vsel %vm597, %v2854, -inf
    %2863 = vmax.xlane.f32.xlu0 %v2862
    %v2864 = vpop.xlane.xlu0 %2863
    %v2865 = vsel %vm597, %v2855, -inf
    %2866 = vmax.xlane.f32.xlu0 %v2865
    %v2867 = vpop.xlane.xlu0 %2866
    %v2868 = vsub.f32 %v2852, %v2858
    %v2869 = vsub.f32 %v2853, %v2861
    %v2870 = vsub.f32 %v2854, %v2864
    %v2871 = vsub.f32 %v2855, %v2867
    %v2872 = vmul.f32 %v2868, 1.442695
    %v2873 = vpow.pop %v2872
    %v2874 = vmul.f32 %v2869, 1.442695
    %v2875 = vpow.pop %v2874
    %v2876 = vmul.f32 %v2870, 1.442695
    %v2877 = vpow.pop %v2876
    %v2878 = vmul.f32 %v2871, 1.442695
    %v2879 = vpow.pop %v2878
    %v2880 = vsel %vm597, %v2873, 0.0
    %2881 = vadd.xlane.f32.xlu0 %v2880
    %v2882 = vpop.xlane.xlu0 %2881
    %v2883 = vsel %vm597, %v2875, 0.0
    %2884 = vadd.xlane.f32.xlu0 %v2883
    %v2885 = vpop.xlane.xlu0 %2884
    %v2886 = vsel %vm597, %v2877, 0.0
    %2887 = vadd.xlane.f32.xlu0 %v2886
    %v2888 = vpop.xlane.xlu0 %2887
    %v2889 = vsel %vm597, %v2879, 0.0
    %2890 = vadd.xlane.f32.xlu0 %v2889
    %v2891 = vpop.xlane.xlu0 %2890
    %v2892 = vrcp.pop %v2882
    %v2893 = vrcp.pop %v2885
    %v2894 = vrcp.pop %v2888
    %v2895 = vrcp.pop %v2891
    %v2896 = vmul.f32 %v2873, %v2892
    %v2897 = vmul.f32 %v2875, %v2893
    %v2898 = vmul.f32 %v2877, %v2894
    %v2899 = vmul.f32 %v2879, %v2895
    %2900 = vrot.lane.b32.xlu0 %v2656, 64
    %v2901 = vpop.permute.xlu0 %2900
    %2902 = vrot.lane.b32.xlu0 %v2661, 64
    %v2903 = vpop.permute.xlu0 %2902
    %v2907 = vsel %vm597, %v2896, 0
    %v2910 = vsel %vm597, %v2897, 0
    %2912 = vmatprep.subr.mxu0 0.0
    %2913 = vmatpush1.msra.mxu0 %v2901
    %2914 = vmatprep.subr.mxu0 0.0
    %2915 = vmatpush1.msra.mxu0 %v2903
    %2916 = vmatprep.subr.mxu0 0.0
    %2917 = vmatpush1.msra.mxu0 0.0
    %2918 = vmatprep.subr.mxu0 0.0
    %2919 = vmatpush1.msra.mxu0 0.0
    %2920 = vmatprep.subr.mxu0 0.0
    %2921 = vmatpush1.msra.mxu0 0.0
    %2922 = vmatprep.subr.mxu0 0.0
    %2923 = vmatpush1.msra.mxu0 0.0
    %2924 = vmatprep.subr.mxu0 0.0
    %2925 = vmatpush1.msra.mxu0 0.0
    %2926 = vmatprep.subr.mxu0 0.0
    %2927 = vmatpush1.msra.mxu0 0.0
    %2928 = vmatprep.subr.mxu0 0.0
    %2929 = vmatpush1.msra.mxu0 0.0
    %2930 = vmatprep.subr.mxu0 0.0
    %2931 = vmatpush1.msra.mxu0 0.0
    %2932 = vmatprep.subr.mxu0 0.0
    %2933 = vmatpush1.msra.mxu0 0.0
    %2934 = vmatprep.subr.mxu0 0.0
    %2935 = vmatpush1.msra.mxu0 0.0
    %2936 = vmatprep.subr.mxu0 0.0
    %2937 = vmatpush1.msra.mxu0 0.0
    %2938 = vmatprep.subr.mxu0 0.0
    %2939 = vmatpush1.msra.mxu0 0.0
    %2940 = vmatprep.subr.mxu0 0.0
    %2941 = vmatpush1.msra.mxu0 0.0
    %2942 = vmatprep.subr.mxu0 0.0
    %2943 = vmatpush1.msra.mxu0 0.0
    %2944 = vmatprep.subr.mxu0 0.0
    %2945 = vmatpush1.msra.mxu0 0.0
    %2946 = vmatprep.subr.mxu0 0.0
    %2947 = vmatpush1.msra.mxu0 0.0
    %2948 = vmatprep.subr.mxu0 0.0
    %2949 = vmatpush1.msra.mxu0 0.0
    %2950 = vmatprep.subr.mxu0 0.0
    %2951 = vmatpush1.msra.mxu0 0.0
    %2952 = vmatprep.subr.mxu0 0.0
    %2953 = vmatpush1.msra.mxu0 0.0
    %2954 = vmatprep.subr.mxu0 0.0
    %2955 = vmatpush1.msra.mxu0 0.0
    %2956 = vmatprep.subr.mxu0 0.0
    %2957 = vmatpush1.msra.mxu0 0.0
    %2958 = vmatprep.subr.mxu0 0.0
    %2959 = vmatpush1.msra.mxu0 0.0
    %2960 = vmatprep.subr.mxu0 0.0
    %2961 = vmatpush1.msra.mxu0 0.0
    %2962 = vmatprep.subr.mxu0 0.0
    %2963 = vmatpush1.msra.mxu0 0.0
    %2964 = vmatprep.subr.mxu0 0.0
    %2965 = vmatpush1.msra.mxu0 0.0
    %2966 = vmatprep.subr.mxu0 0.0
    %2967 = vmatpush1.msra.mxu0 0.0
    %2968 = vmatprep.subr.mxu0 0.0
    %2969 = vmatpush1.msra.mxu0 0.0
    %2970 = vmatprep.subr.mxu0 0.0
    %2971 = vmatpush1.msra.mxu0 0.0
    %2972 = vmatprep.subr.mxu0 0.0
    %2973 = vmatpush1.msra.mxu0 0.0
    %2974 = vmatprep.subr.mxu0 0.0
    %2975 = vmatpush1.msra.mxu0 0.0
    %2976 = vmatprep.mubr.f32.mxu0 0.0
    %2977 = vmatmul.mubr.f32.gmra.mrb[0].mxu0 %v2907
    %v2978 = vpop.f32.mrb[0].mxu0
    %v2979 = vadd.f32 0.0, %v2978
    %v2980 = vpop.f32.mrb[0].mxu0
    %2981 = vmatprep.mubr.f32.mxu0 0.0
    %2982 = vmatmul.mubr.f32.gmra.mrb[0].mxu0 %v2910
    %v2983 = vpop.f32.mrb[0].mxu0
    %v2984 = vadd.f32 0.0, %v2983
    %v2985 = vpop.f32.mrb[0].mxu0
    %2986 = vdwg.mxu0
    %2987 = vrot.lane.b32.xlu0 %v2666, 64
    %v2988 = vpop.permute.xlu0 %2987
    %2989 = vrot.lane.b32.xlu0 %v2671, 64
    %v2990 = vpop.permute.xlu0 %2989
    %v2994 = vsel %vm597, %v2898, 0
    %v2997 = vsel %vm597, %v2899, 0
    %2999 = vmatprep.subr.mxu0 0.0
    %3000 = vmatpush1.msra.mxu0 %v2988
    %3001 = vmatprep.subr.mxu0 0.0
    %3002 = vmatpush1.msra.mxu0 %v2990
    %3003 = vmatprep.subr.mxu0 0.0
    %3004 = vmatpush1.msra.mxu0 0.0
    %3005 = vmatprep.subr.mxu0 0.0
    %3006 = vmatpush1.msra.mxu0 0.0
    %3007 = vmatprep.subr.mxu0 0.0
    %3008 = vmatpush1.msra.mxu0 0.0
    %3009 = vmatprep.subr.mxu0 0.0
    %3010 = vmatpush1.msra.mxu0 0.0
    %3011 = vmatprep.subr.mxu0 0.0
    %3012 = vmatpush1.msra.mxu0 0.0
    %3013 = vmatprep.subr.mxu0 0.0
    %3014 = vmatpush1.msra.mxu0 0.0
    %3015 = vmatprep.subr.mxu0 0.0
    %3016 = vmatpush1.msra.mxu0 0.0
    %3017 = vmatprep.subr.mxu0 0.0
    %3018 = vmatpush1.msra.mxu0 0.0
    %3019 = vmatprep.subr.mxu0 0.0
    %3020 = vmatpush1.msra.mxu0 0.0
    %3021 = vmatprep.subr.mxu0 0.0
    %3022 = vmatpush1.msra.mxu0 0.0
    %3023 = vmatprep.subr.mxu0 0.0
    %3024 = vmatpush1.msra.mxu0 0.0
    %3025 = vmatprep.subr.mxu0 0.0
    %3026 = vmatpush1.msra.mxu0 0.0
    %3027 = vmatprep.subr.mxu0 0.0
    %3028 = vmatpush1.msra.mxu0 0.0
    %3029 = vmatprep.subr.mxu0 0.0
    %3030 = vmatpush1.msra.mxu0 0.0
    %3031 = vmatprep.subr.mxu0 0.0
    %3032 = vmatpush1.msra.mxu0 0.0
    %3033 = vmatprep.subr.mxu0 0.0
    %3034 = vmatpush1.msra.mxu0 0.0
    %3035 = vmatprep.subr.mxu0 0.0
    %3036 = vmatpush1.msra.mxu0 0.0
    %3037 = vmatprep.subr.mxu0 0.0
    %3038 = vmatpush1.msra.mxu0 0.0
    %3039 = vmatprep.subr.mxu0 0.0
    %3040 = vmatpush1.msra.mxu0 0.0
    %3041 = vmatprep.subr.mxu0 0.0
    %3042 = vmatpush1.msra.mxu0 0.0
    %3043 = vmatprep.subr.mxu0 0.0
    %3044 = vmatpush1.msra.mxu0 0.0
    %3045 = vmatprep.subr.mxu0 0.0
    %3046 = vmatpush1.msra.mxu0 0.0
    %3047 = vmatprep.subr.mxu0 0.0
    %3048 = vmatpush1.msra.mxu0 0.0
    %3049 = vmatprep.subr.mxu0 0.0
    %3050 = vmatpush1.msra.mxu0 0.0
    %3051 = vmatprep.subr.mxu0 0.0
    %3052 = vmatpush1.msra.mxu0 0.0
    %3053 = vmatprep.subr.mxu0 0.0
    %3054 = vmatpush1.msra.mxu0 0.0
    %3055 = vmatprep.subr.mxu0 0.0
    %3056 = vmatpush1.msra.mxu0 0.0
    %3057 = vmatprep.subr.mxu0 0.0
    %3058 = vmatpush1.msra.mxu0 0.0
    %3059 = vmatprep.subr.mxu0 0.0
    %3060 = vmatpush1.msra.mxu0 0.0
    %3061 = vmatprep.subr.mxu0 0.0
    %3062 = vmatpush1.msra.mxu0 0.0
    %3063 = vmatprep.mubr.f32.mxu0 0.0
    %3064 = vmatmul.mubr.f32.gmra.mrb[0].mxu0 %v2994
    %v3065 = vpop.f32.mrb[0].mxu0
    %v3066 = vadd.f32 0.0, %v3065
    %v3067 = vpop.f32.mrb[0].mxu0
    %3068 = vmatprep.mubr.f32.mxu0 0.0
    %3069 = vmatmul.mubr.f32.gmra.mrb[0].mxu0 %v2997
    %v3070 = vpop.f32.mrb[0].mxu0
    %v3071 = vadd.f32 0.0, %v3070
    %v3072 = vpop.f32.mrb[0].mxu0
    %3073 = vdwg.mxu0
    %3074 = vrot.lane.b32.xlu0 %v2656, 120
    %v3075 = vpop.permute.xlu0 %3074
    %3076 = vrot.lane.b32.xlu0 %v2661, 120
    %v3077 = vpop.permute.xlu0 %3076
    %3078 = vrot.lane.b32.xlu0 %v2656, 88
    %v3079 = vpop.permute.xlu0 %3078
    %3080 = vrot.lane.b32.xlu0 %v2661, 88
    %v3081 = vpop.permute.xlu0 %3080
    %v3082 = vsel %vm420, %v3075, 0
    %v3084 = vsel %vm420, %v3077, 0
    %v3086 = vsel %vm420, %v3079, 0
    %v3088 = vsel %vm420, %v3081, 0
    %3090 = vmatprep.subr.mxu0 0.0
    %3091 = vmatpush1.xpose.msra.mxu0 %v3086
    %3092 = vmatprep.subr.mxu0 0.0
    %3093 = vmatpush1.xpose.msra.mxu0 %v3088
    %3094 = vmatprep.subr.mxu0 0.0
    %3095 = vmatpush1.xpose.msra.mxu0 0.0
    %3096 = vmatprep.subr.mxu0 0.0
    %3097 = vmatpush1.xpose.msra.mxu0 0.0
    %3098 = vmatprep.subr.mxu0 0.0
    %3099 = vmatpush1.xpose.msra.mxu0 0.0
    %3100 = vmatprep.subr.mxu0 0.0
    %3101 = vmatpush1.xpose.msra.mxu0 0.0
    %3102 = vmatprep.subr.mxu0 0.0
    %3103 = vmatpush1.xpose.msra.mxu0 0.0
    %3104 = vmatprep.subr.mxu0 0.0
    %3105 = vmatpush1.xpose.msra.mxu0 0.0
    %3106 = vmatprep.subr.mxu0 0.0
    %3107 = vmatpush1.xpose.msra.mxu0 0.0
    %3108 = vmatprep.subr.mxu0 0.0
    %3109 = vmatpush1.xpose.msra.mxu0 0.0
    %3110 = vmatprep.subr.mxu0 0.0
    %3111 = vmatpush1.xpose.msra.mxu0 0.0
    %3112 = vmatprep.subr.mxu0 0.0
    %3113 = vmatpush1.xpose.msra.mxu0 0.0
    %3114 = vmatprep.subr.mxu0 0.0
    %3115 = vmatpush1.xpose.msra.mxu0 0.0
    %3116 = vmatprep.subr.mxu0 0.0
    %3117 = vmatpush1.xpose.msra.mxu0 0.0
    %3118 = vmatprep.subr.mxu0 0.0
    %3119 = vmatpush1.xpose.msra.mxu0 0.0
    %3120 = vmatprep.subr.mxu0 0.0
    %3121 = vmatpush1.xpose.msra.mxu0 0.0
    %3122 = vmatprep.subr.mxu0 0.0
    %3123 = vmatpush1.xpose.msra.mxu0 0.0
    %3124 = vmatprep.subr.mxu0 0.0
    %3125 = vmatpush1.xpose.msra.mxu0 0.0
    %3126 = vmatprep.subr.mxu0 0.0
    %3127 = vmatpush1.xpose.msra.mxu0 0.0
    %3128 = vmatprep.subr.mxu0 0.0
    %3129 = vmatpush1.xpose.msra.mxu0 0.0
    %3130 = vmatprep.subr.mxu0 0.0
    %3131 = vmatpush1.xpose.msra.mxu0 0.0
    %3132 = vmatprep.subr.mxu0 0.0
    %3133 = vmatpush1.xpose.msra.mxu0 0.0
    %3134 = vmatprep.subr.mxu0 0.0
    %3135 = vmatpush1.xpose.msra.mxu0 0.0
    %3136 = vmatprep.subr.mxu0 0.0
    %3137 = vmatpush1.xpose.msra.mxu0 0.0
    %3138 = vmatprep.subr.mxu0 0.0
    %3139 = vmatpush1.xpose.msra.mxu0 0.0
    %3140 = vmatprep.subr.mxu0 0.0
    %3141 = vmatpush1.xpose.msra.mxu0 0.0
    %3142 = vmatprep.subr.mxu0 0.0
    %3143 = vmatpush1.xpose.msra.mxu0 0.0
    %3144 = vmatprep.subr.mxu0 0.0
    %3145 = vmatpush1.xpose.msra.mxu0 0.0
    %3146 = vmatprep.subr.mxu0 0.0
    %3147 = vmatpush1.xpose.msra.mxu0 0.0
    %3148 = vmatprep.subr.mxu0 0.0
    %3149 = vmatpush1.xpose.msra.mxu0 0.0
    %3150 = vmatprep.subr.mxu0 0.0
    %3151 = vmatpush1.xpose.msra.mxu0 0.0
    %3152 = vmatprep.subr.mxu0 0.0
    %3153 = vmatpush1.xpose.msra.mxu0 0.0
    %3154 = vmatprep.mubr.f32.mxu0 0.0
    %3155 = vmatmul.mubr.f32.gmra.mrb[0].mxu0 %v3082
    %v3156 = vpop.f32.mrb[0].mxu0
    %v3157 = vadd.f32 0.0, %v3156
    %v3158 = vpop.f32.mrb[0].mxu0
    %3159 = vmatprep.mubr.f32.mxu0 0.0
    %3160 = vmatmul.mubr.f32.gmra.mrb[0].mxu0 %v3084
    %v3161 = vpop.f32.mrb[0].mxu0
    %v3162 = vadd.f32 0.0, %v3161
    %v3163 = vpop.f32.mrb[0].mxu0
    %3164 = vdwg.mxu0
    %3165 = vrot.lane.b32.xlu0 %v2666, 120
    %v3166 = vpop.permute.xlu0 %3165
    %3167 = vrot.lane.b32.xlu0 %v2671, 120
    %v3168 = vpop.permute.xlu0 %3167
    %3169 = vrot.lane.b32.xlu0 %v2666, 88
    %v3170 = vpop.permute.xlu0 %3169
    %3171 = vrot.lane.b32.xlu0 %v2671, 88
    %v3172 = vpop.permute.xlu0 %3171
    %v3173 = vsel %vm420, %v3166, 0
    %v3175 = vsel %vm420, %v3168, 0
    %v3177 = vsel %vm420, %v3170, 0
    %v3179 = vsel %vm420, %v3172, 0
    %3181 = vmatprep.subr.mxu0 0.0
    %3182 = vmatpush1.xpose.msra.mxu0 %v3177
    %3183 = vmatprep.subr.mxu0 0.0
    %3184 = vmatpush1.xpose.msra.mxu0 %v3179
    %3185 = vmatprep.subr.mxu0 0.0
    %3186 = vmatpush1.xpose.msra.mxu0 0.0
    %3187 = vmatprep.subr.mxu0 0.0
    %3188 = vmatpush1.xpose.msra.mxu0 0.0
    %3189 = vmatprep.subr.mxu0 0.0
    %3190 = vmatpush1.xpose.msra.mxu0 0.0
    %3191 = vmatprep.subr.mxu0 0.0
    %3192 = vmatpush1.xpose.msra.mxu0 0.0
    %3193 = vmatprep.subr.mxu0 0.0
    %3194 = vmatpush1.xpose.msra.mxu0 0.0
    %3195 = vmatprep.subr.mxu0 0.0
    %3196 = vmatpush1.xpose.msra.mxu0 0.0
    %3197 = vmatprep.subr.mxu0 0.0
    %3198 = vmatpush1.xpose.msra.mxu0 0.0
    %3199 = vmatprep.subr.mxu0 0.0
    %3200 = vmatpush1.xpose.msra.mxu0 0.0
    %3201 = vmatprep.subr.mxu0 0.0
    %3202 = vmatpush1.xpose.msra.mxu0 0.0
    %3203 = vmatprep.subr.mxu0 0.0
    %3204 = vmatpush1.xpose.msra.mxu0 0.0
    %3205 = vmatprep.subr.mxu0 0.0
    %3206 = vmatpush1.xpose.msra.mxu0 0.0
    %3207 = vmatprep.subr.mxu0 0.0
    %3208 = vmatpush1.xpose.msra.mxu0 0.0
    %3209 = vmatprep.subr.mxu0 0.0
    %3210 = vmatpush1.xpose.msra.mxu0 0.0
    %3211 = vmatprep.subr.mxu0 0.0
    %3212 = vmatpush1.xpose.msra.mxu0 0.0
    %3213 = vmatprep.subr.mxu0 0.0
    %3214 = vmatpush1.xpose.msra.mxu0 0.0
    %3215 = vmatprep.subr.mxu0 0.0
    %3216 = vmatpush1.xpose.msra.mxu0 0.0
    %3217 = vmatprep.subr.mxu0 0.0
    %3218 = vmatpush1.xpose.msra.mxu0 0.0
    %3219 = vmatprep.subr.mxu0 0.0
    %3220 = vmatpush1.xpose.msra.mxu0 0.0
    %3221 = vmatprep.subr.mxu0 0.0
    %3222 = vmatpush1.xpose.msra.mxu0 0.0
    %3223 = vmatprep.subr.mxu0 0.0
    %3224 = vmatpush1.xpose.msra.mxu0 0.0
    %3225 = vmatprep.subr.mxu0 0.0
    %3226 = vmatpush1.xpose.msra.mxu0 0.0
    %3227 = vmatprep.subr.mxu0 0.0
    %3228 = vmatpush1.xpose.msra.mxu0 0.0
    %3229 = vmatprep.subr.mxu0 0.0
    %3230 = vmatpush1.xpose.msra.mxu0 0.0
    %3231 = vmatprep.subr.mxu0 0.0
    %3232 = vmatpush1.xpose.msra.mxu0 0.0
    %3233 = vmatprep.subr.mxu0 0.0
    %3234 = vmatpush1.xpose.msra.mxu0 0.0
    %3235 = vmatprep.subr.mxu0 0.0
    %3236 = vmatpush1.xpose.msra.mxu0 0.0
    %3237 = vmatprep.subr.mxu0 0.0
    %3238 = vmatpush1.xpose.msra.mxu0 0.0
    %3239 = vmatprep.subr.mxu0 0.0
    %3240 = vmatpush1.xpose.msra.mxu0 0.0
    %3241 = vmatprep.subr.mxu0 0.0
    %3242 = vmatpush1.xpose.msra.mxu0 0.0
    %3243 = vmatprep.subr.mxu0 0.0
    %3244 = vmatpush1.xpose.msra.mxu0 0.0
    %3245 = vmatprep.mubr.f32.mxu0 0.0
    %3246 = vmatmul.mubr.f32.gmra.mrb[0].mxu0 %v3173
    %v3247 = vpop.f32.mrb[0].mxu0
    %v3248 = vadd.f32 0.0, %v3247
    %v3249 = vpop.f32.mrb[0].mxu0
    %3250 = vmatprep.mubr.f32.mxu0 0.0
    %3251 = vmatmul.mubr.f32.gmra.mrb[0].mxu0 %v3175
    %v3252 = vpop.f32.mrb[0].mxu0
    %v3253 = vadd.f32 0.0, %v3252
    %v3254 = vpop.f32.mrb[0].mxu0
    %3255 = vdwg.mxu0
    %v3256 = vmul.f32 %v3157, 0.35355338
    %v3257 = vmul.f32 %v3162, 0.35355338
    %v3258 = vmul.f32 %v3248, 0.35355338
    %v3259 = vmul.f32 %v3253, 0.35355338
    %v3260 = vsel %vm597, %v3256, -inf
    %3261 = vmax.xlane.f32.xlu0 %v3260
    %v3262 = vpop.xlane.xlu0 %3261
    %v3263 = vsel %vm597, %v3257, -inf
    %3264 = vmax.xlane.f32.xlu0 %v3263
    %v3265 = vpop.xlane.xlu0 %3264
    %v3266 = vsel %vm597, %v3258, -inf
    %3267 = vmax.xlane.f32.xlu0 %v3266
    %v3268 = vpop.xlane.xlu0 %3267
    %v3269 = vsel %vm597, %v3259, -inf
    %3270 = vmax.xlane.f32.xlu0 %v3269
    %v3271 = vpop.xlane.xlu0 %3270
    %v3272 = vsub.f32 %v3256, %v3262
    %v3273 = vsub.f32 %v3257, %v3265
    %v3274 = vsub.f32 %v3258, %v3268
    %v3275 = vsub.f32 %v3259, %v3271
    %v3276 = vmul.f32 %v3272, 1.442695
    %v3277 = vpow.pop %v3276
    %v3278 = vmul.f32 %v3273, 1.442695
    %v3279 = vpow.pop %v3278
    %v3280 = vmul.f32 %v3274, 1.442695
    %v3281 = vpow.pop %v3280
    %v3282 = vmul.f32 %v3275, 1.442695
    %v3283 = vpow.pop %v3282
    %v3284 = vsel %vm597, %v3277, 0.0
    %3285 = vadd.xlane.f32.xlu0 %v3284
    %v3286 = vpop.xlane.xlu0 %3285
    %v3287 = vsel %vm597, %v3279, 0.0
    %3288 = vadd.xlane.f32.xlu0 %v3287
    %v3289 = vpop.xlane.xlu0 %3288
    %v3290 = vsel %vm597, %v3281, 0.0
    %3291 = vadd.xlane.f32.xlu0 %v3290
    %v3292 = vpop.xlane.xlu0 %3291
    %v3293 = vsel %vm597, %v3283, 0.0
    %3294 = vadd.xlane.f32.xlu0 %v3293
    %v3295 = vpop.xlane.xlu0 %3294
    %v3296 = vrcp.pop %v3286
    %v3297 = vrcp.pop %v3289
    %v3298 = vrcp.pop %v3292
    %v3299 = vrcp.pop %v3295
    %v3300 = vmul.f32 %v3277, %v3296
    %v3301 = vmul.f32 %v3279, %v3297
    %v3302 = vmul.f32 %v3281, %v3298
    %v3303 = vmul.f32 %v3283, %v3299
    %3304 = vrot.lane.b32.xlu0 %v2656, 56
    %v3305 = vpop.permute.xlu0 %3304
    %3306 = vrot.lane.b32.xlu0 %v2661, 56
    %v3307 = vpop.permute.xlu0 %3306
    %v3311 = vsel %vm597, %v3300, 0
    %v3314 = vsel %vm597, %v3301, 0
    %3316 = vmatprep.subr.mxu0 0.0
    %3317 = vmatpush1.msra.mxu0 %v3305
    %3318 = vmatprep.subr.mxu0 0.0
    %3319 = vmatpush1.msra.mxu0 %v3307
    %3320 = vmatprep.subr.mxu0 0.0
    %3321 = vmatpush1.msra.mxu0 0.0
    %3322 = vmatprep.subr.mxu0 0.0
    %3323 = vmatpush1.msra.mxu0 0.0
    %3324 = vmatprep.subr.mxu0 0.0
    %3325 = vmatpush1.msra.mxu0 0.0
    %3326 = vmatprep.subr.mxu0 0.0
    %3327 = vmatpush1.msra.mxu0 0.0
    %3328 = vmatprep.subr.mxu0 0.0
    %3329 = vmatpush1.msra.mxu0 0.0
    %3330 = vmatprep.subr.mxu0 0.0
    %3331 = vmatpush1.msra.mxu0 0.0
    %3332 = vmatprep.subr.mxu0 0.0
    %3333 = vmatpush1.msra.mxu0 0.0
    %3334 = vmatprep.subr.mxu0 0.0
    %3335 = vmatpush1.msra.mxu0 0.0
    %3336 = vmatprep.subr.mxu0 0.0
    %3337 = vmatpush1.msra.mxu0 0.0
    %3338 = vmatprep.subr.mxu0 0.0
    %3339 = vmatpush1.msra.mxu0 0.0
    %3340 = vmatprep.subr.mxu0 0.0
    %3341 = vmatpush1.msra.mxu0 0.0
    %3342 = vmatprep.subr.mxu0 0.0
    %3343 = vmatpush1.msra.mxu0 0.0
    %3344 = vmatprep.subr.mxu0 0.0
    %3345 = vmatpush1.msra.mxu0 0.0
    %3346 = vmatprep.subr.mxu0 0.0
    %3347 = vmatpush1.msra.mxu0 0.0
    %3348 = vmatprep.subr.mxu0 0.0
    %3349 = vmatpush1.msra.mxu0 0.0
    %3350 = vmatprep.subr.mxu0 0.0
    %3351 = vmatpush1.msra.mxu0 0.0
    %3352 = vmatprep.subr.mxu0 0.0
    %3353 = vmatpush1.msra.mxu0 0.0
    %3354 = vmatprep.subr.mxu0 0.0
    %3355 = vmatpush1.msra.mxu0 0.0
    %3356 = vmatprep.subr.mxu0 0.0
    %3357 = vmatpush1.msra.mxu0 0.0
    %3358 = vmatprep.subr.mxu0 0.0
    %3359 = vmatpush1.msra.mxu0 0.0
    %3360 = vmatprep.subr.mxu0 0.0
    %3361 = vmatpush1.msra.mxu0 0.0
    %3362 = vmatprep.subr.mxu0 0.0
    %3363 = vmatpush1.msra.mxu0 0.0
    %3364 = vmatprep.subr.mxu0 0.0
    %3365 = vmatpush1.msra.mxu0 0.0
    %3366 = vmatprep.subr.mxu0 0.0
    %3367 = vmatpush1.msra.mxu0 0.0
    %3368 = vmatprep.subr.mxu0 0.0
    %3369 = vmatpush1.msra.mxu0 0.0
    %3370 = vmatprep.subr.mxu0 0.0
    %3371 = vmatpush1.msra.mxu0 0.0
    %3372 = vmatprep.subr.mxu0 0.0
    %3373 = vmatpush1.msra.mxu0 0.0
    %3374 = vmatprep.subr.mxu0 0.0
    %3375 = vmatpush1.msra.mxu0 0.0
    %3376 = vmatprep.subr.mxu0 0.0
    %3377 = vmatpush1.msra.mxu0 0.0
    %3378 = vmatprep.subr.mxu0 0.0
    %3379 = vmatpush1.msra.mxu0 0.0
    %3380 = vmatprep.mubr.f32.mxu0 0.0
    %3381 = vmatmul.mubr.f32.gmra.mrb[0].mxu0 %v3311
    %v3382 = vpop.f32.mrb[0].mxu0
    %v3383 = vadd.f32 0.0, %v3382
    %v3384 = vpop.f32.mrb[0].mxu0
    %3385 = vmatprep.mubr.f32.mxu0 0.0
    %3386 = vmatmul.mubr.f32.gmra.mrb[0].mxu0 %v3314
    %v3387 = vpop.f32.mrb[0].mxu0
    %v3388 = vadd.f32 0.0, %v3387
    %v3389 = vpop.f32.mrb[0].mxu0
    %3390 = vdwg.mxu0
    %3391 = vrot.lane.b32.xlu0 %v2666, 56
    %v3392 = vpop.permute.xlu0 %3391
    %3393 = vrot.lane.b32.xlu0 %v2671, 56
    %v3394 = vpop.permute.xlu0 %3393
    %v3398 = vsel %vm597, %v3302, 0
    %v3401 = vsel %vm597, %v3303, 0
    %3403 = vmatprep.subr.mxu0 0.0
    %3404 = vmatpush1.msra.mxu0 %v3392
    %3405 = vmatprep.subr.mxu0 0.0
    %3406 = vmatpush1.msra.mxu0 %v3394
    %3407 = vmatprep.subr.mxu0 0.0
    %3408 = vmatpush1.msra.mxu0 0.0
    %3409 = vmatprep.subr.mxu0 0.0
    %3410 = vmatpush1.msra.mxu0 0.0
    %3411 = vmatprep.subr.mxu0 0.0
    %3412 = vmatpush1.msra.mxu0 0.0
    %3413 = vmatprep.subr.mxu0 0.0
    %3414 = vmatpush1.msra.mxu0 0.0
    %3415 = vmatprep.subr.mxu0 0.0
    %3416 = vmatpush1.msra.mxu0 0.0
    %3417 = vmatprep.subr.mxu0 0.0
    %3418 = vmatpush1.msra.mxu0 0.0
    %3419 = vmatprep.subr.mxu0 0.0
    %3420 = vmatpush1.msra.mxu0 0.0
    %3421 = vmatprep.subr.mxu0 0.0
    %3422 = vmatpush1.msra.mxu0 0.0
    %3423 = vmatprep.subr.mxu0 0.0
    %3424 = vmatpush1.msra.mxu0 0.0
    %3425 = vmatprep.subr.mxu0 0.0
    %3426 = vmatpush1.msra.mxu0 0.0
    %3427 = vmatprep.subr.mxu0 0.0
    %3428 = vmatpush1.msra.mxu0 0.0
    %3429 = vmatprep.subr.mxu0 0.0
    %3430 = vmatpush1.msra.mxu0 0.0
    %3431 = vmatprep.subr.mxu0 0.0
    %3432 = vmatpush1.msra.mxu0 0.0
    %3433 = vmatprep.subr.mxu0 0.0
    %3434 = vmatpush1.msra.mxu0 0.0
    %3435 = vmatprep.subr.mxu0 0.0
    %3436 = vmatpush1.msra.mxu0 0.0
    %3437 = vmatprep.subr.mxu0 0.0
    %3438 = vmatpush1.msra.mxu0 0.0
    %3439 = vmatprep.subr.mxu0 0.0
    %3440 = vmatpush1.msra.mxu0 0.0
    %3441 = vmatprep.subr.mxu0 0.0
    %3442 = vmatpush1.msra.mxu0 0.0
    %3443 = vmatprep.subr.mxu0 0.0
    %3444 = vmatpush1.msra.mxu0 0.0
    %3445 = vmatprep.subr.mxu0 0.0
    %3446 = vmatpush1.msra.mxu0 0.0
    %3447 = vmatprep.subr.mxu0 0.0
    %3448 = vmatpush1.msra.mxu0 0.0
    %3449 = vmatprep.subr.mxu0 0.0
    %3450 = vmatpush1.msra.mxu0 0.0
    %3451 = vmatprep.subr.mxu0 0.0
    %3452 = vmatpush1.msra.mxu0 0.0
    %3453 = vmatprep.subr.mxu0 0.0
    %3454 = vmatpush1.msra.mxu0 0.0
    %3455 = vmatprep.subr.mxu0 0.0
    %3456 = vmatpush1.msra.mxu0 0.0
    %3457 = vmatprep.subr.mxu0 0.0
    %3458 = vmatpush1.msra.mxu0 0.0
    %3459 = vmatprep.subr.mxu0 0.0
    %3460 = vmatpush1.msra.mxu0 0.0
    %3461 = vmatprep.subr.mxu0 0.0
    %3462 = vmatpush1.msra.mxu0 0.0
    %3463 = vmatprep.subr.mxu0 0.0
    %3464 = vmatpush1.msra.mxu0 0.0
    %3465 = vmatprep.subr.mxu0 0.0
    %3466 = vmatpush1.msra.mxu0 0.0
    %3467 = vmatprep.mubr.f32.mxu0 0.0
    %3468 = vmatmul.mubr.f32.gmra.mrb[0].mxu0 %v3398
    %v3469 = vpop.f32.mrb[0].mxu0
    %v3470 = vadd.f32 0.0, %v3469
    %v3471 = vpop.f32.mrb[0].mxu0
    %3472 = vmatprep.mubr.f32.mxu0 0.0
    %3473 = vmatmul.mubr.f32.gmra.mrb[0].mxu0 %v3401
    %v3474 = vpop.f32.mrb[0].mxu0
    %v3475 = vadd.f32 0.0, %v3474
    %v3476 = vpop.f32.mrb[0].mxu0
    %3477 = vdwg.mxu0
    %3478 = vrot.lane.b32.xlu0 %v2656, 112
    %v3479 = vpop.permute.xlu0 %3478
    %3480 = vrot.lane.b32.xlu0 %v2661, 112
    %v3481 = vpop.permute.xlu0 %3480
    %3482 = vrot.lane.b32.xlu0 %v2656, 80
    %v3483 = vpop.permute.xlu0 %3482
    %3484 = vrot.lane.b32.xlu0 %v2661, 80
    %v3485 = vpop.permute.xlu0 %3484
    %v3486 = vsel %vm420, %v3479, 0
    %v3488 = vsel %vm420, %v3481, 0
    %v3490 = vsel %vm420, %v3483, 0
    %v3492 = vsel %vm420, %v3485, 0
    %3494 = vmatprep.subr.mxu0 0.0
    %3495 = vmatpush1.xpose.msra.mxu0 %v3490
    %3496 = vmatprep.subr.mxu0 0.0
    %3497 = vmatpush1.xpose.msra.mxu0 %v3492
    %3498 = vmatprep.subr.mxu0 0.0
    %3499 = vmatpush1.xpose.msra.mxu0 0.0
    %3500 = vmatprep.subr.mxu0 0.0
    %3501 = vmatpush1.xpose.msra.mxu0 0.0
    %3502 = vmatprep.subr.mxu0 0.0
    %3503 = vmatpush1.xpose.msra.mxu0 0.0
    %3504 = vmatprep.subr.mxu0 0.0
    %3505 = vmatpush1.xpose.msra.mxu0 0.0
    %3506 = vmatprep.subr.mxu0 0.0
    %3507 = vmatpush1.xpose.msra.mxu0 0.0
    %3508 = vmatprep.subr.mxu0 0.0
    %3509 = vmatpush1.xpose.msra.mxu0 0.0
    %3510 = vmatprep.subr.mxu0 0.0
    %3511 = vmatpush1.xpose.msra.mxu0 0.0
    %3512 = vmatprep.subr.mxu0 0.0
    %3513 = vmatpush1.xpose.msra.mxu0 0.0
    %3514 = vmatprep.subr.mxu0 0.0
    %3515 = vmatpush1.xpose.msra.mxu0 0.0
    %3516 = vmatprep.subr.mxu0 0.0
    %3517 = vmatpush1.xpose.msra.mxu0 0.0
    %3518 = vmatprep.subr.mxu0 0.0
    %3519 = vmatpush1.xpose.msra.mxu0 0.0
    %3520 = vmatprep.subr.mxu0 0.0
    %3521 = vmatpush1.xpose.msra.mxu0 0.0
    %3522 = vmatprep.subr.mxu0 0.0
    %3523 = vmatpush1.xpose.msra.mxu0 0.0
    %3524 = vmatprep.subr.mxu0 0.0
    %3525 = vmatpush1.xpose.msra.mxu0 0.0
    %3526 = vmatprep.subr.mxu0 0.0
    %3527 = vmatpush1.xpose.msra.mxu0 0.0
    %3528 = vmatprep.subr.mxu0 0.0
    %3529 = vmatpush1.xpose.msra.mxu0 0.0
    %3530 = vmatprep.subr.mxu0 0.0
    %3531 = vmatpush1.xpose.msra.mxu0 0.0
    %3532 = vmatprep.subr.mxu0 0.0
    %3533 = vmatpush1.xpose.msra.mxu0 0.0
    %3534 = vmatprep.subr.mxu0 0.0
    %3535 = vmatpush1.xpose.msra.mxu0 0.0
    %3536 = vmatprep.subr.mxu0 0.0
    %3537 = vmatpush1.xpose.msra.mxu0 0.0
    %3538 = vmatprep.subr.mxu0 0.0
    %3539 = vmatpush1.xpose.msra.mxu0 0.0
    %3540 = vmatprep.subr.mxu0 0.0
    %3541 = vmatpush1.xpose.msra.mxu0 0.0
    %3542 = vmatprep.subr.mxu0 0.0
    %3543 = vmatpush1.xpose.msra.mxu0 0.0
    %3544 = vmatprep.subr.mxu0 0.0
    %3545 = vmatpush1.xpose.msra.mxu0 0.0
    %3546 = vmatprep.subr.mxu0 0.0
    %3547 = vmatpush1.xpose.msra.mxu0 0.0
    %3548 = vmatprep.subr.mxu0 0.0
    %3549 = vmatpush1.xpose.msra.mxu0 0.0
    %3550 = vmatprep.subr.mxu0 0.0
    %3551 = vmatpush1.xpose.msra.mxu0 0.0
    %3552 = vmatprep.subr.mxu0 0.0
    %3553 = vmatpush1.xpose.msra.mxu0 0.0
    %3554 = vmatprep.subr.mxu0 0.0
    %3555 = vmatpush1.xpose.msra.mxu0 0.0
    %3556 = vmatprep.subr.mxu0 0.0
    %3557 = vmatpush1.xpose.msra.mxu0 0.0
    %3558 = vmatprep.mubr.f32.mxu0 0.0
    %3559 = vmatmul.mubr.f32.gmra.mrb[0].mxu0 %v3486
    %v3560 = vpop.f32.mrb[0].mxu0
    %v3561 = vadd.f32 0.0, %v3560
    %v3562 = vpop.f32.mrb[0].mxu0
    %3563 = vmatprep.mubr.f32.mxu0 0.0
    %3564 = vmatmul.mubr.f32.gmra.mrb[0].mxu0 %v3488
    %v3565 = vpop.f32.mrb[0].mxu0
    %v3566 = vadd.f32 0.0, %v3565
    %v3567 = vpop.f32.mrb[0].mxu0
    %3568 = vdwg.mxu0
    %3569 = vrot.lane.b32.xlu0 %v2666, 112
    %v3570 = vpop.permute.xlu0 %3569
    %3571 = vrot.lane.b32.xlu0 %v2671, 112
    %v3572 = vpop.permute.xlu0 %3571
    %3573 = vrot.lane.b32.xlu0 %v2666, 80
    %v3574 = vpop.permute.xlu0 %3573
    %3575 = vrot.lane.b32.xlu0 %v2671, 80
    %v3576 = vpop.permute.xlu0 %3575
    %v3577 = vsel %vm420, %v3570, 0
    %v3579 = vsel %vm420, %v3572, 0
    %v3581 = vsel %vm420, %v3574, 0
    %v3583 = vsel %vm420, %v3576, 0
    %3585 = vmatprep.subr.mxu0 0.0
    %3586 = vmatpush1.xpose.msra.mxu0 %v3581
    %3587 = vmatprep.subr.mxu0 0.0
    %3588 = vmatpush1.xpose.msra.mxu0 %v3583
    %3589 = vmatprep.subr.mxu0 0.0
    %3590 = vmatpush1.xpose.msra.mxu0 0.0
    %3591 = vmatprep.subr.mxu0 0.0
    %3592 = vmatpush1.xpose.msra.mxu0 0.0
    %3593 = vmatprep.subr.mxu0 0.0
    %3594 = vmatpush1.xpose.msra.mxu0 0.0
    %3595 = vmatprep.subr.mxu0 0.0
    %3596 = vmatpush1.xpose.msra.mxu0 0.0
    %3597 = vmatprep.subr.mxu0 0.0
    %3598 = vmatpush1.xpose.msra.mxu0 0.0
    %3599 = vmatprep.subr.mxu0 0.0
    %3600 = vmatpush1.xpose.msra.mxu0 0.0
    %3601 = vmatprep.subr.mxu0 0.0
    %3602 = vmatpush1.xpose.msra.mxu0 0.0
    %3603 = vmatprep.subr.mxu0 0.0
    %3604 = vmatpush1.xpose.msra.mxu0 0.0
    %3605 = vmatprep.subr.mxu0 0.0
    %3606 = vmatpush1.xpose.msra.mxu0 0.0
    %3607 = vmatprep.subr.mxu0 0.0
    %3608 = vmatpush1.xpose.msra.mxu0 0.0
    %3609 = vmatprep.subr.mxu0 0.0
    %3610 = vmatpush1.xpose.msra.mxu0 0.0
    %3611 = vmatprep.subr.mxu0 0.0
    %3612 = vmatpush1.xpose.msra.mxu0 0.0
    %3613 = vmatprep.subr.mxu0 0.0
    %3614 = vmatpush1.xpose.msra.mxu0 0.0
    %3615 = vmatprep.subr.mxu0 0.0
    %3616 = vmatpush1.xpose.msra.mxu0 0.0
    %3617 = vmatprep.subr.mxu0 0.0
    %3618 = vmatpush1.xpose.msra.mxu0 0.0
    %3619 = vmatprep.subr.mxu0 0.0
    %3620 = vmatpush1.xpose.msra.mxu0 0.0
    %3621 = vmatprep.subr.mxu0 0.0
    %3622 = vmatpush1.xpose.msra.mxu0 0.0
    %3623 = vmatprep.subr.mxu0 0.0
    %3624 = vmatpush1.xpose.msra.mxu0 0.0
    %3625 = vmatprep.subr.mxu0 0.0
    %3626 = vmatpush1.xpose.msra.mxu0 0.0
    %3627 = vmatprep.subr.mxu0 0.0
    %3628 = vmatpush1.xpose.msra.mxu0 0.0
    %3629 = vmatprep.subr.mxu0 0.0
    %3630 = vmatpush1.xpose.msra.mxu0 0.0
    %3631 = vmatprep.subr.mxu0 0.0
    %3632 = vmatpush1.xpose.msra.mxu0 0.0
    %3633 = vmatprep.subr.mxu0 0.0
    %3634 = vmatpush1.xpose.msra.mxu0 0.0
    %3635 = vmatprep.subr.mxu0 0.0
    %3636 = vmatpush1.xpose.msra.mxu0 0.0
    %3637 = vmatprep.subr.mxu0 0.0
    %3638 = vmatpush1.xpose.msra.mxu0 0.0
    %3639 = vmatprep.subr.mxu0 0.0
    %3640 = vmatpush1.xpose.msra.mxu0 0.0
    %3641 = vmatprep.subr.mxu0 0.0
    %3642 = vmatpush1.xpose.msra.mxu0 0.0
    %3643 = vmatprep.subr.mxu0 0.0
    %3644 = vmatpush1.xpose.msra.mxu0 0.0
    %3645 = vmatprep.subr.mxu0 0.0
    %3646 = vmatpush1.xpose.msra.mxu0 0.0
    %3647 = vmatprep.subr.mxu0 0.0
    %3648 = vmatpush1.xpose.msra.mxu0 0.0
    %3649 = vmatprep.mubr.f32.mxu0 0.0
    %3650 = vmatmul.mubr.f32.gmra.mrb[0].mxu0 %v3577
    %v3651 = vpop.f32.mrb[0].mxu0
    %v3652 = vadd.f32 0.0, %v3651
    %v3653 = vpop.f32.mrb[0].mxu0
    %3654 = vmatprep.mubr.f32.mxu0 0.0
    %3655 = vmatmul.mubr.f32.gmra.mrb[0].mxu0 %v3579
    %v3656 = vpop.f32.mrb[0].mxu0
    %v3657 = vadd.f32 0.0, %v3656
    %v3658 = vpop.f32.mrb[0].mxu0
    %3659 = vdwg.mxu0
    %v3660 = vmul.f32 %v3561, 0.35355338
    %v3661 = vmul.f32 %v3566, 0.35355338
    %v3662 = vmul.f32 %v3652, 0.35355338
    %v3663 = vmul.f32 %v3657, 0.35355338
    %v3664 = vsel %vm597, %v3660, -inf
    %3665 = vmax.xlane.f32.xlu0 %v3664
    %v3666 = vpop.xlane.xlu0 %3665
    %v3667 = vsel %vm597, %v3661, -inf
    %3668 = vmax.xlane.f32.xlu0 %v3667
    %v3669 = vpop.xlane.xlu0 %3668
    %v3670 = vsel %vm597, %v3662, -inf
    %3671 = vmax.xlane.f32.xlu0 %v3670
    %v3672 = vpop.xlane.xlu0 %3671
    %v3673 = vsel %vm597, %v3663, -inf
    %3674 = vmax.xlane.f32.xlu0 %v3673
    %v3675 = vpop.xlane.xlu0 %3674
    %v3676 = vsub.f32 %v3660, %v3666
    %v3677 = vsub.f32 %v3661, %v3669
    %v3678 = vsub.f32 %v3662, %v3672
    %v3679 = vsub.f32 %v3663, %v3675
    %v3680 = vmul.f32 %v3676, 1.442695
    %v3681 = vpow.pop %v3680
    %v3682 = vmul.f32 %v3677, 1.442695
    %v3683 = vpow.pop %v3682
    %v3684 = vmul.f32 %v3678, 1.442695
    %v3685 = vpow.pop %v3684
    %v3686 = vmul.f32 %v3679, 1.442695
    %v3687 = vpow.pop %v3686
    %v3688 = vsel %vm597, %v3681, 0.0
    %3689 = vadd.xlane.f32.xlu0 %v3688
    %v3690 = vpop.xlane.xlu0 %3689
    %v3691 = vsel %vm597, %v3683, 0.0
    %3692 = vadd.xlane.f32.xlu0 %v3691
    %v3693 = vpop.xlane.xlu0 %3692
    %v3694 = vsel %vm597, %v3685, 0.0
    %3695 = vadd.xlane.f32.xlu0 %v3694
    %v3696 = vpop.xlane.xlu0 %3695
    %v3697 = vsel %vm597, %v3687, 0.0
    %3698 = vadd.xlane.f32.xlu0 %v3697
    %v3699 = vpop.xlane.xlu0 %3698
    %v3700 = vrcp.pop %v3690
    %v3701 = vrcp.pop %v3693
    %v3702 = vrcp.pop %v3696
    %v3703 = vrcp.pop %v3699
    %v3704 = vmul.f32 %v3681, %v3700
    %v3705 = vmul.f32 %v3683, %v3701
    %v3706 = vmul.f32 %v3685, %v3702
    %v3707 = vmul.f32 %v3687, %v3703
    %3708 = vrot.lane.b32.xlu0 %v2656, 48
    %v3709 = vpop.permute.xlu0 %3708
    %3710 = vrot.lane.b32.xlu0 %v2661, 48
    %v3711 = vpop.permute.xlu0 %3710
    %v3715 = vsel %vm597, %v3704, 0
    %v3718 = vsel %vm597, %v3705, 0
    %3720 = vmatprep.subr.mxu0 0.0
    %3721 = vmatpush1.msra.mxu0 %v3709
    %3722 = vmatprep.subr.mxu0 0.0
    %3723 = vmatpush1.msra.mxu0 %v3711
    %3724 = vmatprep.subr.mxu0 0.0
    %3725 = vmatpush1.msra.mxu0 0.0
    %3726 = vmatprep.subr.mxu0 0.0
    %3727 = vmatpush1.msra.mxu0 0.0
    %3728 = vmatprep.subr.mxu0 0.0
    %3729 = vmatpush1.msra.mxu0 0.0
    %3730 = vmatprep.subr.mxu0 0.0
    %3731 = vmatpush1.msra.mxu0 0.0
    %3732 = vmatprep.subr.mxu0 0.0
    %3733 = vmatpush1.msra.mxu0 0.0
    %3734 = vmatprep.subr.mxu0 0.0
    %3735 = vmatpush1.msra.mxu0 0.0
    %3736 = vmatprep.subr.mxu0 0.0
    %3737 = vmatpush1.msra.mxu0 0.0
    %3738 = vmatprep.subr.mxu0 0.0
    %3739 = vmatpush1.msra.mxu0 0.0
    %3740 = vmatprep.subr.mxu0 0.0
    %3741 = vmatpush1.msra.mxu0 0.0
    %3742 = vmatprep.subr.mxu0 0.0
    %3743 = vmatpush1.msra.mxu0 0.0
    %3744 = vmatprep.subr.mxu0 0.0
    %3745 = vmatpush1.msra.mxu0 0.0
    %3746 = vmatprep.subr.mxu0 0.0
    %3747 = vmatpush1.msra.mxu0 0.0
    %3748 = vmatprep.subr.mxu0 0.0
    %3749 = vmatpush1.msra.mxu0 0.0
    %3750 = vmatprep.subr.mxu0 0.0
    %3751 = vmatpush1.msra.mxu0 0.0
    %3752 = vmatprep.subr.mxu0 0.0
    %3753 = vmatpush1.msra.mxu0 0.0
    %3754 = vmatprep.subr.mxu0 0.0
    %3755 = vmatpush1.msra.mxu0 0.0
    %3756 = vmatprep.subr.mxu0 0.0
    %3757 = vmatpush1.msra.mxu0 0.0
    %3758 = vmatprep.subr.mxu0 0.0
    %3759 = vmatpush1.msra.mxu0 0.0
    %3760 = vmatprep.subr.mxu0 0.0
    %3761 = vmatpush1.msra.mxu0 0.0
    %3762 = vmatprep.subr.mxu0 0.0
    %3763 = vmatpush1.msra.mxu0 0.0
    %3764 = vmatprep.subr.mxu0 0.0
    %3765 = vmatpush1.msra.mxu0 0.0
    %3766 = vmatprep.subr.mxu0 0.0
    %3767 = vmatpush1.msra.mxu0 0.0
    %3768 = vmatprep.subr.mxu0 0.0
    %3769 = vmatpush1.msra.mxu0 0.0
    %3770 = vmatprep.subr.mxu0 0.0
    %3771 = vmatpush1.msra.mxu0 0.0
    %3772 = vmatprep.subr.mxu0 0.0
    %3773 = vmatpush1.msra.mxu0 0.0
    %3774 = vmatprep.subr.mxu0 0.0
    %3775 = vmatpush1.msra.mxu0 0.0
    %3776 = vmatprep.subr.mxu0 0.0
    %3777 = vmatpush1.msra.mxu0 0.0
    %3778 = vmatprep.subr.mxu0 0.0
    %3779 = vmatpush1.msra.mxu0 0.0
    %3780 = vmatprep.subr.mxu0 0.0
    %3781 = vmatpush1.msra.mxu0 0.0
    %3782 = vmatprep.subr.mxu0 0.0
    %3783 = vmatpush1.msra.mxu0 0.0
    %3784 = vmatprep.mubr.f32.mxu0 0.0
    %3785 = vmatmul.mubr.f32.gmra.mrb[0].mxu0 %v3715
    %v3786 = vpop.f32.mrb[0].mxu0
    %v3787 = vadd.f32 0.0, %v3786
    %v3788 = vpop.f32.mrb[0].mxu0
    %3789 = vmatprep.mubr.f32.mxu0 0.0
    %3790 = vmatmul.mubr.f32.gmra.mrb[0].mxu0 %v3718
    %v3791 = vpop.f32.mrb[0].mxu0
    %v3792 = vadd.f32 0.0, %v3791
    %v3793 = vpop.f32.mrb[0].mxu0
    %3794 = vdwg.mxu0
    %3795 = vrot.lane.b32.xlu0 %v2666, 48
    %v3796 = vpop.permute.xlu0 %3795
    %3797 = vrot.lane.b32.xlu0 %v2671, 48
    %v3798 = vpop.permute.xlu0 %3797
    %v3802 = vsel %vm597, %v3706, 0
    %v3805 = vsel %vm597, %v3707, 0
    %3807 = vmatprep.subr.mxu0 0.0
    %3808 = vmatpush1.msra.mxu0 %v3796
    %3809 = vmatprep.subr.mxu0 0.0
    %3810 = vmatpush1.msra.mxu0 %v3798
    %3811 = vmatprep.subr.mxu0 0.0
    %3812 = vmatpush1.msra.mxu0 0.0
    %3813 = vmatprep.subr.mxu0 0.0
    %3814 = vmatpush1.msra.mxu0 0.0
    %3815 = vmatprep.subr.mxu0 0.0
    %3816 = vmatpush1.msra.mxu0 0.0
    %3817 = vmatprep.subr.mxu0 0.0
    %3818 = vmatpush1.msra.mxu0 0.0
    %3819 = vmatprep.subr.mxu0 0.0
    %3820 = vmatpush1.msra.mxu0 0.0
    %3821 = vmatprep.subr.mxu0 0.0
    %3822 = vmatpush1.msra.mxu0 0.0
    %3823 = vmatprep.subr.mxu0 0.0
    %3824 = vmatpush1.msra.mxu0 0.0
    %3825 = vmatprep.subr.mxu0 0.0
    %3826 = vmatpush1.msra.mxu0 0.0
    %3827 = vmatprep.subr.mxu0 0.0
    %3828 = vmatpush1.msra.mxu0 0.0
    %3829 = vmatprep.subr.mxu0 0.0
    %3830 = vmatpush1.msra.mxu0 0.0
    %3831 = vmatprep.subr.mxu0 0.0
    %3832 = vmatpush1.msra.mxu0 0.0
    %3833 = vmatprep.subr.mxu0 0.0
    %3834 = vmatpush1.msra.mxu0 0.0
    %3835 = vmatprep.subr.mxu0 0.0
    %3836 = vmatpush1.msra.mxu0 0.0
    %3837 = vmatprep.subr.mxu0 0.0
    %3838 = vmatpush1.msra.mxu0 0.0
    %3839 = vmatprep.subr.mxu0 0.0
    %3840 = vmatpush1.msra.mxu0 0.0
    %3841 = vmatprep.subr.mxu0 0.0
    %3842 = vmatpush1.msra.mxu0 0.0
    %3843 = vmatprep.subr.mxu0 0.0
    %3844 = vmatpush1.msra.mxu0 0.0
    %3845 = vmatprep.subr.mxu0 0.0
    %3846 = vmatpush1.msra.mxu0 0.0
    %3847 = vmatprep.subr.mxu0 0.0
    %3848 = vmatpush1.msra.mxu0 0.0
    %3849 = vmatprep.subr.mxu0 0.0
    %3850 = vmatpush1.msra.mxu0 0.0
    %3851 = vmatprep.subr.mxu0 0.0
    %3852 = vmatpush1.msra.mxu0 0.0
    %3853 = vmatprep.subr.mxu0 0.0
    %3854 = vmatpush1.msra.mxu0 0.0
    %3855 = vmatprep.subr.mxu0 0.0
    %3856 = vmatpush1.msra.mxu0 0.0
    %3857 = vmatprep.subr.mxu0 0.0
    %3858 = vmatpush1.msra.mxu0 0.0
    %3859 = vmatprep.subr.mxu0 0.0
    %3860 = vmatpush1.msra.mxu0 0.0
    %3861 = vmatprep.subr.mxu0 0.0
    %3862 = vmatpush1.msra.mxu0 0.0
    %3863 = vmatprep.subr.mxu0 0.0
    %3864 = vmatpush1.msra.mxu0 0.0
    %3865 = vmatprep.subr.mxu0 0.0
    %3866 = vmatpush1.msra.mxu0 0.0
    %3867 = vmatprep.subr.mxu0 0.0
    %3868 = vmatpush1.msra.mxu0 0.0
    %3869 = vmatprep.subr.mxu0 0.0
    %3870 = vmatpush1.msra.mxu0 0.0
    %3871 = vmatprep.mubr.f32.mxu0 0.0
    %3872 = vmatmul.mubr.f32.gmra.mrb[0].mxu0 %v3802
    %v3873 = vpop.f32.mrb[0].mxu0
    %v3874 = vadd.f32 0.0, %v3873
    %v3875 = vpop.f32.mrb[0].mxu0
    %3876 = vmatprep.mubr.f32.mxu0 0.0
    %3877 = vmatmul.mubr.f32.gmra.mrb[0].mxu0 %v3805
    %v3878 = vpop.f32.mrb[0].mxu0
    %v3879 = vadd.f32 0.0, %v3878
    %v3880 = vpop.f32.mrb[0].mxu0
    %3881 = vdwg.mxu0
    %3882 = vrot.lane.b32.xlu0 %v2656, 104
    %v3883 = vpop.permute.xlu0 %3882
    %3884 = vrot.lane.b32.xlu0 %v2661, 104
    %v3885 = vpop.permute.xlu0 %3884
    %3886 = vrot.lane.b32.xlu0 %v2656, 72
    %v3887 = vpop.permute.xlu0 %3886
    %3888 = vrot.lane.b32.xlu0 %v2661, 72
    %v3889 = vpop.permute.xlu0 %3888
    %v3890 = vsel %vm420, %v3883, 0
    %v3892 = vsel %vm420, %v3885, 0
    %v3894 = vsel %vm420, %v3887, 0
    %v3896 = vsel %vm420, %v3889, 0
    %3898 = vmatprep.subr.mxu0 0.0
    %3899 = vmatpush1.xpose.msra.mxu0 %v3894
    %3900 = vmatprep.subr.mxu0 0.0
    %3901 = vmatpush1.xpose.msra.mxu0 %v3896
    %3902 = vmatprep.subr.mxu0 0.0
    %3903 = vmatpush1.xpose.msra.mxu0 0.0
    %3904 = vmatprep.subr.mxu0 0.0
    %3905 = vmatpush1.xpose.msra.mxu0 0.0
    %3906 = vmatprep.subr.mxu0 0.0
    %3907 = vmatpush1.xpose.msra.mxu0 0.0
    %3908 = vmatprep.subr.mxu0 0.0
    %3909 = vmatpush1.xpose.msra.mxu0 0.0
    %3910 = vmatprep.subr.mxu0 0.0
    %3911 = vmatpush1.xpose.msra.mxu0 0.0
    %3912 = vmatprep.subr.mxu0 0.0
    %3913 = vmatpush1.xpose.msra.mxu0 0.0
    %3914 = vmatprep.subr.mxu0 0.0
    %3915 = vmatpush1.xpose.msra.mxu0 0.0
    %3916 = vmatprep.subr.mxu0 0.0
    %3917 = vmatpush1.xpose.msra.mxu0 0.0
    %3918 = vmatprep.subr.mxu0 0.0
    %3919 = vmatpush1.xpose.msra.mxu0 0.0
    %3920 = vmatprep.subr.mxu0 0.0
    %3921 = vmatpush1.xpose.msra.mxu0 0.0
    %3922 = vmatprep.subr.mxu0 0.0
    %3923 = vmatpush1.xpose.msra.mxu0 0.0
    %3924 = vmatprep.subr.mxu0 0.0
    %3925 = vmatpush1.xpose.msra.mxu0 0.0
    %3926 = vmatprep.subr.mxu0 0.0
    %3927 = vmatpush1.xpose.msra.mxu0 0.0
    %3928 = vmatprep.subr.mxu0 0.0
    %3929 = vmatpush1.xpose.msra.mxu0 0.0
    %3930 = vmatprep.subr.mxu0 0.0
    %3931 = vmatpush1.xpose.msra.mxu0 0.0
    %3932 = vmatprep.subr.mxu0 0.0
    %3933 = vmatpush1.xpose.msra.mxu0 0.0
    %3934 = vmatprep.subr.mxu0 0.0
    %3935 = vmatpush1.xpose.msra.mxu0 0.0
    %3936 = vmatprep.subr.mxu0 0.0
    %3937 = vmatpush1.xpose.msra.mxu0 0.0
    %3938 = vmatprep.subr.mxu0 0.0
    %3939 = vmatpush1.xpose.msra.mxu0 0.0
    %3940 = vmatprep.subr.mxu0 0.0
    %3941 = vmatpush1.xpose.msra.mxu0 0.0
    %3942 = vmatprep.subr.mxu0 0.0
    %3943 = vmatpush1.xpose.msra.mxu0 0.0
    %3944 = vmatprep.subr.mxu0 0.0
    %3945 = vmatpush1.xpose.msra.mxu0 0.0
    %3946 = vmatprep.subr.mxu0 0.0
    %3947 = vmatpush1.xpose.msra.mxu0 0.0
    %3948 = vmatprep.subr.mxu0 0.0
    %3949 = vmatpush1.xpose.msra.mxu0 0.0
    %3950 = vmatprep.subr.mxu0 0.0
    %3951 = vmatpush1.xpose.msra.mxu0 0.0
    %3952 = vmatprep.subr.mxu0 0.0
    %3953 = vmatpush1.xpose.msra.mxu0 0.0
    %3954 = vmatprep.subr.mxu0 0.0
    %3955 = vmatpush1.xpose.msra.mxu0 0.0
    %3956 = vmatprep.subr.mxu0 0.0
    %3957 = vmatpush1.xpose.msra.mxu0 0.0
    %3958 = vmatprep.subr.mxu0 0.0
    %3959 = vmatpush1.xpose.msra.mxu0 0.0
    %3960 = vmatprep.subr.mxu0 0.0
    %3961 = vmatpush1.xpose.msra.mxu0 0.0
    %3962 = vmatprep.mubr.f32.mxu0 0.0
    %3963 = vmatmul.mubr.f32.gmra.mrb[0].mxu0 %v3890
    %v3964 = vpop.f32.mrb[0].mxu0
    %v3965 = vadd.f32 0.0, %v3964
    %v3966 = vpop.f32.mrb[0].mxu0
    %3967 = vmatprep.mubr.f32.mxu0 0.0
    %3968 = vmatmul.mubr.f32.gmra.mrb[0].mxu0 %v3892
    %v3969 = vpop.f32.mrb[0].mxu0
    %v3970 = vadd.f32 0.0, %v3969
    %v3971 = vpop.f32.mrb[0].mxu0
    %3972 = vdwg.mxu0
    %3973 = vrot.lane.b32.xlu0 %v2666, 104
    %v3974 = vpop.permute.xlu0 %3973
    %3975 = vrot.lane.b32.xlu0 %v2671, 104
    %v3976 = vpop.permute.xlu0 %3975
    %3977 = vrot.lane.b32.xlu0 %v2666, 72
    %v3978 = vpop.permute.xlu0 %3977
    %3979 = vrot.lane.b32.xlu0 %v2671, 72
    %v3980 = vpop.permute.xlu0 %3979
    %v3981 = vsel %vm420, %v3974, 0
    %v3983 = vsel %vm420, %v3976, 0
    %v3985 = vsel %vm420, %v3978, 0
    %v3987 = vsel %vm420, %v3980, 0
    %3989 = vmatprep.subr.mxu0 0.0
    %3990 = vmatpush1.xpose.msra.mxu0 %v3985
    %3991 = vmatprep.subr.mxu0 0.0
    %3992 = vmatpush1.xpose.msra.mxu0 %v3987
    %3993 = vmatprep.subr.mxu0 0.0
    %3994 = vmatpush1.xpose.msra.mxu0 0.0
    %3995 = vmatprep.subr.mxu0 0.0
    %3996 = vmatpush1.xpose.msra.mxu0 0.0
    %3997 = vmatprep.subr.mxu0 0.0
    %3998 = vmatpush1.xpose.msra.mxu0 0.0
    %3999 = vmatprep.subr.mxu0 0.0
    %4000 = vmatpush1.xpose.msra.mxu0 0.0
    %4001 = vmatprep.subr.mxu0 0.0
    %4002 = vmatpush1.xpose.msra.mxu0 0.0
    %4003 = vmatprep.subr.mxu0 0.0
    %4004 = vmatpush1.xpose.msra.mxu0 0.0
    %4005 = vmatprep.subr.mxu0 0.0
    %4006 = vmatpush1.xpose.msra.mxu0 0.0
    %4007 = vmatprep.subr.mxu0 0.0
    %4008 = vmatpush1.xpose.msra.mxu0 0.0
    %4009 = vmatprep.subr.mxu0 0.0
    %4010 = vmatpush1.xpose.msra.mxu0 0.0
    %4011 = vmatprep.subr.mxu0 0.0
    %4012 = vmatpush1.xpose.msra.mxu0 0.0
    %4013 = vmatprep.subr.mxu0 0.0
    %4014 = vmatpush1.xpose.msra.mxu0 0.0
    %4015 = vmatprep.subr.mxu0 0.0
    %4016 = vmatpush1.xpose.msra.mxu0 0.0
    %4017 = vmatprep.subr.mxu0 0.0
    %4018 = vmatpush1.xpose.msra.mxu0 0.0
    %4019 = vmatprep.subr.mxu0 0.0
    %4020 = vmatpush1.xpose.msra.mxu0 0.0
    %4021 = vmatprep.subr.mxu0 0.0
    %4022 = vmatpush1.xpose.msra.mxu0 0.0
    %4023 = vmatprep.subr.mxu0 0.0
    %4024 = vmatpush1.xpose.msra.mxu0 0.0
    %4025 = vmatprep.subr.mxu0 0.0
    %4026 = vmatpush1.xpose.msra.mxu0 0.0
    %4027 = vmatprep.subr.mxu0 0.0
    %4028 = vmatpush1.xpose.msra.mxu0 0.0
    %4029 = vmatprep.subr.mxu0 0.0
    %4030 = vmatpush1.xpose.msra.mxu0 0.0
    %4031 = vmatprep.subr.mxu0 0.0
    %4032 = vmatpush1.xpose.msra.mxu0 0.0
    %4033 = vmatprep.subr.mxu0 0.0
    %4034 = vmatpush1.xpose.msra.mxu0 0.0
    %4035 = vmatprep.subr.mxu0 0.0
    %4036 = vmatpush1.xpose.msra.mxu0 0.0
    %4037 = vmatprep.subr.mxu0 0.0
    %4038 = vmatpush1.xpose.msra.mxu0 0.0
    %4039 = vmatprep.subr.mxu0 0.0
    %4040 = vmatpush1.xpose.msra.mxu0 0.0
    %4041 = vmatprep.subr.mxu0 0.0
    %4042 = vmatpush1.xpose.msra.mxu0 0.0
    %4043 = vmatprep.subr.mxu0 0.0
    %4044 = vmatpush1.xpose.msra.mxu0 0.0
    %4045 = vmatprep.subr.mxu0 0.0
    %4046 = vmatpush1.xpose.msra.mxu0 0.0
    %4047 = vmatprep.subr.mxu0 0.0
    %4048 = vmatpush1.xpose.msra.mxu0 0.0
    %4049 = vmatprep.subr.mxu0 0.0
    %4050 = vmatpush1.xpose.msra.mxu0 0.0
    %4051 = vmatprep.subr.mxu0 0.0
    %4052 = vmatpush1.xpose.msra.mxu0 0.0
    %4053 = vmatprep.mubr.f32.mxu0 0.0
    %4054 = vmatmul.mubr.f32.gmra.mrb[0].mxu0 %v3981
    %v4055 = vpop.f32.mrb[0].mxu0
    %v4056 = vadd.f32 0.0, %v4055
    %v4057 = vpop.f32.mrb[0].mxu0
    %4058 = vmatprep.mubr.f32.mxu0 0.0
    %4059 = vmatmul.mubr.f32.gmra.mrb[0].mxu0 %v3983
    %v4060 = vpop.f32.mrb[0].mxu0
    %v4061 = vadd.f32 0.0, %v4060
    %v4062 = vpop.f32.mrb[0].mxu0
    %4063 = vdwg.mxu0
    %v4064 = vmul.f32 %v3965, 0.35355338
    %v4065 = vmul.f32 %v3970, 0.35355338
    %v4066 = vmul.f32 %v4056, 0.35355338
    %v4067 = vmul.f32 %v4061, 0.35355338
    %v4068 = vsel %vm597, %v4064, -inf
    %4069 = vmax.xlane.f32.xlu0 %v4068
    %v4070 = vpop.xlane.xlu0 %4069
    %v4071 = vsel %vm597, %v4065, -inf
    %4072 = vmax.xlane.f32.xlu0 %v4071
    %v4073 = vpop.xlane.xlu0 %4072
    %v4074 = vsel %vm597, %v4066, -inf
    %4075 = vmax.xlane.f32.xlu0 %v4074
    %v4076 = vpop.xlane.xlu0 %4075
    %v4077 = vsel %vm597, %v4067, -inf
    %4078 = vmax.xlane.f32.xlu0 %v4077
    %v4079 = vpop.xlane.xlu0 %4078
    %v4080 = vsub.f32 %v4064, %v4070
    %v4081 = vsub.f32 %v4065, %v4073
    %v4082 = vsub.f32 %v4066, %v4076
    %v4083 = vsub.f32 %v4067, %v4079
    %v4084 = vmul.f32 %v4080, 1.442695
    %v4085 = vpow.pop %v4084
    %v4086 = vmul.f32 %v4081, 1.442695
    %v4087 = vpow.pop %v4086
    %v4088 = vmul.f32 %v4082, 1.442695
    %v4089 = vpow.pop %v4088
    %v4090 = vmul.f32 %v4083, 1.442695
    %v4091 = vpow.pop %v4090
    %v4092 = vsel %vm597, %v4085, 0.0
    %4093 = vadd.xlane.f32.xlu0 %v4092
    %v4094 = vpop.xlane.xlu0 %4093
    %v4095 = vsel %vm597, %v4087, 0.0
    %4096 = vadd.xlane.f32.xlu0 %v4095
    %v4097 = vpop.xlane.xlu0 %4096
    %v4098 = vsel %vm597, %v4089, 0.0
    %4099 = vadd.xlane.f32.xlu0 %v4098
    %v4100 = vpop.xlane.xlu0 %4099
    %v4101 = vsel %vm597, %v4091, 0.0
    %4102 = vadd.xlane.f32.xlu0 %v4101
    %v4103 = vpop.xlane.xlu0 %4102
    %v4104 = vrcp.pop %v4094
    %v4105 = vrcp.pop %v4097
    %v4106 = vrcp.pop %v4100
    %v4107 = vrcp.pop %v4103
    %v4108 = vmul.f32 %v4085, %v4104
    %v4109 = vmul.f32 %v4087, %v4105
    %v4110 = vmul.f32 %v4089, %v4106
    %v4111 = vmul.f32 %v4091, %v4107
    %4112 = vrot.lane.b32.xlu0 %v2656, 40
    %v4113 = vpop.permute.xlu0 %4112
    %4114 = vrot.lane.b32.xlu0 %v2661, 40
    %v4115 = vpop.permute.xlu0 %4114
    %v4119 = vsel %vm597, %v4108, 0
    %v4122 = vsel %vm597, %v4109, 0
    %4124 = vmatprep.subr.mxu0 0.0
    %4125 = vmatpush1.msra.mxu0 %v4113
    %4126 = vmatprep.subr.mxu0 0.0
    %4127 = vmatpush1.msra.mxu0 %v4115
    %4128 = vmatprep.subr.mxu0 0.0
    %4129 = vmatpush1.msra.mxu0 0.0
    %4130 = vmatprep.subr.mxu0 0.0
    %4131 = vmatpush1.msra.mxu0 0.0
    %4132 = vmatprep.subr.mxu0 0.0
    %4133 = vmatpush1.msra.mxu0 0.0
    %4134 = vmatprep.subr.mxu0 0.0
    %4135 = vmatpush1.msra.mxu0 0.0
    %4136 = vmatprep.subr.mxu0 0.0
    %4137 = vmatpush1.msra.mxu0 0.0
    %4138 = vmatprep.subr.mxu0 0.0
    %4139 = vmatpush1.msra.mxu0 0.0
    %4140 = vmatprep.subr.mxu0 0.0
    %4141 = vmatpush1.msra.mxu0 0.0
    %4142 = vmatprep.subr.mxu0 0.0
    %4143 = vmatpush1.msra.mxu0 0.0
    %4144 = vmatprep.subr.mxu0 0.0
    %4145 = vmatpush1.msra.mxu0 0.0
    %4146 = vmatprep.subr.mxu0 0.0
    %4147 = vmatpush1.msra.mxu0 0.0
    %4148 = vmatprep.subr.mxu0 0.0
    %4149 = vmatpush1.msra.mxu0 0.0
    %4150 = vmatprep.subr.mxu0 0.0
    %4151 = vmatpush1.msra.mxu0 0.0
    %4152 = vmatprep.subr.mxu0 0.0
    %4153 = vmatpush1.msra.mxu0 0.0
    %4154 = vmatprep.subr.mxu0 0.0
    %4155 = vmatpush1.msra.mxu0 0.0
    %4156 = vmatprep.subr.mxu0 0.0
    %4157 = vmatpush1.msra.mxu0 0.0
    %4158 = vmatprep.subr.mxu0 0.0
    %4159 = vmatpush1.msra.mxu0 0.0
    %4160 = vmatprep.subr.mxu0 0.0
    %4161 = vmatpush1.msra.mxu0 0.0
    %4162 = vmatprep.subr.mxu0 0.0
    %4163 = vmatpush1.msra.mxu0 0.0
    %4164 = vmatprep.subr.mxu0 0.0
    %4165 = vmatpush1.msra.mxu0 0.0
    %4166 = vmatprep.subr.mxu0 0.0
    %4167 = vmatpush1.msra.mxu0 0.0
    %4168 = vmatprep.subr.mxu0 0.0
    %4169 = vmatpush1.msra.mxu0 0.0
    %4170 = vmatprep.subr.mxu0 0.0
    %4171 = vmatpush1.msra.mxu0 0.0
    %4172 = vmatprep.subr.mxu0 0.0
    %4173 = vmatpush1.msra.mxu0 0.0
    %4174 = vmatprep.subr.mxu0 0.0
    %4175 = vmatpush1.msra.mxu0 0.0
    %4176 = vmatprep.subr.mxu0 0.0
    %4177 = vmatpush1.msra.mxu0 0.0
    %4178 = vmatprep.subr.mxu0 0.0
    %4179 = vmatpush1.msra.mxu0 0.0
    %4180 = vmatprep.subr.mxu0 0.0
    %4181 = vmatpush1.msra.mxu0 0.0
    %4182 = vmatprep.subr.mxu0 0.0
    %4183 = vmatpush1.msra.mxu0 0.0
    %4184 = vmatprep.subr.mxu0 0.0
    %4185 = vmatpush1.msra.mxu0 0.0
    %4186 = vmatprep.subr.mxu0 0.0
    %4187 = vmatpush1.msra.mxu0 0.0
    %4188 = vmatprep.mubr.f32.mxu0 0.0
    %4189 = vmatmul.mubr.f32.gmra.mrb[0].mxu0 %v4119
    %v4190 = vpop.f32.mrb[0].mxu0
    %v4191 = vadd.f32 0.0, %v4190
    %v4192 = vpop.f32.mrb[0].mxu0
    %4193 = vmatprep.mubr.f32.mxu0 0.0
    %4194 = vmatmul.mubr.f32.gmra.mrb[0].mxu0 %v4122
    %v4195 = vpop.f32.mrb[0].mxu0
    %v4196 = vadd.f32 0.0, %v4195
    %v4197 = vpop.f32.mrb[0].mxu0
    %4198 = vdwg.mxu0
    %4199 = vrot.lane.b32.xlu0 %v2666, 40
    %v4200 = vpop.permute.xlu0 %4199
    %4201 = vrot.lane.b32.xlu0 %v2671, 40
    %v4202 = vpop.permute.xlu0 %4201
    %v4206 = vsel %vm597, %v4110, 0
    %v4209 = vsel %vm597, %v4111, 0
    %4211 = vmatprep.subr.mxu0 0.0
    %4212 = vmatpush1.msra.mxu0 %v4200
    %4213 = vmatprep.subr.mxu0 0.0
    %4214 = vmatpush1.msra.mxu0 %v4202
    %4215 = vmatprep.subr.mxu0 0.0
    %4216 = vmatpush1.msra.mxu0 0.0
    %4217 = vmatprep.subr.mxu0 0.0
    %4218 = vmatpush1.msra.mxu0 0.0
    %4219 = vmatprep.subr.mxu0 0.0
    %4220 = vmatpush1.msra.mxu0 0.0
    %4221 = vmatprep.subr.mxu0 0.0
    %4222 = vmatpush1.msra.mxu0 0.0
    %4223 = vmatprep.subr.mxu0 0.0
    %4224 = vmatpush1.msra.mxu0 0.0
    %4225 = vmatprep.subr.mxu0 0.0
    %4226 = vmatpush1.msra.mxu0 0.0
    %4227 = vmatprep.subr.mxu0 0.0
    %4228 = vmatpush1.msra.mxu0 0.0
    %4229 = vmatprep.subr.mxu0 0.0
    %4230 = vmatpush1.msra.mxu0 0.0
    %4231 = vmatprep.subr.mxu0 0.0
    %4232 = vmatpush1.msra.mxu0 0.0
    %4233 = vmatprep.subr.mxu0 0.0
    %4234 = vmatpush1.msra.mxu0 0.0
    %4235 = vmatprep.subr.mxu0 0.0
    %4236 = vmatpush1.msra.mxu0 0.0
    %4237 = vmatprep.subr.mxu0 0.0
    %4238 = vmatpush1.msra.mxu0 0.0
    %4239 = vmatprep.subr.mxu0 0.0
    %4240 = vmatpush1.msra.mxu0 0.0
    %4241 = vmatprep.subr.mxu0 0.0
    %4242 = vmatpush1.msra.mxu0 0.0
    %4243 = vmatprep.subr.mxu0 0.0
    %4244 = vmatpush1.msra.mxu0 0.0
    %4245 = vmatprep.subr.mxu0 0.0
    %4246 = vmatpush1.msra.mxu0 0.0
    %4247 = vmatprep.subr.mxu0 0.0
    %4248 = vmatpush1.msra.mxu0 0.0
    %4249 = vmatprep.subr.mxu0 0.0
    %4250 = vmatpush1.msra.mxu0 0.0
    %4251 = vmatprep.subr.mxu0 0.0
    %4252 = vmatpush1.msra.mxu0 0.0
    %4253 = vmatprep.subr.mxu0 0.0
    %4254 = vmatpush1.msra.mxu0 0.0
    %4255 = vmatprep.subr.mxu0 0.0
    %4256 = vmatpush1.msra.mxu0 0.0
    %4257 = vmatprep.subr.mxu0 0.0
    %4258 = vmatpush1.msra.mxu0 0.0
    %4259 = vmatprep.subr.mxu0 0.0
    %4260 = vmatpush1.msra.mxu0 0.0
    %4261 = vmatprep.subr.mxu0 0.0
    %4262 = vmatpush1.msra.mxu0 0.0
    %4263 = vmatprep.subr.mxu0 0.0
    %4264 = vmatpush1.msra.mxu0 0.0
    %4265 = vmatprep.subr.mxu0 0.0
    %4266 = vmatpush1.msra.mxu0 0.0
    %4267 = vmatprep.subr.mxu0 0.0
    %4268 = vmatpush1.msra.mxu0 0.0
    %4269 = vmatprep.subr.mxu0 0.0
    %4270 = vmatpush1.msra.mxu0 0.0
    %4271 = vmatprep.subr.mxu0 0.0
    %4272 = vmatpush1.msra.mxu0 0.0
    %4273 = vmatprep.subr.mxu0 0.0
    %4274 = vmatpush1.msra.mxu0 0.0
    %4275 = vmatprep.mubr.f32.mxu0 0.0
    %4276 = vmatmul.mubr.f32.gmra.mrb[0].mxu0 %v4206
    %v4277 = vpop.f32.mrb[0].mxu0
    %v4278 = vadd.f32 0.0, %v4277
    %v4279 = vpop.f32.mrb[0].mxu0
    %4280 = vmatprep.mubr.f32.mxu0 0.0
    %4281 = vmatmul.mubr.f32.gmra.mrb[0].mxu0 %v4209
    %v4282 = vpop.f32.mrb[0].mxu0
    %v4283 = vadd.f32 0.0, %v4282
    %v4284 = vpop.f32.mrb[0].mxu0
    %4285 = vdwg.mxu0
    %4290 = vrot.lane.b32.xlu0 %v3383, 8
    %v4291 = vpop.permute.xlu0 %4290
    %4292 = vrot.lane.b32.xlu0 %v3388, 8
    %v4293 = vpop.permute.xlu0 %4292
    %4294 = vrot.lane.b32.xlu0 %v3470, 8
    %v4295 = vpop.permute.xlu0 %4294
    %4296 = vrot.lane.b32.xlu0 %v3475, 8
    %v4297 = vpop.permute.xlu0 %4296
    %4306 = vrot.lane.b32.xlu0 %v3787, 16
    %v4307 = vpop.permute.xlu0 %4306
    %4308 = vrot.lane.b32.xlu0 %v3792, 16
    %v4309 = vpop.permute.xlu0 %4308
    %4310 = vrot.lane.b32.xlu0 %v3874, 16
    %v4311 = vpop.permute.xlu0 %4310
    %4312 = vrot.lane.b32.xlu0 %v3879, 16
    %v4313 = vpop.permute.xlu0 %4312
    %4322 = vrot.lane.b32.xlu0 %v4191, 24
    %v4323 = vpop.permute.xlu0 %4322
    %4324 = vrot.lane.b32.xlu0 %v4196, 24
    %v4325 = vpop.permute.xlu0 %4324
    %4326 = vrot.lane.b32.xlu0 %v4278, 24
    %v4327 = vpop.permute.xlu0 %4326
    %4328 = vrot.lane.b32.xlu0 %v4283, 24
    %v4329 = vpop.permute.xlu0 %4328
    %v4334 = vsel %vm420, %v2979, %v4291
    %v4335 = vsel %vm420, %v2984, %v4293
    %v4336 = vsel %vm420, %v3066, %v4295
    %v4337 = vsel %vm420, %v3071, %v4297
    %v4338 = vsel %vm597, %v4334, %v4307
    %v4339 = vsel %vm597, %v4335, %v4309
    %v4340 = vsel %vm597, %v4336, %v4311
    %v4341 = vsel %vm597, %v4337, %v4313
    %v4342 = vsel %vm2084, %v4338, %v4323
    %v4343 = vsel %vm2084, %v4339, %v4325
    %v4344 = vsel %vm2084, %v4340, %v4327
    %v4345 = vsel %vm2084, %v4341, %v4329
    %s4346 = scalar_lea.vmem %s6, 32
    %v4347 = vld [vmem:[%s4346] sm:$0xff]
    %v4348 = vld [vmem:[%s4346 + $0x8] sm:$0xff]
    %v4349 = vld [vmem:[%s4346 + $0x10] sm:$0xff]
    %v4350 = vld [vmem:[%s4346 + $0x18] sm:$0xff]
    %v4352 = vsel %vm316, %v4342, 0
    %v4355 = vsel %vm316, %v4343, 0
    %v4358 = vsel %vm316, %v4344, 0
    %v4361 = vsel %vm316, %v4345, 0
    %4363 = vmatprep.subr.mxu0 0.0
    %4364 = vmatpush1.msra.mxu0 %v4347
    %4365 = vmatprep.subr.mxu0 0.0
    %4366 = vmatpush1.msra.mxu0 %v4348
    %4367 = vmatprep.subr.mxu0 0.0
    %4368 = vmatpush1.msra.mxu0 %v4349
    %4369 = vmatprep.subr.mxu0 0.0
    %4370 = vmatpush1.msra.mxu0 %v4350
    %4371 = vmatprep.subr.mxu0 0.0
    %4372 = vmatpush1.msra.mxu0 0.0
    %4373 = vmatprep.subr.mxu0 0.0
    %4374 = vmatpush1.msra.mxu0 0.0
    %4375 = vmatprep.subr.mxu0 0.0
    %4376 = vmatpush1.msra.mxu0 0.0
    %4377 = vmatprep.subr.mxu0 0.0
    %4378 = vmatpush1.msra.mxu0 0.0
    %4379 = vmatprep.subr.mxu0 0.0
    %4380 = vmatpush1.msra.mxu0 0.0
    %4381 = vmatprep.subr.mxu0 0.0
    %4382 = vmatpush1.msra.mxu0 0.0
    %4383 = vmatprep.subr.mxu0 0.0
    %4384 = vmatpush1.msra.mxu0 0.0
    %4385 = vmatprep.subr.mxu0 0.0
    %4386 = vmatpush1.msra.mxu0 0.0
    %4387 = vmatprep.subr.mxu0 0.0
    %4388 = vmatpush1.msra.mxu0 0.0
    %4389 = vmatprep.subr.mxu0 0.0
    %4390 = vmatpush1.msra.mxu0 0.0
    %4391 = vmatprep.subr.mxu0 0.0
    %4392 = vmatpush1.msra.mxu0 0.0
    %4393 = vmatprep.subr.mxu0 0.0
    %4394 = vmatpush1.msra.mxu0 0.0
    %4395 = vmatprep.subr.mxu0 0.0
    %4396 = vmatpush1.msra.mxu0 0.0
    %4397 = vmatprep.subr.mxu0 0.0
    %4398 = vmatpush1.msra.mxu0 0.0
    %4399 = vmatprep.subr.mxu0 0.0
    %4400 = vmatpush1.msra.mxu0 0.0
    %4401 = vmatprep.subr.mxu0 0.0
    %4402 = vmatpush1.msra.mxu0 0.0
    %4403 = vmatprep.subr.mxu0 0.0
    %4404 = vmatpush1.msra.mxu0 0.0
    %4405 = vmatprep.subr.mxu0 0.0
    %4406 = vmatpush1.msra.mxu0 0.0
    %4407 = vmatprep.subr.mxu0 0.0
    %4408 = vmatpush1.msra.mxu0 0.0
    %4409 = vmatprep.subr.mxu0 0.0
    %4410 = vmatpush1.msra.mxu0 0.0
    %4411 = vmatprep.subr.mxu0 0.0
    %4412 = vmatpush1.msra.mxu0 0.0
    %4413 = vmatprep.subr.mxu0 0.0
    %4414 = vmatpush1.msra.mxu0 0.0
    %4415 = vmatprep.subr.mxu0 0.0
    %4416 = vmatpush1.msra.mxu0 0.0
    %4417 = vmatprep.subr.mxu0 0.0
    %4418 = vmatpush1.msra.mxu0 0.0
    %4419 = vmatprep.subr.mxu0 0.0
    %4420 = vmatpush1.msra.mxu0 0.0
    %4421 = vmatprep.subr.mxu0 0.0
    %4422 = vmatpush1.msra.mxu0 0.0
    %4423 = vmatprep.subr.mxu0 0.0
    %4424 = vmatpush1.msra.mxu0 0.0
    %4425 = vmatprep.subr.mxu0 0.0
    %4426 = vmatpush1.msra.mxu0 0.0
    %4427 = vmatprep.mubr.f32.mxu0 0.0
    %4428 = vmatmul.mubr.f32.gmra.mrb[0].mxu0 %v4352
    %v4429 = vpop.f32.mrb[0].mxu0
    %v4430 = vadd.f32 0.0, %v4429
    %v4431 = vpop.f32.mrb[0].mxu0
    %4432 = vmatprep.mubr.f32.mxu0 0.0
    %4433 = vmatmul.mubr.f32.gmra.mrb[0].mxu0 %v4355
    %v4434 = vpop.f32.mrb[0].mxu0
    %v4435 = vadd.f32 0.0, %v4434
    %v4436 = vpop.f32.mrb[0].mxu0
    %4437 = vmatprep.mubr.f32.mxu0 0.0
    %4438 = vmatmul.mubr.f32.gmra.mrb[0].mxu0 %v4358
    %v4439 = vpop.f32.mrb[0].mxu0
    %v4440 = vadd.f32 0.0, %v4439
    %v4441 = vpop.f32.mrb[0].mxu0
    %4442 = vmatprep.mubr.f32.mxu0 0.0
    %4443 = vmatmul.mubr.f32.gmra.mrb[0].mxu0 %v4361
    %v4444 = vpop.f32.mrb[0].mxu0
    %v4445 = vadd.f32 0.0, %v4444
    %v4446 = vpop.f32.mrb[0].mxu0
    %4447 = vdwg.mxu0
    %v4448 = vadd.f32 %v2568, %v4430
    %v4449 = vadd.f32 %v2569, %v4435
    %v4450 = vadd.f32 %v2570, %v4440
    %v4451 = vadd.f32 %v2571, %v4445
    %s4452 = scalar_lea.vmem [#allocation10], 1
    %v4453 = vld [vmem:[%s4452] sm:$0x1]
    %s4454 = scalar_lea.vmem [#allocation11], 1
    %v4455 = vld [vmem:[%s4454] sm:$0x1]
    %v4456 = vsel %vm316, %v4448, 0.0
    %4457 = vadd.xlane.f32.xlu0 %v4456
    %v4458 = vpop.xlane.xlu0 %4457
    %v4459 = vsel %vm316, %v4449, 0.0
    %4460 = vadd.xlane.f32.xlu0 %v4459
    %v4461 = vpop.xlane.xlu0 %4460
    %v4462 = vsel %vm316, %v4450, 0.0
    %4463 = vadd.xlane.f32.xlu0 %v4462
    %v4464 = vpop.xlane.xlu0 %4463
    %v4465 = vsel %vm316, %v4451, 0.0
    %4466 = vadd.xlane.f32.xlu0 %v4465
    %v4467 = vpop.xlane.xlu0 %4466
    %v4468 = vmul.f32 %v4458, %v2208
    %v4469 = vmul.f32 %v4461, %v2208
    %v4470 = vmul.f32 %v4464, %v2208
    %v4471 = vmul.f32 %v4467, %v2208
    %v4472 = vsub.f32 %v4448, %v4468
    %v4473 = vsub.f32 %v4449, %v4469
    %v4474 = vsub.f32 %v4450, %v4470
    %v4475 = vsub.f32 %v4451, %v4471
    %v4476 = vmul.f32 %v4472, %v4472
    %v4477 = vmul.f32 %v4473, %v4473
    %v4478 = vmul.f32 %v4474, %v4474
    %v4479 = vmul.f32 %v4475, %v4475
    %v4480 = vsel %vm316, %v4476, 0.0
    %4481 = vadd.xlane.f32.xlu0 %v4480
    %v4482 = vpop.xlane.xlu0 %4481
    %v4483 = vsel %vm316, %v4477, 0.0
    %4484 = vadd.xlane.f32.xlu0 %v4483
    %v4485 = vpop.xlane.xlu0 %4484
    %v4486 = vsel %vm316, %v4478, 0.0
    %4487 = vadd.xlane.f32.xlu0 %v4486
    %v4488 = vpop.xlane.xlu0 %4487
    %v4489 = vsel %vm316, %v4479, 0.0
    %4490 = vadd.xlane.f32.xlu0 %v4489
    %v4491 = vpop.xlane.xlu0 %4490
    %v4492 = vmul.f32 %v4482, %v2208
    %v4493 = vmul.f32 %v4485, %v2208
    %v4494 = vmul.f32 %v4488, %v2208
    %v4495 = vmul.f32 %v4491, %v2208
    %v4496 = vadd.f32 %v4492, 1e-05
    %v4497 = vadd.f32 %v4493, 1e-05
    %v4498 = vadd.f32 %v4494, 1e-05
    %v4499 = vadd.f32 %v4495, 1e-05
    %v4500 = vrsqrt.pop %v4496
    %v4501 = vrsqrt.pop %v4497
    %v4502 = vrsqrt.pop %v4498
    %v4503 = vrsqrt.pop %v4499
    %v4504 = vmul.f32 %v4472, %v4500
    %v4505 = vmul.f32 %v4473, %v4501
    %v4506 = vmul.f32 %v4474, %v4502
    %v4507 = vmul.f32 %v4475, %v4503
    %v4509 = vlaneseq
    %v4510 = vshrl.u32 %v4509, 7
    %v4511 = vsub.s32 0, %v4510
    %v4512 = vrot.slane %v4453, %v4511
    %v4514 = vmul.f32 %v4504, %v4512
    %v4515 = vmul.f32 %v4505, %v4512
    %v4516 = vmul.f32 %v4506, %v4512
    %v4517 = vmul.f32 %v4507, %v4512
    %v4519 = vlaneseq
    %v4520 = vshrl.u32 %v4519, 7
    %v4521 = vsub.s32 0, %v4520
    %v4522 = vrot.slane %v4455, %v4521
    %v4524 = vadd.f32 %v4514, %v4522
    %v4525 = vadd.f32 %v4515, %v4522
    %v4526 = vadd.f32 %v4516, %v4522
    %v4527 = vadd.f32 %v4517, %v4522
    %s4528 = scalar_lea.vmem %s9, 32
    %v4529 = vld [vmem:[%s4528] sm:$0xff]
    %v4530 = vld [vmem:[%s4528 + $0x8] sm:$0xff]
    %v4531 = vld [vmem:[%s4528 + $0x10] sm:$0xff]
    %v4532 = vld [vmem:[%s4528 + $0x18] sm:$0xff]
    %s4533 = scalar_lea.vmem [#allocation13], 1
    %v4534 = vld [vmem:[%s4533] sm:$0x1]
    %v4536 = vlaneseq
    %v4537 = vshrl.u32 %v4536, 7
    %v4538 = vsub.s32 0, %v4537
    %v4539 = vrot.slane %v4534, %v4538
    %v4542 = vsel %vm316, %v4524, 0
    %v4545 = vsel %vm316, %v4525, 0
    %v4548 = vsel %vm316, %v4526, 0
    %v4551 = vsel %vm316, %v4527, 0
    %4553 = vmatprep.subr.mxu0 0.0
    %4554 = vmatpush1.msra.mxu0 %v4529
    %4555 = vmatprep.subr.mxu0 0.0
    %4556 = vmatpush1.msra.mxu0 %v4530
    %4557 = vmatprep.subr.mxu0 0.0
    %4558 = vmatpush1.msra.mxu0 %v4531
    %4559 = vmatprep.subr.mxu0 0.0
    %4560 = vmatpush1.msra.mxu0 %v4532
    %4561 = vmatprep.subr.mxu0 0.0
    %4562 = vmatpush1.msra.mxu0 0.0
    %4563 = vmatprep.subr.mxu0 0.0
    %4564 = vmatpush1.msra.mxu0 0.0
    %4565 = vmatprep.subr.mxu0 0.0
    %4566 = vmatpush1.msra.mxu0 0.0
    %4567 = vmatprep.subr.mxu0 0.0
    %4568 = vmatpush1.msra.mxu0 0.0
    %4569 = vmatprep.subr.mxu0 0.0
    %4570 = vmatpush1.msra.mxu0 0.0
    %4571 = vmatprep.subr.mxu0 0.0
    %4572 = vmatpush1.msra.mxu0 0.0
    %4573 = vmatprep.subr.mxu0 0.0
    %4574 = vmatpush1.msra.mxu0 0.0
    %4575 = vmatprep.subr.mxu0 0.0
    %4576 = vmatpush1.msra.mxu0 0.0
    %4577 = vmatprep.subr.mxu0 0.0
    %4578 = vmatpush1.msra.mxu0 0.0
    %4579 = vmatprep.subr.mxu0 0.0
    %4580 = vmatpush1.msra.mxu0 0.0
    %4581 = vmatprep.subr.mxu0 0.0
    %4582 = vmatpush1.msra.mxu0 0.0
    %4583 = vmatprep.subr.mxu0 0.0
    %4584 = vmatpush1.msra.mxu0 0.0
    %4585 = vmatprep.subr.mxu0 0.0
    %4586 = vmatpush1.msra.mxu0 0.0
    %4587 = vmatprep.subr.mxu0 0.0
    %4588 = vmatpush1.msra.mxu0 0.0
    %4589 = vmatprep.subr.mxu0 0.0
    %4590 = vmatpush1.msra.mxu0 0.0
    %4591 = vmatprep.subr.mxu0 0.0
    %4592 = vmatpush1.msra.mxu0 0.0
    %4593 = vmatprep.subr.mxu0 0.0
    %4594 = vmatpush1.msra.mxu0 0.0
    %4595 = vmatprep.subr.mxu0 0.0
    %4596 = vmatpush1.msra.mxu0 0.0
    %4597 = vmatprep.subr.mxu0 0.0
    %4598 = vmatpush1.msra.mxu0 0.0
    %4599 = vmatprep.subr.mxu0 0.0
    %4600 = vmatpush1.msra.mxu0 0.0
    %4601 = vmatprep.subr.mxu0 0.0
    %4602 = vmatpush1.msra.mxu0 0.0
    %4603 = vmatprep.subr.mxu0 0.0
    %4604 = vmatpush1.msra.mxu0 0.0
    %4605 = vmatprep.subr.mxu0 0.0
    %4606 = vmatpush1.msra.mxu0 0.0
    %4607 = vmatprep.subr.mxu0 0.0
    %4608 = vmatpush1.msra.mxu0 0.0
    %4609 = vmatprep.subr.mxu0 0.0
    %4610 = vmatpush1.msra.mxu0 0.0
    %4611 = vmatprep.subr.mxu0 0.0
    %4612 = vmatpush1.msra.mxu0 0.0
    %4613 = vmatprep.subr.mxu0 0.0
    %4614 = vmatpush1.msra.mxu0 0.0
    %4615 = vmatprep.subr.mxu0 0.0
    %4616 = vmatpush1.msra.mxu0 0.0
    %4617 = vmatprep.mubr.f32.mxu0 0.0
    %4618 = vmatmul.mubr.f32.gmra.mrb[0].mxu0 %v4542
    %v4619 = vpop.f32.mrb[0].mxu0
    %v4620 = vadd.f32 %v4539, %v4619
    %v4621 = vpop.f32.mrb[0].mxu0
    %4622 = vmatprep.mubr.f32.mxu0 0.0
    %4623 = vmatmul.mubr.f32.gmra.mrb[0].mxu0 %v4545
    %v4624 = vpop.f32.mrb[0].mxu0
    %v4625 = vadd.f32 %v4539, %v4624
    %v4626 = vpop.f32.mrb[0].mxu0
    %4627 = vmatprep.mubr.f32.mxu0 0.0
    %4628 = vmatmul.mubr.f32.gmra.mrb[0].mxu0 %v4548
    %v4629 = vpop.f32.mrb[0].mxu0
    %v4630 = vadd.f32 %v4539, %v4629
    %v4631 = vpop.f32.mrb[0].mxu0
    %4632 = vmatprep.mubr.f32.mxu0 0.0
    %4633 = vmatmul.mubr.f32.gmra.mrb[0].mxu0 %v4551
    %v4634 = vpop.f32.mrb[0].mxu0
    %v4635 = vadd.f32 %v4539, %v4634
    %v4636 = vpop.f32.mrb[0].mxu0
    %4637 = vdwg.mxu0
    %v4638 = vmax.f32 %v4620, 0.0
    %v4639 = vmax.f32 %v4625, 0.0
    %v4640 = vmax.f32 %v4630, 0.0
    %v4641 = vmax.f32 %v4635, 0.0
    %s4642 = scalar_lea.vmem %s11, 64
    %v4643 = vld [vmem:[%s4642] sm:$0xff]
    %v4644 = vld [vmem:[%s4642 + $0x8] sm:$0xff]
    %v4645 = vld [vmem:[%s4642 + $0x10] sm:$0xff]
    %v4646 = vld [vmem:[%s4642 + $0x18] sm:$0xff]
    %v4647 = vld [vmem:[%s4642 + $0x20] sm:$0xff]
    %v4648 = vld [vmem:[%s4642 + $0x28] sm:$0xff]
    %v4649 = vld [vmem:[%s4642 + $0x30] sm:$0xff]
    %v4650 = vld [vmem:[%s4642 + $0x38] sm:$0xff]
    %s4651 = scalar_lea.vmem [#allocation14], 1
    %v4652 = vld [vmem:[%s4651] sm:$0x1]
    %v4654 = vlaneseq
    %v4655 = vshrl.u32 %v4654, 7
    %v4656 = vsub.s32 0, %v4655
    %v4657 = vrot.slane %v4652, %v4656
    %v4660 = vsel %vm2396, %v4638, 0
    %v4663 = vsel %vm2396, %v4639, 0
    %v4666 = vsel %vm2396, %v4640, 0
    %v4669 = vsel %vm2396, %v4641, 0
    %4671 = vmatprep.subr.mxu0 0.0
    %4672 = vmatpush1.msra.mxu0 %v4643
    %4673 = vmatprep.subr.mxu0 0.0
    %4674 = vmatpush1.msra.mxu0 %v4644
    %4675 = vmatprep.subr.mxu0 0.0
    %4676 = vmatpush1.msra.mxu0 %v4645
    %4677 = vmatprep.subr.mxu0 0.0
    %4678 = vmatpush1.msra.mxu0 %v4646
    %4679 = vmatprep.subr.mxu0 0.0
    %4680 = vmatpush1.msra.mxu0 %v4647
    %4681 = vmatprep.subr.mxu0 0.0
    %4682 = vmatpush1.msra.mxu0 %v4648
    %4683 = vmatprep.subr.mxu0 0.0
    %4684 = vmatpush1.msra.mxu0 %v4649
    %4685 = vmatprep.subr.mxu0 0.0
    %4686 = vmatpush1.msra.mxu0 %v4650
    %4687 = vmatprep.subr.mxu0 0.0
    %4688 = vmatpush1.msra.mxu0 0.0
    %4689 = vmatprep.subr.mxu0 0.0
    %4690 = vmatpush1.msra.mxu0 0.0
    %4691 = vmatprep.subr.mxu0 0.0
    %4692 = vmatpush1.msra.mxu0 0.0
    %4693 = vmatprep.subr.mxu0 0.0
    %4694 = vmatpush1.msra.mxu0 0.0
    %4695 = vmatprep.subr.mxu0 0.0
    %4696 = vmatpush1.msra.mxu0 0.0
    %4697 = vmatprep.subr.mxu0 0.0
    %4698 = vmatpush1.msra.mxu0 0.0
    %4699 = vmatprep.subr.mxu0 0.0
    %4700 = vmatpush1.msra.mxu0 0.0
    %4701 = vmatprep.subr.mxu0 0.0
    %4702 = vmatpush1.msra.mxu0 0.0
    %4703 = vmatprep.subr.mxu0 0.0
    %4704 = vmatpush1.msra.mxu0 0.0
    %4705 = vmatprep.subr.mxu0 0.0
    %4706 = vmatpush1.msra.mxu0 0.0
    %4707 = vmatprep.subr.mxu0 0.0
    %4708 = vmatpush1.msra.mxu0 0.0
    %4709 = vmatprep.subr.mxu0 0.0
    %4710 = vmatpush1.msra.mxu0 0.0
    %4711 = vmatprep.subr.mxu0 0.0
    %4712 = vmatpush1.msra.mxu0 0.0
    %4713 = vmatprep.subr.mxu0 0.0
    %4714 = vmatpush1.msra.mxu0 0.0
    %4715 = vmatprep.subr.mxu0 0.0
    %4716 = vmatpush1.msra.mxu0 0.0
    %4717 = vmatprep.subr.mxu0 0.0
    %4718 = vmatpush1.msra.mxu0 0.0
    %4719 = vmatprep.subr.mxu0 0.0
    %4720 = vmatpush1.msra.mxu0 0.0
    %4721 = vmatprep.subr.mxu0 0.0
    %4722 = vmatpush1.msra.mxu0 0.0
    %4723 = vmatprep.subr.mxu0 0.0
    %4724 = vmatpush1.msra.mxu0 0.0
    %4725 = vmatprep.subr.mxu0 0.0
    %4726 = vmatpush1.msra.mxu0 0.0
    %4727 = vmatprep.subr.mxu0 0.0
    %4728 = vmatpush1.msra.mxu0 0.0
    %4729 = vmatprep.subr.mxu0 0.0
    %4730 = vmatpush1.msra.mxu0 0.0
    %4731 = vmatprep.subr.mxu0 0.0
    %4732 = vmatpush1.msra.mxu0 0.0
    %4733 = vmatprep.subr.mxu0 0.0
    %4734 = vmatpush1.msra.mxu0 0.0
    %4735 = vmatprep.mubr.f32.mxu0 0.0
    %4736 = vmatmul.mubr.f32.gmra.mrb[0].mxu0 %v4660
    %v4737 = vpop.f32.mrb[0].mxu0
    %v4738 = vadd.f32 %v4657, %v4737
    %v4739 = vpop.f32.mrb[0].mxu0
    %4740 = vmatprep.mubr.f32.mxu0 0.0
    %4741 = vmatmul.mubr.f32.gmra.mrb[0].mxu0 %v4663
    %v4742 = vpop.f32.mrb[0].mxu0
    %v4743 = vadd.f32 %v4657, %v4742
    %v4744 = vpop.f32.mrb[0].mxu0
    %4745 = vmatprep.mubr.f32.mxu0 0.0
    %4746 = vmatmul.mubr.f32.gmra.mrb[0].mxu0 %v4666
    %v4747 = vpop.f32.mrb[0].mxu0
    %v4748 = vadd.f32 %v4657, %v4747
    %v4749 = vpop.f32.mrb[0].mxu0
    %4750 = vmatprep.mubr.f32.mxu0 0.0
    %4751 = vmatmul.mubr.f32.gmra.mrb[0].mxu0 %v4669
    %v4752 = vpop.f32.mrb[0].mxu0
    %v4753 = vadd.f32 %v4657, %v4752
    %v4754 = vpop.f32.mrb[0].mxu0
    %4755 = vdwg.mxu0
    %v4756 = vadd.f32 %v4524, %v4738
    %v4757 = vadd.f32 %v4525, %v4743
    %v4758 = vadd.f32 %v4526, %v4748
    %v4759 = vadd.f32 %v4527, %v4753
    %s4760 = scalar_lea.vmem [#allocation16], 1
    %v4761 = vld [vmem:[%s4760] sm:$0x1]
    %s4762 = scalar_lea.vmem [#allocation17], 1
    %v4763 = vld [vmem:[%s4762] sm:$0x1]
    %v4764 = vsel %vm316, %v4756, 0.0
    %4765 = vadd.xlane.f32.xlu0 %v4764
    %v4766 = vpop.xlane.xlu0 %4765
    %v4767 = vsel %vm316, %v4757, 0.0
    %4768 = vadd.xlane.f32.xlu0 %v4767
    %v4769 = vpop.xlane.xlu0 %4768
    %v4770 = vsel %vm316, %v4758, 0.0
    %4771 = vadd.xlane.f32.xlu0 %v4770
    %v4772 = vpop.xlane.xlu0 %4771
    %v4773 = vsel %vm316, %v4759, 0.0
    %4774 = vadd.xlane.f32.xlu0 %v4773
    %v4775 = vpop.xlane.xlu0 %4774
    %v4776 = vmul.f32 %v4766, %v2208
    %v4777 = vmul.f32 %v4769, %v2208
    %v4778 = vmul.f32 %v4772, %v2208
    %v4779 = vmul.f32 %v4775, %v2208
    %v4780 = vsub.f32 %v4756, %v4776
    %v4781 = vsub.f32 %v4757, %v4777
    %v4782 = vsub.f32 %v4758, %v4778
    %v4783 = vsub.f32 %v4759, %v4779
    %v4784 = vmul.f32 %v4780, %v4780
    %v4785 = vmul.f32 %v4781, %v4781
    %v4786 = vmul.f32 %v4782, %v4782
    %v4787 = vmul.f32 %v4783, %v4783
    %v4788 = vsel %vm316, %v4784, 0.0
    %4789 = vadd.xlane.f32.xlu0 %v4788
    %v4790 = vpop.xlane.xlu0 %4789
    %v4791 = vsel %vm316, %v4785, 0.0
    %4792 = vadd.xlane.f32.xlu0 %v4791
    %v4793 = vpop.xlane.xlu0 %4792
    %v4794 = vsel %vm316, %v4786, 0.0
    %4795 = vadd.xlane.f32.xlu0 %v4794
    %v4796 = vpop.xlane.xlu0 %4795
    %v4797 = vsel %vm316, %v4787, 0.0
    %4798 = vadd.xlane.f32.xlu0 %v4797
    %v4799 = vpop.xlane.xlu0 %4798
    %v4800 = vmul.f32 %v4790, %v2208
    %v4801 = vmul.f32 %v4793, %v2208
    %v4802 = vmul.f32 %v4796, %v2208
    %v4803 = vmul.f32 %v4799, %v2208
    %v4804 = vadd.f32 %v4800, 1e-05
    %v4805 = vadd.f32 %v4801, 1e-05
    %v4806 = vadd.f32 %v4802, 1e-05
    %v4807 = vadd.f32 %v4803, 1e-05
    %v4808 = vrsqrt.pop %v4804
    %v4809 = vrsqrt.pop %v4805
    %v4810 = vrsqrt.pop %v4806
    %v4811 = vrsqrt.pop %v4807
    %v4812 = vmul.f32 %v4780, %v4808
    %v4813 = vmul.f32 %v4781, %v4809
    %v4814 = vmul.f32 %v4782, %v4810
    %v4815 = vmul.f32 %v4783, %v4811
    %v4817 = vlaneseq
    %v4818 = vshrl.u32 %v4817, 7
    %v4819 = vsub.s32 0, %v4818
    %v4820 = vrot.slane %v4761, %v4819
    %v4822 = vmul.f32 %v4812, %v4820
    %v4823 = vmul.f32 %v4813, %v4820
    %v4824 = vmul.f32 %v4814, %v4820
    %v4825 = vmul.f32 %v4815, %v4820
    %v4827 = vlaneseq
    %v4828 = vshrl.u32 %v4827, 7
    %v4829 = vsub.s32 0, %v4828
    %v4830 = vrot.slane %v4763, %v4829
    %v4832 = vadd.f32 %v4822, %v4830
    %v4833 = vadd.f32 %v4823, %v4830
    %v4834 = vadd.f32 %v4824, %v4830
    %v4835 = vadd.f32 %v4825, %v4830
    %v4836 = vsel %vm316, %v4832, 0.0
    %v4837 = vsel %vm316, %v4833, 0.0
    %v4838 = vadd.f32 %v4836, %v4837
    %v4839 = vrot.slane %v4838, 4
    %v4840 = vadd.f32 %v4838, %v4839
    %v4841 = vrot.slane %v4840, 2
    %v4842 = vadd.f32 %v4840, %v4841
    %v4843 = vrot.slane %v4842, 1
    %v4844 = vadd.f32 %v4842, %v4843
    %v4845 = vsel %vm316, %v4834, 0.0
    %v4846 = vsel %vm316, %v4835, 0.0
    %v4847 = vadd.f32 %v4845, %v4846
    %v4848 = vrot.slane %v4847, 4
    %v4849 = vadd.f32 %v4847, %v4848
    %v4850 = vrot.slane %v4849, 2
    %v4851 = vadd.f32 %v4849, %v4850
    %v4852 = vrot.slane %v4851, 1
    %v4853 = vadd.f32 %v4851, %v4852
    %v4854 = vrcp.pop 16.0
    %v4855 = vmul.f32 %v4844, %v4854
    %v4856 = vmul.f32 %v4853, %v4854
    %v4857 = vld [vmem:[%s15] sm:$0xff]
    %v4858 = vld [vmem:[%s15 + $0x8] sm:$0xff]
    %v4859 = vld [vmem:[%s15 + $0x10] sm:$0xff]
    %v4860 = vld [vmem:[%s15 + $0x18] sm:$0xff]
    %v4861 = vld [vmem:[#allocation3] sm:$0x3]
    %v4862 = vld [vmem:[%s16] sm:$0xff]
    %v4863 = vld [vmem:[%s16 + $0x8] sm:$0xff]
    %v4864 = vld [vmem:[%s16 + $0x10] sm:$0xff]
    %v4865 = vld [vmem:[%s16 + $0x18] sm:$0xff]
    %v4867 = vsel %vm316, %v4861, 0
    %4869 = vmatprep.subr.mxu0 0.0
    %4870 = vmatpush1.msra.mxu0 %v4862
    %4871 = vmatprep.subr.mxu0 0.0
    %4872 = vmatpush1.msra.mxu0 %v4863
    %4873 = vmatprep.subr.mxu0 0.0
    %4874 = vmatpush1.msra.mxu0 %v4864
    %4875 = vmatprep.subr.mxu0 0.0
    %4876 = vmatpush1.msra.mxu0 %v4865
    %4877 = vmatprep.subr.mxu0 0.0
    %4878 = vmatpush1.msra.mxu0 0.0
    %4879 = vmatprep.subr.mxu0 0.0
    %4880 = vmatpush1.msra.mxu0 0.0
    %4881 = vmatprep.subr.mxu0 0.0
    %4882 = vmatpush1.msra.mxu0 0.0
    %4883 = vmatprep.subr.mxu0 0.0
    %4884 = vmatpush1.msra.mxu0 0.0
    %4885 = vmatprep.subr.mxu0 0.0
    %4886 = vmatpush1.msra.mxu0 0.0
    %4887 = vmatprep.subr.mxu0 0.0
    %4888 = vmatpush1.msra.mxu0 0.0
    %4889 = vmatprep.subr.mxu0 0.0
    %4890 = vmatpush1.msra.mxu0 0.0
    %4891 = vmatprep.subr.mxu0 0.0
    %4892 = vmatpush1.msra.mxu0 0.0
    %4893 = vmatprep.subr.mxu0 0.0
    %4894 = vmatpush1.msra.mxu0 0.0
    %4895 = vmatprep.subr.mxu0 0.0
    %4896 = vmatpush1.msra.mxu0 0.0
    %4897 = vmatprep.subr.mxu0 0.0
    %4898 = vmatpush1.msra.mxu0 0.0
    %4899 = vmatprep.subr.mxu0 0.0
    %4900 = vmatpush1.msra.mxu0 0.0
    %4901 = vmatprep.subr.mxu0 0.0
    %4902 = vmatpush1.msra.mxu0 0.0
    %4903 = vmatprep.subr.mxu0 0.0
    %4904 = vmatpush1.msra.mxu0 0.0
    %4905 = vmatprep.subr.mxu0 0.0
    %4906 = vmatpush1.msra.mxu0 0.0
    %4907 = vmatprep.subr.mxu0 0.0
    %4908 = vmatpush1.msra.mxu0 0.0
    %4909 = vmatprep.subr.mxu0 0.0
    %4910 = vmatpush1.msra.mxu0 0.0
    %4911 = vmatprep.subr.mxu0 0.0
    %4912 = vmatpush1.msra.mxu0 0.0
    %4913 = vmatprep.subr.mxu0 0.0
    %4914 = vmatpush1.msra.mxu0 0.0
    %4915 = vmatprep.subr.mxu0 0.0
    %4916 = vmatpush1.msra.mxu0 0.0
    %4917 = vmatprep.subr.mxu0 0.0
    %4918 = vmatpush1.msra.mxu0 0.0
    %4919 = vmatprep.subr.mxu0 0.0
    %4920 = vmatpush1.msra.mxu0 0.0
    %4921 = vmatprep.subr.mxu0 0.0
    %4922 = vmatpush1.msra.mxu0 0.0
    %4923 = vmatprep.subr.mxu0 0.0
    %4924 = vmatpush1.msra.mxu0 0.0
    %4925 = vmatprep.subr.mxu0 0.0
    %4926 = vmatpush1.msra.mxu0 0.0
    %4927 = vmatprep.subr.mxu0 0.0
    %4928 = vmatpush1.msra.mxu0 0.0
    %4929 = vmatprep.subr.mxu0 0.0
    %4930 = vmatpush1.msra.mxu0 0.0
    %4931 = vmatprep.subr.mxu0 0.0
    %4932 = vmatpush1.msra.mxu0 0.0
    %4933 = vmatprep.mubr.f32.mxu0 0.0
    %4934 = vmatmul.mubr.f32.gmra.mrb[0].mxu0 %v4867
    %v4935 = vpop.f32.mrb[0].mxu0
    %v4936 = vadd.f32 0.0, %v4935
    %v4937 = vpop.f32.mrb[0].mxu0
    %4938 = vdwg.mxu0
    %vm4941 = vcmask 1041409
    %v4942 = vsel %vm4941, %v4856, %v4855
    %v4943 = vsel %vm316, %v4942, 0
    %4945 = vmatprep.subr.mxu0 0.0
    %4946 = vmatpush1.msra.mxu0 %v4857
    %4947 = vmatprep.subr.mxu0 0.0
    %4948 = vmatpush1.msra.mxu0 %v4858
    %4949 = vmatprep.subr.mxu0 0.0
    %4950 = vmatpush1.msra.mxu0 %v4859
    %4951 = vmatprep.subr.mxu0 0.0
    %4952 = vmatpush1.msra.mxu0 %v4860
    %4953 = vmatprep.subr.mxu0 0.0
    %4954 = vmatpush1.msra.mxu0 0.0
    %4955 = vmatprep.subr.mxu0 0.0
    %4956 = vmatpush1.msra.mxu0 0.0
    %4957 = vmatprep.subr.mxu0 0.0
    %4958 = vmatpush1.msra.mxu0 0.0
    %4959 = vmatprep.subr.mxu0 0.0
    %4960 = vmatpush1.msra.mxu0 0.0
    %4961 = vmatprep.subr.mxu0 0.0
    %4962 = vmatpush1.msra.mxu0 0.0
    %4963 = vmatprep.subr.mxu0 0.0
    %4964 = vmatpush1.msra.mxu0 0.0
    %4965 = vmatprep.subr.mxu0 0.0
    %4966 = vmatpush1.msra.mxu0 0.0
    %4967 = vmatprep.subr.mxu0 0.0
    %4968 = vmatpush1.msra.mxu0 0.0
    %4969 = vmatprep.subr.mxu0 0.0
    %4970 = vmatpush1.msra.mxu0 0.0
    %4971 = vmatprep.subr.mxu0 0.0
    %4972 = vmatpush1.msra.mxu0 0.0
    %4973 = vmatprep.subr.mxu0 0.0
    %4974 = vmatpush1.msra.mxu0 0.0
    %4975 = vmatprep.subr.mxu0 0.0
    %4976 = vmatpush1.msra.mxu0 0.0
    %4977 = vmatprep.subr.mxu0 0.0
    %4978 = vmatpush1.msra.mxu0 0.0
    %4979 = vmatprep.subr.mxu0 0.0
    %4980 = vmatpush1.msra.mxu0 0.0
    %4981 = vmatprep.subr.mxu0 0.0
    %4982 = vmatpush1.msra.mxu0 0.0
    %4983 = vmatprep.subr.mxu0 0.0
    %4984 = vmatpush1.msra.mxu0 0.0
    %4985 = vmatprep.subr.mxu0 0.0
    %4986 = vmatpush1.msra.mxu0 0.0
    %4987 = vmatprep.subr.mxu0 0.0
    %4988 = vmatpush1.msra.mxu0 0.0
    %4989 = vmatprep.subr.mxu0 0.0
    %4990 = vmatpush1.msra.mxu0 0.0
    %4991 = vmatprep.subr.mxu0 0.0
    %4992 = vmatpush1.msra.mxu0 0.0
    %4993 = vmatprep.subr.mxu0 0.0
    %4994 = vmatpush1.msra.mxu0 0.0
    %4995 = vmatprep.subr.mxu0 0.0
    %4996 = vmatpush1.msra.mxu0 0.0
    %4997 = vmatprep.subr.mxu0 0.0
    %4998 = vmatpush1.msra.mxu0 0.0
    %4999 = vmatprep.subr.mxu0 0.0
    %5000 = vmatpush1.msra.mxu0 0.0
    %5001 = vmatprep.subr.mxu0 0.0
    %5002 = vmatpush1.msra.mxu0 0.0
    %5003 = vmatprep.subr.mxu0 0.0
    %5004 = vmatpush1.msra.mxu0 0.0
    %5005 = vmatprep.subr.mxu0 0.0
    %5006 = vmatpush1.msra.mxu0 0.0
    %5007 = vmatprep.subr.mxu0 0.0
    %5008 = vmatpush1.msra.mxu0 0.0
    %5009 = vmatprep.mubr.f32.mxu0 0.0
    %5010 = vmatmul.mubr.f32.gmra.mrb[0].mxu0 %v4943
    %v5011 = vpop.f32.mrb[0].mxu0
    %v5012 = vadd.f32 %v4936, %v5011
    %v5013 = vpop.f32.mrb[0].mxu0
    %5014 = vdwg.mxu0
    %v5015 = vld [vmem:[#allocation5] sm:$0x3]
    %v5016 = vld [vmem:[%s17] sm:$0xff]
    %v5017 = vld [vmem:[%s17 + $0x8] sm:$0xff]
    %v5018 = vld [vmem:[%s17 + $0x10] sm:$0xff]
    %v5019 = vld [vmem:[%s17 + $0x18] sm:$0xff]
    %v5021 = vsel %vm316, %v5015, 0
    %5023 = vmatprep.subr.mxu0 0.0
    %5024 = vmatpush1.msra.mxu0 %v5016
    %5025 = vmatprep.subr.mxu0 0.0
    %5026 = vmatpush1.msra.mxu0 %v5017
    %5027 = vmatprep.subr.mxu0 0.0
    %5028 = vmatpush1.msra.mxu0 %v5018
    %5029 = vmatprep.subr.mxu0 0.0
    %5030 = vmatpush1.msra.mxu0 %v5019
    %5031 = vmatprep.subr.mxu0 0.0
    %5032 = vmatpush1.msra.mxu0 0.0
    %5033 = vmatprep.subr.mxu0 0.0
    %5034 = vmatpush1.msra.mxu0 0.0
    %5035 = vmatprep.subr.mxu0 0.0
    %5036 = vmatpush1.msra.mxu0 0.0
    %5037 = vmatprep.subr.mxu0 0.0
    %5038 = vmatpush1.msra.mxu0 0.0
    %5039 = vmatprep.subr.mxu0 0.0
    %5040 = vmatpush1.msra.mxu0 0.0
    %5041 = vmatprep.subr.mxu0 0.0
    %5042 = vmatpush1.msra.mxu0 0.0
    %5043 = vmatprep.subr.mxu0 0.0
    %5044 = vmatpush1.msra.mxu0 0.0
    %5045 = vmatprep.subr.mxu0 0.0
    %5046 = vmatpush1.msra.mxu0 0.0
    %5047 = vmatprep.subr.mxu0 0.0
    %5048 = vmatpush1.msra.mxu0 0.0
    %5049 = vmatprep.subr.mxu0 0.0
    %5050 = vmatpush1.msra.mxu0 0.0
    %5051 = vmatprep.subr.mxu0 0.0
    %5052 = vmatpush1.msra.mxu0 0.0
    %5053 = vmatprep.subr.mxu0 0.0
    %5054 = vmatpush1.msra.mxu0 0.0
    %5055 = vmatprep.subr.mxu0 0.0
    %5056 = vmatpush1.msra.mxu0 0.0
    %5057 = vmatprep.subr.mxu0 0.0
    %5058 = vmatpush1.msra.mxu0 0.0
    %5059 = vmatprep.subr.mxu0 0.0
    %5060 = vmatpush1.msra.mxu0 0.0
    %5061 = vmatprep.subr.mxu0 0.0
    %5062 = vmatpush1.msra.mxu0 0.0
    %5063 = vmatprep.subr.mxu0 0.0
    %5064 = vmatpush1.msra.mxu0 0.0
    %5065 = vmatprep.subr.mxu0 0.0
    %5066 = vmatpush1.msra.mxu0 0.0
    %5067 = vmatprep.subr.mxu0 0.0
    %5068 = vmatpush1.msra.mxu0 0.0
    %5069 = vmatprep.subr.mxu0 0.0
    %5070 = vmatpush1.msra.mxu0 0.0
    %5071 = vmatprep.subr.mxu0 0.0
    %5072 = vmatpush1.msra.mxu0 0.0
    %5073 = vmatprep.subr.mxu0 0.0
    %5074 = vmatpush1.msra.mxu0 0.0
    %5075 = vmatprep.subr.mxu0 0.0
    %5076 = vmatpush1.msra.mxu0 0.0
    %5077 = vmatprep.subr.mxu0 0.0
    %5078 = vmatpush1.msra.mxu0 0.0
    %5079 = vmatprep.subr.mxu0 0.0
    %5080 = vmatpush1.msra.mxu0 0.0
    %5081 = vmatprep.subr.mxu0 0.0
    %5082 = vmatpush1.msra.mxu0 0.0
    %5083 = vmatprep.subr.mxu0 0.0
    %5084 = vmatpush1.msra.mxu0 0.0
    %5085 = vmatprep.subr.mxu0 0.0
    %5086 = vmatpush1.msra.mxu0 0.0
    %5087 = vmatprep.mubr.f32.mxu0 0.0
    %5088 = vmatmul.mubr.f32.gmra.mrb[0].mxu0 %v5021
    %v5089 = vpop.f32.mrb[0].mxu0
    %v5090 = vadd.f32 0.0, %v5089
    %v5091 = vpop.f32.mrb[0].mxu0
    %5092 = vdwg.mxu0
    %v5093 = vadd.f32 %v5012, %v5090
    %v5094 = vld [vmem:[%s18] sm:$0x1]
    %v5096 = vlaneseq
    %v5097 = vshrl.u32 %v5096, 7
    %v5098 = vsub.s32 0, %v5097
    %v5099 = vrot.slane %v5094, %v5098
    %v5101 = vadd.f32 %v5093, %v5099
    %v5102 = vmax.f32 %v5101, 0.0
    %v5103 = vld [vmem:[%s19] sm:$0xff]
    %v5104 = vld [vmem:[%s19 + $0x8] sm:$0xff]
    %v5105 = vld [vmem:[%s19 + $0x10] sm:$0xff]
    %v5106 = vld [vmem:[%s19 + $0x18] sm:$0xff]
    %v5107 = vld [vmem:[%s19 + $0x20] sm:$0xff]
    %v5108 = vld [vmem:[%s19 + $0x28] sm:$0xff]
    %v5109 = vld [vmem:[%s19 + $0x30] sm:$0xff]
    %v5110 = vld [vmem:[%s19 + $0x38] sm:$0xff]
    %v5111 = vld [vmem:[#allocation2] sm:$0x1]
    %v5113 = vlaneseq
    %v5114 = vshrl.u32 %v5113, 7
    %v5115 = vsub.s32 0, %v5114
    %v5116 = vrot.slane %v5111, %v5115
    %v5119 = vsel %vm2396, %v5102, 0
    %5121 = vmatprep.subr.mxu0 0.0
    %5122 = vmatpush1.msra.mxu0 %v5103
    %5123 = vmatprep.subr.mxu0 0.0
    %5124 = vmatpush1.msra.mxu0 %v5104
    %5125 = vmatprep.subr.mxu0 0.0
    %5126 = vmatpush1.msra.mxu0 %v5105
    %5127 = vmatprep.subr.mxu0 0.0
    %5128 = vmatpush1.msra.mxu0 %v5106
    %5129 = vmatprep.subr.mxu0 0.0
    %5130 = vmatpush1.msra.mxu0 %v5107
    %5131 = vmatprep.subr.mxu0 0.0
    %5132 = vmatpush1.msra.mxu0 %v5108
    %5133 = vmatprep.subr.mxu0 0.0
    %5134 = vmatpush1.msra.mxu0 %v5109
    %5135 = vmatprep.subr.mxu0 0.0
    %5136 = vmatpush1.msra.mxu0 %v5110
    %5137 = vmatprep.subr.mxu0 0.0
    %5138 = vmatpush1.msra.mxu0 0.0
    %5139 = vmatprep.subr.mxu0 0.0
    %5140 = vmatpush1.msra.mxu0 0.0
    %5141 = vmatprep.subr.mxu0 0.0
    %5142 = vmatpush1.msra.mxu0 0.0
    %5143 = vmatprep.subr.mxu0 0.0
    %5144 = vmatpush1.msra.mxu0 0.0
    %5145 = vmatprep.subr.mxu0 0.0
    %5146 = vmatpush1.msra.mxu0 0.0
    %5147 = vmatprep.subr.mxu0 0.0
    %5148 = vmatpush1.msra.mxu0 0.0
    %5149 = vmatprep.subr.mxu0 0.0
    %5150 = vmatpush1.msra.mxu0 0.0
    %5151 = vmatprep.subr.mxu0 0.0
    %5152 = vmatpush1.msra.mxu0 0.0
    %5153 = vmatprep.subr.mxu0 0.0
    %5154 = vmatpush1.msra.mxu0 0.0
    %5155 = vmatprep.subr.mxu0 0.0
    %5156 = vmatpush1.msra.mxu0 0.0
    %5157 = vmatprep.subr.mxu0 0.0
    %5158 = vmatpush1.msra.mxu0 0.0
    %5159 = vmatprep.subr.mxu0 0.0
    %5160 = vmatpush1.msra.mxu0 0.0
    %5161 = vmatprep.subr.mxu0 0.0
    %5162 = vmatpush1.msra.mxu0 0.0
    %5163 = vmatprep.subr.mxu0 0.0
    %5164 = vmatpush1.msra.mxu0 0.0
    %5165 = vmatprep.subr.mxu0 0.0
    %5166 = vmatpush1.msra.mxu0 0.0
    %5167 = vmatprep.subr.mxu0 0.0
    %5168 = vmatpush1.msra.mxu0 0.0
    %5169 = vmatprep.subr.mxu0 0.0
    %5170 = vmatpush1.msra.mxu0 0.0
    %5171 = vmatprep.subr.mxu0 0.0
    %5172 = vmatpush1.msra.mxu0 0.0
    %5173 = vmatprep.subr.mxu0 0.0
    %5174 = vmatpush1.msra.mxu0 0.0
    %5175 = vmatprep.subr.mxu0 0.0
    %5176 = vmatpush1.msra.mxu0 0.0
    %5177 = vmatprep.subr.mxu0 0.0
    %5178 = vmatpush1.msra.mxu0 0.0
    %5179 = vmatprep.subr.mxu0 0.0
    %5180 = vmatpush1.msra.mxu0 0.0
    %5181 = vmatprep.subr.mxu0 0.0
    %5182 = vmatpush1.msra.mxu0 0.0
    %5183 = vmatprep.subr.mxu0 0.0
    %5184 = vmatpush1.msra.mxu0 0.0
    %5185 = vmatprep.mubr.f32.mxu0 0.0
    %5186 = vmatmul.mubr.f32.gmra.mrb[0].mxu0 %v5119
    %v5187 = vpop.f32.mrb[0].mxu0
    %v5188 = vadd.f32 %v5116, %v5187
    %v5189 = vpop.f32.mrb[0].mxu0
    %5190 = vdwg.mxu0
    %vm5191 = vcmask 1024
    %5192 = vst.msk [vmem:[%s21] sm:$0x3] %vm5191, %v5188
    // Predicated region
    $region126: #{tpu_custom_call.1} parent=1 // pred_check
      _
    $region127: #{tpu_custom_call.1} parent=1 // pred_check_branch
      %5194 = sbr.rel (0) target = $region129
    $region128: #{tpu_custom_call.1} parent=1 // pred_region
      _
    $region129: #{tpu_custom_call.1} parent=1 // pred_fallthru
      _
    // Predicated region
    $region130: #{tpu_custom_call.1} parent=1 // pred_check
      _
    $region131: #{tpu_custom_call.1} parent=1 // pred_check_branch
      %5196 = sbr.rel (0) target = $region133
    $region132: #{tpu_custom_call.1} parent=1 // pred_region
      _
    $region133: #{tpu_custom_call.1} parent=1 // pred_fallthru
      _
    %5197 = vsyncpa [#allocation4], 1
    %5198 = vsyncpa [#allocation6], 1
    %5199 = vsyncpa [#allocation9], 1
    %5200 = vsyncpa [#allocation12], 1
    %5201 = vsyncpa [#allocation15], 1
    %5202 = vsyncpa [#allocation18], 1

</llo_original>
